<compile_context>
chip_gen: v7x
topology: tpu7x:2x2x1
jax: 0.10.0
libtpu: 0.0.40
codegen_flags: <defaults>
</compile_context>

<pallas_src>
import math

import jax
import jax.numpy as jnp
from jax import lax
from jax.experimental import pallas as pl
from jax.experimental.pallas import tpu as pltpu

# ----------------------------- configuration -------------------------------
N_NODES = 16
N_EDGES_PER_GRAPH = 16
N_GRAPHS = 2
N_EDGES = N_EDGES_PER_GRAPH * N_GRAPHS
N_FEATURES = 6            # node features
N_EDGE_FEATURES = 5
N_GLOBAL_FEATURES = 4
HIDDEN = 32               # n_hidden
NUM_ROUNDS = 3            # gnn_rounds
LN_EPS = 1e-5

_VMEM = pl.BlockSpec(memory_space=pltpu.MemorySpace.VMEM)
_ALIGN = 16               # bf16 sublane packing: keep static row offsets 16-aligned
_MLP_ORDER = ("edge", "node1", "node2", "glob")


# ----------------------------- static layouts -------------------------------
def _ceil_to(x, m):
    return ((x + m - 1) // m) * m


def _round_in_dims(fx, fe, fu, hidden):
    """Concat widths of each MLP's first Linear (dataflow widths)."""
    return dict(edge=2 * fx + fe + fu,        # cat([src, dest, edge_attr, u])
                node1=fx + hidden,            # cat([x[col], new_edge_attr])
                node2=fx + hidden + fu,       # cat([x, agg, u])
                glob=fu + 2 * hidden)         # cat([u, nodes_agg, edges_agg])


def _round_layout(fx, fe, fu, hidden):
    """Static row offsets of [w1 | w2] blocks inside a round's packed weight slab."""
    dims = _round_in_dims(fx, fe, fu, hidden)
    layout, off = {}, 0
    for name in _MLP_ORDER:
        d = dims[name]
        w1_off = off
        w2_off = _ceil_to(off + d, _ALIGN)
        off = _ceil_to(w2_off + hidden, _ALIGN)
        layout[name] = (w1_off, d, w2_off)
    return layout, off


# --------------------------- in-kernel MLP + LN ------------------------------
def _mlp_ln(pieces, w_ref, layout_entry, b_ref, b_base, hidden):
    """Linear(cat(pieces)) -> ReLU -> (Dropout=Id) -> Linear -> LayerNorm.

    The first layer is a single lane-dense matmul on the concatenation of the
    already-resident pieces; its weight block and the biases / LN params are
    read from the packed slabs at static offsets at the use site.
    """
    f32, bf16 = jnp.float32, jnp.bfloat16
    w1_off, d_in, w2_off = layout_entry

    cat = jnp.concatenate(pieces, axis=-1).astype(bf16)             # [R, d_in]
    h = jnp.dot(cat, w_ref[w1_off:w1_off + d_in, :],
                preferred_element_type=f32)
    h = h + b_ref[b_base + 0:b_base + 1, :]
    h = jnp.maximum(h, 0.0)                                          # ReLU
    y = jnp.dot(h.astype(bf16), w_ref[w2_off:w2_off + hidden, :],
                preferred_element_type=f32)
    y = y + b_ref[b_base + 1:b_base + 2, :]

    # LayerNorm (f32) — two independent reductions so they can overlap on XLU.
    mu = jnp.mean(y, axis=-1, keepdims=True)
    ms = jnp.mean(y * y, axis=-1, keepdims=True)
    var = jnp.maximum(ms - mu * mu, 0.0)
    return ((y - mu) * lax.rsqrt(var + LN_EPS)
            * b_ref[b_base + 2:b_base + 3, :] + b_ref[b_base + 3:b_base + 4, :])


# --------------------------------- forward ----------------------------------
@jax.jit
def graph_network_ltp_forward(w_packs, b_pack, node_x, edge_attr, global_x,
                              edge_index, node_batch, edge_graph):
    f32, bf16 = jnp.float32, jnp.bfloat16
    n_nodes, fx = node_x.shape
    n_edges, fe = edge_attr.shape
    n_graphs, fu = global_x.shape
    hidden = b_pack.shape[1]
    num_rounds = len(w_packs)

    # Static per-round slab layouts (round 0 uses the raw feature widths).
    layouts = ([_round_layout(fx, fe, fu, hidden)[0]]
               + [_round_layout(hidden, hidden, hidden, hidden)[0]] * (num_rounds - 1))

    # Tiny int32 index inputs (both orientations so no in-kernel transposes).
    row, col = edge_index[0], edge_index[1]          # row = source, col = dest
    eidx_r = jnp.stack([row, col, edge_graph], axis=0).astype(jnp.int32)   # [3, E]
    eidx_c = eidx_r.T                                                      # [E, 3]
    nb_c = node_batch.astype(jnp.int32)[:, None]                           # [N, 1]
    nb_r = node_batch.astype(jnp.int32)[None, :]                           # [1, N]

    def fused_gnn_kernel(eic_ref, eir_ref, nbc_ref, nbr_ref,
                         x_ref, e_ref, u_ref, b_ref, *rest):
        w_refs = rest[:num_rounds]
        node_out_ref, edge_out_ref, glob_out_ref = rest[num_rounds:]

        # ---- one-hot gather / scatter matrices built once from int32 indices
        # (indices are static across rounds; bf16 entries are exact 0/1). ----
        row_c = eic_ref[:, 0:1]          # [E, 1]
        col_c = eic_ref[:, 1:2]          # [E, 1]
        eg_c = eic_ref[:, 2:3]           # [E, 1]
        row_r = eir_ref[0:1, :]          # [1, E]
        eg_r = eir_ref[2:3, :]           # [1, E]
        nbc = nbc_ref[...]               # [N, 1]
        nbr = nbr_ref[...]               # [1, N]

        def onehot(shape, iota_dim, idx, dtype):
            cmp = lax.broadcasted_iota(jnp.int32, shape, iota_dim) == idx
            return jnp.where(cmp, 1.0, 0.0).astype(dtype)

        a_src = onehot((n_edges, n_nodes), 1, row_c, bf16)     # gather x[row]   [E,N]
        a_dst = onehot((n_edges, n_nodes), 1, col_c, bf16)     # gather x[col]   [E,N]
        g_e = onehot((n_edges, n_graphs), 1, eg_c, bf16)       # u -> edges      [E,G]
        g_n = onehot((n_nodes, n_graphs), 1, nbc, bf16)        # u -> nodes      [N,G]
        a_srcT_f = onehot((n_nodes, n_edges), 0, row_r, f32)   # scatter -> row  [N,E]
        a_srcT = a_srcT_f.astype(bf16)
        g_nT = onehot((n_graphs, n_nodes), 0, nbr, bf16)       # sum nodes/graph [G,N]
        g_eT = onehot((n_graphs, n_edges), 0, eg_r, bf16)      # sum edges/graph [G,E]

        # scatter_mean divisor: #outgoing edges per node, clamp(count, 1)
        # (nodes with no outgoing edge aggregate to zero, like torch_scatter).
        inv_cnt = 1.0 / jnp.maximum(
            jnp.sum(a_srcT_f, axis=-1, keepdims=True), 1.0)    # [N, 1]

        x = x_ref[...]            # [N, Fx]
        e = e_ref[...]            # [E, Fe]
        u = u_ref[...]            # [G, Fu]

        for r in range(num_rounds):       # static unroll; per-round weights
            lay = layouts[r]
            w_ref = w_refs[r]
            b_base = 16 * r

            x_b = x.astype(bf16)
            u_b = u.astype(bf16)
            src = jnp.dot(a_src, x_b, preferred_element_type=f32)   # x[row]  [E,Fx]
            dst = jnp.dot(a_dst, x_b, preferred_element_type=f32)   # x[col]  [E,Fx]
            u_e = jnp.dot(g_e, u_b, preferred_element_type=f32)     # u/edge  [E,Fu]
            u_n = jnp.dot(g_n, u_b, preferred_element_type=f32)     # u/node  [N,Fu]

            # --- EdgeModelLtp: MLP(cat([src, dest, edge_attr, u])) + LN ---
            e = _mlp_ln([src, dst, e, u_e], w_ref, lay["edge"],
                        b_ref, b_base + 0, hidden)                   # [E, H]

            # --- NodeModelLtp: msgs from (x[col], e), scatter_mean onto row ---
            msg = _mlp_ln([dst, e], w_ref, lay["node1"],
                          b_ref, b_base + 4, hidden)                 # [E, H]
            agg = jnp.dot(a_srcT, msg.astype(bf16),
                          preferred_element_type=f32) * inv_cnt      # [N, H]
            x = _mlp_ln([x, agg, u_n], w_ref, lay["node2"],
                        b_ref, b_base + 8, hidden)                   # [N, H]

            # --- GlobalModel: sum-aggregate nodes / edges per graph ---
            nodes_agg = jnp.dot(g_nT, x.astype(bf16),
                                preferred_element_type=f32)          # [G, H]
            edges_agg = jnp.dot(g_eT, e.astype(bf16),
                                preferred_element_type=f32)          # [G, H]
            u = _mlp_ln([u, nodes_agg, edges_agg], w_ref, lay["glob"],
                        b_ref, b_base + 12, hidden)                  # [G, H]

        node_out_ref[...] = x
        edge_out_ref[...] = e
        glob_out_ref[...] = u

    out_shape = (
        jax.ShapeDtypeStruct((n_nodes, hidden), f32),
        jax.ShapeDtypeStruct((n_edges, hidden), f32),
        jax.ShapeDtypeStruct((n_graphs, hidden), f32),
    )
    return pl.pallas_call(
        fused_gnn_kernel,
        out_shape=out_shape,
        in_specs=[_VMEM] * (8 + num_rounds),
        out_specs=(_VMEM, _VMEM, _VMEM),
    )(eidx_c, eidx_r, nb_c, nb_r, node_x, edge_attr, global_x, b_pack, *w_packs)


# ------------------------------ parameter init ------------------------------
def _init_mlp_blocks(key, in_dims, hidden, out):
    """PyTorch-style init; first Linear stored as one [sum(in_dims), hidden] block."""
    fan_in = sum(in_dims)
    keys = jax.random.split(key, len(in_dims) + 3)
    s1 = 1.0 / math.sqrt(fan_in)
    w1s = [jax.random.uniform(k, (d, hidden), jnp.float32, -s1, s1)
           for k, d in zip(keys[:len(in_dims)], in_dims)]
    b1 = jax.random.uniform(keys[-3], (1, hidden), jnp.float32, -s1, s1)
    s2 = 1.0 / math.sqrt(hidden)
    w2 = jax.random.uniform(keys[-2], (hidden, out), jnp.float32, -s2, s2)
    b2 = jax.random.uniform(keys[-1], (1, out), jnp.float32, -s2, s2)
    return dict(w1=jnp.concatenate(w1s, axis=0), b1=b1, w2=w2, b2=b2,
                g=jnp.ones((1, out), jnp.float32),
                bt=jnp.zeros((1, out), jnp.float32))


def init_packed_params(key, hidden=HIDDEN, num_rounds=NUM_ROUNDS,
                       fx=N_FEATURES, fe=N_EDGE_FEATURES, fu=N_GLOBAL_FEATURES):
    """Pack all weights into one bf16 slab per round + one f32 bias/LN slab."""
    w_packs, b_rows = [], []
    round_keys = jax.random.split(key, num_rounds)
    for r in range(num_rounds):
        rfx, rfe, rfu = (fx, fe, fu) if r == 0 else (hidden, hidden, hidden)
        layout, total_rows = _round_layout(rfx, rfe, rfu, hidden)
        k = jax.random.split(round_keys[r], 4)
        mlps = dict(
            edge=_init_mlp_blocks(k[0], (rfx, rfx, rfe, rfu), hidden, hidden),
            node1=_init_mlp_blocks(k[1], (rfx, hidden), hidden, hidden),
            node2=_init_mlp_blocks(k[2], (rfx, hidden, rfu), hidden, hidden),
            glob=_init_mlp_blocks(k[3], (rfu, hidden, hidden), hidden, hidden),
        )
        w = jnp.zeros((total_rows, hidden), jnp.float32)
        for name in _MLP_ORDER:
            w1_off, d, w2_off = layout[name]
            w = w.at[w1_off:w1_off + d, :].set(mlps[name]["w1"])
            w = w.at[w2_off:w2_off + hidden, :].set(mlps[name]["w2"])
            b_rows += [mlps[name]["b1"], mlps[name]["b2"],
                       mlps[name]["g"], mlps[name]["bt"]]
        w_packs.append(w.astype(jnp.bfloat16))
    b_pack = jnp.concatenate(b_rows, axis=0)          # [16 * num_rounds, hidden] f32
    return tuple(w_packs), b_pack


# ----------------------------------- main ------------------------------------
if __name__ == "__main__":
    key = jax.random.PRNGKey(0)
    k_par, k_node, k_edge, k_glob, k_src, k_dst = jax.random.split(key, 6)

    w_packs, b_pack = init_packed_params(k_par)

    node_x = jax.random.normal(k_node, (N_NODES, N_FEATURES), jnp.float32)
    edge_attr = jax.random.normal(k_edge, (N_EDGES, N_EDGE_FEATURES), jnp.float32)
    global_x = jax.random.normal(k_glob, (N_GRAPHS, N_GLOBAL_FEATURES), jnp.float32)

    # batched graph structure: nodes 0..7 -> graph 0, nodes 8..15 -> graph 1
    nodes_per_graph = N_NODES // N_GRAPHS
    node_batch = jnp.repeat(jnp.arange(N_GRAPHS), nodes_per_graph)
    edge_graph = jnp.repeat(jnp.arange(N_GRAPHS), N_EDGES_PER_GRAPH)
    offs = jnp.repeat(jnp.arange(N_GRAPHS) * nodes_per_graph, N_EDGES_PER_GRAPH)
    src = jax.random.randint(k_src, (N_EDGES,), 0, nodes_per_graph) + offs
    dst = jax.random.randint(k_dst, (N_EDGES,), 0, nodes_per_graph) + offs
    edge_index = jnp.stack([src, dst], axis=0)                 # [2, E]

    node_out, edge_out, glob_out = graph_network_ltp_forward(
        w_packs, b_pack, node_x, edge_attr, global_x, edge_index,
        node_batch, edge_graph)
    jax.block_until_ready((node_out, edge_out, glob_out))

    assert node_out.shape == (N_NODES, HIDDEN)
    assert edge_out.shape == (N_EDGES, HIDDEN)
    assert glob_out.shape == (N_GRAPHS, HIDDEN)
    assert jnp.all(jnp.isfinite(node_out))
    assert jnp.all(jnp.isfinite(edge_out))
    assert jnp.all(jnp.isfinite(glob_out))
    print("KERNEL_OK")
</pallas_src>

<mosaic_0001>
module attributes {stable_mosaic.version = 11 : i64} {
  func.func @fused_gnn_kernel(%arg0: memref<32x3xi32, #tpu.memory_space<vmem>>, %arg1: memref<3x32xi32, #tpu.memory_space<vmem>>, %arg2: memref<16x1xi32, #tpu.memory_space<vmem>>, %arg3: memref<1x16xi32, #tpu.memory_space<vmem>>, %arg4: memref<16x6xf32, #tpu.memory_space<vmem>>, %arg5: memref<32x5xf32, #tpu.memory_space<vmem>>, %arg6: memref<2x4xf32, #tpu.memory_space<vmem>>, %arg7: memref<48x32xf32, #tpu.memory_space<vmem>>, %arg8: memref<336x32xbf16, #tpu.memory_space<vmem>>, %arg9: memref<512x32xbf16, #tpu.memory_space<vmem>>, %arg10: memref<512x32xbf16, #tpu.memory_space<vmem>>, %arg11: memref<16x32xf32, #tpu.memory_space<vmem>>, %arg12: memref<32x32xf32, #tpu.memory_space<vmem>>, %arg13: memref<2x32xf32, #tpu.memory_space<vmem>>) attributes {dimension_semantics = [], scalar_prefetch = 0 : i64, scratch_operands = 0 : i64, tpu.core_type = #tpu.core_type<tc>} {
    %c0 = arith.constant 0 : index
    %c0_0 = arith.constant 0 : index
    %0 = vector.load %arg0[%c0, %c0_0] : memref<32x3xi32, #tpu.memory_space<vmem>>, vector<32x1xi32>
    %c0_1 = arith.constant 0 : index
    %c1 = arith.constant 1 : index
    %1 = vector.load %arg0[%c0_1, %c1] : memref<32x3xi32, #tpu.memory_space<vmem>>, vector<32x1xi32>
    %c0_2 = arith.constant 0 : index
    %c2 = arith.constant 2 : index
    %2 = vector.load %arg0[%c0_2, %c2] : memref<32x3xi32, #tpu.memory_space<vmem>>, vector<32x1xi32>
    %c0_3 = arith.constant 0 : index
    %c0_4 = arith.constant 0 : index
    %3 = vector.load %arg1[%c0_3, %c0_4] : memref<3x32xi32, #tpu.memory_space<vmem>>, vector<1x32xi32>
    %c2_5 = arith.constant 2 : index
    %c0_6 = arith.constant 0 : index
    %4 = vector.load %arg1[%c2_5, %c0_6] : memref<3x32xi32, #tpu.memory_space<vmem>>, vector<1x32xi32>
    %c0_7 = arith.constant 0 : index
    %c0_8 = arith.constant 0 : index
    %5 = vector.load %arg2[%c0_7, %c0_8] : memref<16x1xi32, #tpu.memory_space<vmem>>, vector<16x1xi32>
    %c0_9 = arith.constant 0 : index
    %c0_10 = arith.constant 0 : index
    %6 = vector.load %arg3[%c0_9, %c0_10] : memref<1x16xi32, #tpu.memory_space<vmem>>, vector<1x16xi32>
    %7 = tpu.iota {dimensions = array<i32: 1>} : vector<32x16xi32>
    %8 = vector.broadcast %0 : vector<32x1xi32> to vector<32x16xi32>
    %9 = arith.cmpi eq, %7, %8 : vector<32x16xi32>
    %cst = arith.constant 1.000000e+00 : f32
    %cst_11 = arith.constant 0.000000e+00 : f32
    %10 = vector.broadcast %cst : f32 to vector<32x16xf32>
    %11 = vector.broadcast %cst_11 : f32 to vector<32x16xf32>
    %12 = arith.select %9, %10, %11 : vector<32x16xi1>, vector<32x16xf32>
    %13 = arith.truncf %12 : vector<32x16xf32> to vector<32x16xbf16>
    %14 = tpu.iota {dimensions = array<i32: 1>} : vector<32x16xi32>
    %15 = vector.broadcast %1 : vector<32x1xi32> to vector<32x16xi32>
    %16 = arith.cmpi eq, %14, %15 : vector<32x16xi32>
    %cst_12 = arith.constant 1.000000e+00 : f32
    %cst_13 = arith.constant 0.000000e+00 : f32
    %17 = vector.broadcast %cst_12 : f32 to vector<32x16xf32>
    %18 = vector.broadcast %cst_13 : f32 to vector<32x16xf32>
    %19 = arith.select %16, %17, %18 : vector<32x16xi1>, vector<32x16xf32>
    %20 = arith.truncf %19 : vector<32x16xf32> to vector<32x16xbf16>
    %21 = tpu.iota {dimensions = array<i32: 1>} : vector<32x2xi32>
    %22 = vector.broadcast %2 : vector<32x1xi32> to vector<32x2xi32>
    %23 = arith.cmpi eq, %21, %22 : vector<32x2xi32>
    %cst_14 = arith.constant 1.000000e+00 : f32
    %cst_15 = arith.constant 0.000000e+00 : f32
    %24 = vector.broadcast %cst_14 : f32 to vector<32x2xf32>
    %25 = vector.broadcast %cst_15 : f32 to vector<32x2xf32>
    %26 = arith.select %23, %24, %25 : vector<32x2xi1>, vector<32x2xf32>
    %27 = arith.truncf %26 : vector<32x2xf32> to vector<32x2xbf16>
    %28 = tpu.iota {dimensions = array<i32: 1>} : vector<16x2xi32>
    %29 = vector.broadcast %5 : vector<16x1xi32> to vector<16x2xi32>
    %30 = arith.cmpi eq, %28, %29 : vector<16x2xi32>
    %cst_16 = arith.constant 1.000000e+00 : f32
    %cst_17 = arith.constant 0.000000e+00 : f32
    %31 = vector.broadcast %cst_16 : f32 to vector<16x2xf32>
    %32 = vector.broadcast %cst_17 : f32 to vector<16x2xf32>
    %33 = arith.select %30, %31, %32 : vector<16x2xi1>, vector<16x2xf32>
    %34 = arith.truncf %33 : vector<16x2xf32> to vector<16x2xbf16>
    %35 = tpu.iota {dimensions = array<i32: 0>} : vector<16x32xi32>
    %36 = vector.broadcast %3 : vector<1x32xi32> to vector<16x32xi32>
    %37 = arith.cmpi eq, %35, %36 : vector<16x32xi32>
    %cst_18 = arith.constant 1.000000e+00 : f32
    %cst_19 = arith.constant 0.000000e+00 : f32
    %38 = vector.broadcast %cst_18 : f32 to vector<16x32xf32>
    %39 = vector.broadcast %cst_19 : f32 to vector<16x32xf32>
    %40 = arith.select %37, %38, %39 : vector<16x32xi1>, vector<16x32xf32>
    %41 = arith.truncf %40 : vector<16x32xf32> to vector<16x32xbf16>
    %42 = tpu.iota {dimensions = array<i32: 0>} : vector<2x16xi32>
    %43 = vector.broadcast %6 : vector<1x16xi32> to vector<2x16xi32>
    %44 = arith.cmpi eq, %42, %43 : vector<2x16xi32>
    %cst_20 = arith.constant 1.000000e+00 : f32
    %cst_21 = arith.constant 0.000000e+00 : f32
    %45 = vector.broadcast %cst_20 : f32 to vector<2x16xf32>
    %46 = vector.broadcast %cst_21 : f32 to vector<2x16xf32>
    %47 = arith.select %44, %45, %46 : vector<2x16xi1>, vector<2x16xf32>
    %48 = arith.truncf %47 : vector<2x16xf32> to vector<2x16xbf16>
    %49 = tpu.iota {dimensions = array<i32: 0>} : vector<2x32xi32>
    %50 = vector.broadcast %4 : vector<1x32xi32> to vector<2x32xi32>
    %51 = arith.cmpi eq, %49, %50 : vector<2x32xi32>
    %cst_22 = arith.constant 1.000000e+00 : f32
    %cst_23 = arith.constant 0.000000e+00 : f32
    %52 = vector.broadcast %cst_22 : f32 to vector<2x32xf32>
    %53 = vector.broadcast %cst_23 : f32 to vector<2x32xf32>
    %54 = arith.select %51, %52, %53 : vector<2x32xi1>, vector<2x32xf32>
    %55 = arith.truncf %54 : vector<2x32xf32> to vector<2x32xbf16>
    %cst_24 = arith.constant dense<0.000000e+00> : vector<16xf32>
    %56 = vector.multi_reduction <add>, %40, %cst_24 [1] : vector<16x32xf32> to vector<16xf32>
    %57 = vector.shape_cast %56 : vector<16xf32> to vector<16x1xf32>
    %cst_25 = arith.constant 1.000000e+00 : f32
    %58 = vector.broadcast %cst_25 : f32 to vector<16x1xf32>
    %59 = arith.maximumf %57, %58 : vector<16x1xf32>
    %cst_26 = arith.constant 1.000000e+00 : f32
    %60 = vector.broadcast %cst_26 : f32 to vector<16x1xf32>
    %61 = arith.divf %60, %59 : vector<16x1xf32>
    %c0_27 = arith.constant 0 : index
    %c0_28 = arith.constant 0 : index
    %62 = vector.load %arg4[%c0_27, %c0_28] : memref<16x6xf32, #tpu.memory_space<vmem>>, vector<16x6xf32>
    %c0_29 = arith.constant 0 : index
    %c0_30 = arith.constant 0 : index
    %63 = vector.load %arg5[%c0_29, %c0_30] : memref<32x5xf32, #tpu.memory_space<vmem>>, vector<32x5xf32>
    %c0_31 = arith.constant 0 : index
    %c0_32 = arith.constant 0 : index
    %64 = vector.load %arg6[%c0_31, %c0_32] : memref<2x4xf32, #tpu.memory_space<vmem>>, vector<2x4xf32>
    %65 = arith.truncf %62 : vector<16x6xf32> to vector<16x6xbf16>
    %66 = arith.truncf %64 : vector<2x4xf32> to vector<2x4xbf16>
    %cst_33 = arith.constant dense<0.000000e+00> : vector<32x6xf32>
    %67 = tpu.matmul %13, %65, %cst_33 {dimension_numbers = #tpu.dot_dimension_numbers<[1], [0], [0], [1], [0, 0, 1, 1], [], []>} : vector<32x16xbf16>, vector<16x6xbf16>, vector<32x6xf32> -> vector<32x6xf32>
    %cst_34 = arith.constant dense<0.000000e+00> : vector<32x6xf32>
    %68 = tpu.matmul %20, %65, %cst_34 {dimension_numbers = #tpu.dot_dimension_numbers<[1], [0], [0], [1], [0, 0, 1, 1], [], []>} : vector<32x16xbf16>, vector<16x6xbf16>, vector<32x6xf32> -> vector<32x6xf32>
    %cst_35 = arith.constant dense<0.000000e+00> : vector<32x4xf32>
    %69 = tpu.matmul %27, %66, %cst_35 {dimension_numbers = #tpu.dot_dimension_numbers<[1], [0], [0], [1], [0, 0, 1, 1], [], []>} : vector<32x2xbf16>, vector<2x4xbf16>, vector<32x4xf32> -> vector<32x4xf32>
    %cst_36 = arith.constant dense<0.000000e+00> : vector<16x4xf32>
    %70 = tpu.matmul %34, %66, %cst_36 {dimension_numbers = #tpu.dot_dimension_numbers<[1], [0], [0], [1], [0, 0, 1, 1], [], []>} : vector<16x2xbf16>, vector<2x4xbf16>, vector<16x4xf32> -> vector<16x4xf32>
    %71 = tpu.concatenate %67, %68, %63, %69 in 1 : vector<32x6xf32>, vector<32x6xf32>, vector<32x5xf32>, vector<32x4xf32> -> vector<32x21xf32>
    %72 = arith.truncf %71 : vector<32x21xf32> to vector<32x21xbf16>
    %c0_37 = arith.constant 0 : index
    %c0_38 = arith.constant 0 : index
    %73 = vector.load %arg8[%c0_37, %c0_38] : memref<336x32xbf16, #tpu.memory_space<vmem>>, vector<21x32xbf16>
    %cst_39 = arith.constant dense<0.000000e+00> : vector<32x32xf32>
    %74 = tpu.matmul %72, %73, %cst_39 {dimension_numbers = #tpu.dot_dimension_numbers<[1], [0], [0], [1], [0, 0, 1, 1], [], []>} : vector<32x21xbf16>, vector<21x32xbf16>, vector<32x32xf32> -> vector<32x32xf32>
    %c0_40 = arith.constant 0 : index
    %c0_41 = arith.constant 0 : index
    %75 = vector.load %arg7[%c0_40, %c0_41] : memref<48x32xf32, #tpu.memory_space<vmem>>, vector<1x32xf32>
    %76 = vector.broadcast %75 : vector<1x32xf32> to vector<32x32xf32>
    %77 = arith.addf %74, %76 : vector<32x32xf32>
    %cst_42 = arith.constant 0.000000e+00 : f32
    %78 = vector.broadcast %cst_42 : f32 to vector<32x32xf32>
    %79 = arith.maximumf %77, %78 : vector<32x32xf32>
    %80 = arith.truncf %79 : vector<32x32xf32> to vector<32x32xbf16>
    %c32 = arith.constant 32 : index
    %c0_43 = arith.constant 0 : index
    %81 = vector.load %arg8[%c32, %c0_43] : memref<336x32xbf16, #tpu.memory_space<vmem>>, vector<32x32xbf16>
    %cst_44 = arith.constant dense<0.000000e+00> : vector<32x32xf32>
    %82 = tpu.matmul %80, %81, %cst_44 {dimension_numbers = #tpu.dot_dimension_numbers<[1], [0], [0], [1], [0, 0, 1, 1], [], []>} : vector<32x32xbf16>, vector<32x32xbf16>, vector<32x32xf32> -> vector<32x32xf32>
    %c1_45 = arith.constant 1 : index
    %c0_46 = arith.constant 0 : index
    %83 = vector.load %arg7[%c1_45, %c0_46] : memref<48x32xf32, #tpu.memory_space<vmem>>, vector<1x32xf32>
    %84 = vector.broadcast %83 : vector<1x32xf32> to vector<32x32xf32>
    %85 = arith.addf %82, %84 : vector<32x32xf32>
    %cst_47 = arith.constant dense<0.000000e+00> : vector<32xf32>
    %86 = vector.multi_reduction <add>, %85, %cst_47 [1] : vector<32x32xf32> to vector<32xf32>
    %87 = vector.shape_cast %86 : vector<32xf32> to vector<32x1xf32>
    %cst_48 = arith.constant 3.200000e+01 : f32
    %88 = vector.broadcast %cst_48 : f32 to vector<32x1xf32>
    %89 = arith.divf %87, %88 : vector<32x1xf32>
    %90 = arith.mulf %85, %85 : vector<32x32xf32>
    %cst_49 = arith.constant dense<0.000000e+00> : vector<32xf32>
    %91 = vector.multi_reduction <add>, %90, %cst_49 [1] : vector<32x32xf32> to vector<32xf32>
    %92 = vector.shape_cast %91 : vector<32xf32> to vector<32x1xf32>
    %cst_50 = arith.constant 3.200000e+01 : f32
    %93 = vector.broadcast %cst_50 : f32 to vector<32x1xf32>
    %94 = arith.divf %92, %93 : vector<32x1xf32>
    %95 = arith.mulf %89, %89 : vector<32x1xf32>
    %96 = arith.subf %94, %95 : vector<32x1xf32>
    %cst_51 = arith.constant 0.000000e+00 : f32
    %97 = vector.broadcast %cst_51 : f32 to vector<32x1xf32>
    %98 = arith.maximumf %96, %97 : vector<32x1xf32>
    %99 = vector.broadcast %89 : vector<32x1xf32> to vector<32x32xf32>
    %100 = arith.subf %85, %99 : vector<32x32xf32>
    %cst_52 = arith.constant 9.99999974E-6 : f32
    %101 = vector.broadcast %cst_52 : f32 to vector<32x1xf32>
    %102 = arith.addf %98, %101 : vector<32x1xf32>
    %103 = math.rsqrt %102 : vector<32x1xf32>
    %104 = vector.broadcast %103 : vector<32x1xf32> to vector<32x32xf32>
    %105 = arith.mulf %100, %104 : vector<32x32xf32>
    %c2_53 = arith.constant 2 : index
    %c0_54 = arith.constant 0 : index
    %106 = vector.load %arg7[%c2_53, %c0_54] : memref<48x32xf32, #tpu.memory_space<vmem>>, vector<1x32xf32>
    %107 = vector.broadcast %106 : vector<1x32xf32> to vector<32x32xf32>
    %108 = arith.mulf %105, %107 : vector<32x32xf32>
    %c3 = arith.constant 3 : index
    %c0_55 = arith.constant 0 : index
    %109 = vector.load %arg7[%c3, %c0_55] : memref<48x32xf32, #tpu.memory_space<vmem>>, vector<1x32xf32>
    %110 = vector.broadcast %109 : vector<1x32xf32> to vector<32x32xf32>
    %111 = arith.addf %108, %110 : vector<32x32xf32>
    %112 = tpu.concatenate %68, %111 in 1 : vector<32x6xf32>, vector<32x32xf32> -> vector<32x38xf32>
    %113 = arith.truncf %112 : vector<32x38xf32> to vector<32x38xbf16>
    %c64 = arith.constant 64 : index
    %c0_56 = arith.constant 0 : index
    %114 = vector.load %arg8[%c64, %c0_56] : memref<336x32xbf16, #tpu.memory_space<vmem>>, vector<38x32xbf16>
    %cst_57 = arith.constant dense<0.000000e+00> : vector<32x32xf32>
    %115 = tpu.matmul %113, %114, %cst_57 {dimension_numbers = #tpu.dot_dimension_numbers<[1], [0], [0], [1], [0, 0, 1, 1], [], []>} : vector<32x38xbf16>, vector<38x32xbf16>, vector<32x32xf32> -> vector<32x32xf32>
    %c4 = arith.constant 4 : index
    %c0_58 = arith.constant 0 : index
    %116 = vector.load %arg7[%c4, %c0_58] : memref<48x32xf32, #tpu.memory_space<vmem>>, vector<1x32xf32>
    %117 = vector.broadcast %116 : vector<1x32xf32> to vector<32x32xf32>
    %118 = arith.addf %115, %117 : vector<32x32xf32>
    %cst_59 = arith.constant 0.000000e+00 : f32
    %119 = vector.broadcast %cst_59 : f32 to vector<32x32xf32>
    %120 = arith.maximumf %118, %119 : vector<32x32xf32>
    %121 = arith.truncf %120 : vector<32x32xf32> to vector<32x32xbf16>
    %c112 = arith.constant 112 : index
    %c0_60 = arith.constant 0 : index
    %122 = vector.load %arg8[%c112, %c0_60] : memref<336x32xbf16, #tpu.memory_space<vmem>>, vector<32x32xbf16>
    %cst_61 = arith.constant dense<0.000000e+00> : vector<32x32xf32>
    %123 = tpu.matmul %121, %122, %cst_61 {dimension_numbers = #tpu.dot_dimension_numbers<[1], [0], [0], [1], [0, 0, 1, 1], [], []>} : vector<32x32xbf16>, vector<32x32xbf16>, vector<32x32xf32> -> vector<32x32xf32>
    %c5 = arith.constant 5 : index
    %c0_62 = arith.constant 0 : index
    %124 = vector.load %arg7[%c5, %c0_62] : memref<48x32xf32, #tpu.memory_space<vmem>>, vector<1x32xf32>
    %125 = vector.broadcast %124 : vector<1x32xf32> to vector<32x32xf32>
    %126 = arith.addf %123, %125 : vector<32x32xf32>
    %cst_63 = arith.constant dense<0.000000e+00> : vector<32xf32>
    %127 = vector.multi_reduction <add>, %126, %cst_63 [1] : vector<32x32xf32> to vector<32xf32>
    %128 = vector.shape_cast %127 : vector<32xf32> to vector<32x1xf32>
    %cst_64 = arith.constant 3.200000e+01 : f32
    %129 = vector.broadcast %cst_64 : f32 to vector<32x1xf32>
    %130 = arith.divf %128, %129 : vector<32x1xf32>
    %131 = arith.mulf %126, %126 : vector<32x32xf32>
    %cst_65 = arith.constant dense<0.000000e+00> : vector<32xf32>
    %132 = vector.multi_reduction <add>, %131, %cst_65 [1] : vector<32x32xf32> to vector<32xf32>
    %133 = vector.shape_cast %132 : vector<32xf32> to vector<32x1xf32>
    %cst_66 = arith.constant 3.200000e+01 : f32
    %134 = vector.broadcast %cst_66 : f32 to vector<32x1xf32>
    %135 = arith.divf %133, %134 : vector<32x1xf32>
    %136 = arith.mulf %130, %130 : vector<32x1xf32>
    %137 = arith.subf %135, %136 : vector<32x1xf32>
    %cst_67 = arith.constant 0.000000e+00 : f32
    %138 = vector.broadcast %cst_67 : f32 to vector<32x1xf32>
    %139 = arith.maximumf %137, %138 : vector<32x1xf32>
    %140 = vector.broadcast %130 : vector<32x1xf32> to vector<32x32xf32>
    %141 = arith.subf %126, %140 : vector<32x32xf32>
    %cst_68 = arith.constant 9.99999974E-6 : f32
    %142 = vector.broadcast %cst_68 : f32 to vector<32x1xf32>
    %143 = arith.addf %139, %142 : vector<32x1xf32>
    %144 = math.rsqrt %143 : vector<32x1xf32>
    %145 = vector.broadcast %144 : vector<32x1xf32> to vector<32x32xf32>
    %146 = arith.mulf %141, %145 : vector<32x32xf32>
    %c6 = arith.constant 6 : index
    %c0_69 = arith.constant 0 : index
    %147 = vector.load %arg7[%c6, %c0_69] : memref<48x32xf32, #tpu.memory_space<vmem>>, vector<1x32xf32>
    %148 = vector.broadcast %147 : vector<1x32xf32> to vector<32x32xf32>
    %149 = arith.mulf %146, %148 : vector<32x32xf32>
    %c7 = arith.constant 7 : index
    %c0_70 = arith.constant 0 : index
    %150 = vector.load %arg7[%c7, %c0_70] : memref<48x32xf32, #tpu.memory_space<vmem>>, vector<1x32xf32>
    %151 = vector.broadcast %150 : vector<1x32xf32> to vector<32x32xf32>
    %152 = arith.addf %149, %151 : vector<32x32xf32>
    %153 = arith.truncf %152 : vector<32x32xf32> to vector<32x32xbf16>
    %cst_71 = arith.constant dense<0.000000e+00> : vector<16x32xf32>
    %154 = tpu.matmul %41, %153, %cst_71 {dimension_numbers = #tpu.dot_dimension_numbers<[1], [0], [0], [1], [0, 0, 1, 1], [], []>} : vector<16x32xbf16>, vector<32x32xbf16>, vector<16x32xf32> -> vector<16x32xf32>
    %155 = vector.broadcast %61 : vector<16x1xf32> to vector<16x32xf32>
    %156 = arith.mulf %154, %155 : vector<16x32xf32>
    %157 = tpu.concatenate %62, %156, %70 in 1 : vector<16x6xf32>, vector<16x32xf32>, vector<16x4xf32> -> vector<16x42xf32>
    %158 = arith.truncf %157 : vector<16x42xf32> to vector<16x42xbf16>
    %c144 = arith.constant 144 : index
    %c0_72 = arith.constant 0 : index
    %159 = vector.load %arg8[%c144, %c0_72] : memref<336x32xbf16, #tpu.memory_space<vmem>>, vector<42x32xbf16>
    %cst_73 = arith.constant dense<0.000000e+00> : vector<16x32xf32>
    %160 = tpu.matmul %158, %159, %cst_73 {dimension_numbers = #tpu.dot_dimension_numbers<[1], [0], [0], [1], [0, 0, 1, 1], [], []>} : vector<16x42xbf16>, vector<42x32xbf16>, vector<16x32xf32> -> vector<16x32xf32>
    %c8 = arith.constant 8 : index
    %c0_74 = arith.constant 0 : index
    %161 = vector.load %arg7[%c8, %c0_74] : memref<48x32xf32, #tpu.memory_space<vmem>>, vector<1x32xf32>
    %162 = vector.broadcast %161 : vector<1x32xf32> to vector<16x32xf32>
    %163 = arith.addf %160, %162 : vector<16x32xf32>
    %cst_75 = arith.constant 0.000000e+00 : f32
    %164 = vector.broadcast %cst_75 : f32 to vector<16x32xf32>
    %165 = arith.maximumf %163, %164 : vector<16x32xf32>
    %166 = arith.truncf %165 : vector<16x32xf32> to vector<16x32xbf16>
    %c192 = arith.constant 192 : index
    %c0_76 = arith.constant 0 : index
    %167 = vector.load %arg8[%c192, %c0_76] : memref<336x32xbf16, #tpu.memory_space<vmem>>, vector<32x32xbf16>
    %cst_77 = arith.constant dense<0.000000e+00> : vector<16x32xf32>
    %168 = tpu.matmul %166, %167, %cst_77 {dimension_numbers = #tpu.dot_dimension_numbers<[1], [0], [0], [1], [0, 0, 1, 1], [], []>} : vector<16x32xbf16>, vector<32x32xbf16>, vector<16x32xf32> -> vector<16x32xf32>
    %c9 = arith.constant 9 : index
    %c0_78 = arith.constant 0 : index
    %169 = vector.load %arg7[%c9, %c0_78] : memref<48x32xf32, #tpu.memory_space<vmem>>, vector<1x32xf32>
    %170 = vector.broadcast %169 : vector<1x32xf32> to vector<16x32xf32>
    %171 = arith.addf %168, %170 : vector<16x32xf32>
    %cst_79 = arith.constant dense<0.000000e+00> : vector<16xf32>
    %172 = vector.multi_reduction <add>, %171, %cst_79 [1] : vector<16x32xf32> to vector<16xf32>
    %173 = vector.shape_cast %172 : vector<16xf32> to vector<16x1xf32>
    %cst_80 = arith.constant 3.200000e+01 : f32
    %174 = vector.broadcast %cst_80 : f32 to vector<16x1xf32>
    %175 = arith.divf %173, %174 : vector<16x1xf32>
    %176 = arith.mulf %171, %171 : vector<16x32xf32>
    %cst_81 = arith.constant dense<0.000000e+00> : vector<16xf32>
    %177 = vector.multi_reduction <add>, %176, %cst_81 [1] : vector<16x32xf32> to vector<16xf32>
    %178 = vector.shape_cast %177 : vector<16xf32> to vector<16x1xf32>
    %cst_82 = arith.constant 3.200000e+01 : f32
    %179 = vector.broadcast %cst_82 : f32 to vector<16x1xf32>
    %180 = arith.divf %178, %179 : vector<16x1xf32>
    %181 = arith.mulf %175, %175 : vector<16x1xf32>
    %182 = arith.subf %180, %181 : vector<16x1xf32>
    %cst_83 = arith.constant 0.000000e+00 : f32
    %183 = vector.broadcast %cst_83 : f32 to vector<16x1xf32>
    %184 = arith.maximumf %182, %183 : vector<16x1xf32>
    %185 = vector.broadcast %175 : vector<16x1xf32> to vector<16x32xf32>
    %186 = arith.subf %171, %185 : vector<16x32xf32>
    %cst_84 = arith.constant 9.99999974E-6 : f32
    %187 = vector.broadcast %cst_84 : f32 to vector<16x1xf32>
    %188 = arith.addf %184, %187 : vector<16x1xf32>
    %189 = math.rsqrt %188 : vector<16x1xf32>
    %190 = vector.broadcast %189 : vector<16x1xf32> to vector<16x32xf32>
    %191 = arith.mulf %186, %190 : vector<16x32xf32>
    %c10 = arith.constant 10 : index
    %c0_85 = arith.constant 0 : index
    %192 = vector.load %arg7[%c10, %c0_85] : memref<48x32xf32, #tpu.memory_space<vmem>>, vector<1x32xf32>
    %193 = vector.broadcast %192 : vector<1x32xf32> to vector<16x32xf32>
    %194 = arith.mulf %191, %193 : vector<16x32xf32>
    %c11 = arith.constant 11 : index
    %c0_86 = arith.constant 0 : index
    %195 = vector.load %arg7[%c11, %c0_86] : memref<48x32xf32, #tpu.memory_space<vmem>>, vector<1x32xf32>
    %196 = vector.broadcast %195 : vector<1x32xf32> to vector<16x32xf32>
    %197 = arith.addf %194, %196 : vector<16x32xf32>
    %198 = arith.truncf %197 : vector<16x32xf32> to vector<16x32xbf16>
    %cst_87 = arith.constant dense<0.000000e+00> : vector<2x32xf32>
    %199 = tpu.matmul %48, %198, %cst_87 {dimension_numbers = #tpu.dot_dimension_numbers<[1], [0], [0], [1], [0, 0, 1, 1], [], []>} : vector<2x16xbf16>, vector<16x32xbf16>, vector<2x32xf32> -> vector<2x32xf32>
    %200 = arith.truncf %111 : vector<32x32xf32> to vector<32x32xbf16>
    %cst_88 = arith.constant dense<0.000000e+00> : vector<2x32xf32>
    %201 = tpu.matmul %55, %200, %cst_88 {dimension_numbers = #tpu.dot_dimension_numbers<[1], [0], [0], [1], [0, 0, 1, 1], [], []>} : vector<2x32xbf16>, vector<32x32xbf16>, vector<2x32xf32> -> vector<2x32xf32>
    %202 = tpu.concatenate %64, %199, %201 in 1 : vector<2x4xf32>, vector<2x32xf32>, vector<2x32xf32> -> vector<2x68xf32>
    %203 = arith.truncf %202 : vector<2x68xf32> to vector<2x68xbf16>
    %c224 = arith.constant 224 : index
    %c0_89 = arith.constant 0 : index
    %204 = vector.load %arg8[%c224, %c0_89] : memref<336x32xbf16, #tpu.memory_space<vmem>>, vector<68x32xbf16>
    %cst_90 = arith.constant dense<0.000000e+00> : vector<2x32xf32>
    %205 = tpu.matmul %203, %204, %cst_90 {dimension_numbers = #tpu.dot_dimension_numbers<[1], [0], [0], [1], [0, 0, 1, 1], [], []>} : vector<2x68xbf16>, vector<68x32xbf16>, vector<2x32xf32> -> vector<2x32xf32>
    %c12 = arith.constant 12 : index
    %c0_91 = arith.constant 0 : index
    %206 = vector.load %arg7[%c12, %c0_91] : memref<48x32xf32, #tpu.memory_space<vmem>>, vector<1x32xf32>
    %207 = vector.broadcast %206 : vector<1x32xf32> to vector<2x32xf32>
    %208 = arith.addf %205, %207 : vector<2x32xf32>
    %cst_92 = arith.constant 0.000000e+00 : f32
    %209 = vector.broadcast %cst_92 : f32 to vector<2x32xf32>
    %210 = arith.maximumf %208, %209 : vector<2x32xf32>
    %211 = arith.truncf %210 : vector<2x32xf32> to vector<2x32xbf16>
    %c304 = arith.constant 304 : index
    %c0_93 = arith.constant 0 : index
    %212 = vector.load %arg8[%c304, %c0_93] : memref<336x32xbf16, #tpu.memory_space<vmem>>, vector<32x32xbf16>
    %cst_94 = arith.constant dense<0.000000e+00> : vector<2x32xf32>
    %213 = tpu.matmul %211, %212, %cst_94 {dimension_numbers = #tpu.dot_dimension_numbers<[1], [0], [0], [1], [0, 0, 1, 1], [], []>} : vector<2x32xbf16>, vector<32x32xbf16>, vector<2x32xf32> -> vector<2x32xf32>
    %c13 = arith.constant 13 : index
    %c0_95 = arith.constant 0 : index
    %214 = vector.load %arg7[%c13, %c0_95] : memref<48x32xf32, #tpu.memory_space<vmem>>, vector<1x32xf32>
    %215 = vector.broadcast %214 : vector<1x32xf32> to vector<2x32xf32>
    %216 = arith.addf %213, %215 : vector<2x32xf32>
    %cst_96 = arith.constant dense<0.000000e+00> : vector<2xf32>
    %217 = vector.multi_reduction <add>, %216, %cst_96 [1] : vector<2x32xf32> to vector<2xf32>
    %218 = vector.shape_cast %217 : vector<2xf32> to vector<2x1xf32>
    %cst_97 = arith.constant 3.200000e+01 : f32
    %219 = vector.broadcast %cst_97 : f32 to vector<2x1xf32>
    %220 = arith.divf %218, %219 : vector<2x1xf32>
    %221 = arith.mulf %216, %216 : vector<2x32xf32>
    %cst_98 = arith.constant dense<0.000000e+00> : vector<2xf32>
    %222 = vector.multi_reduction <add>, %221, %cst_98 [1] : vector<2x32xf32> to vector<2xf32>
    %223 = vector.shape_cast %222 : vector<2xf32> to vector<2x1xf32>
    %cst_99 = arith.constant 3.200000e+01 : f32
    %224 = vector.broadcast %cst_99 : f32 to vector<2x1xf32>
    %225 = arith.divf %223, %224 : vector<2x1xf32>
    %226 = arith.mulf %220, %220 : vector<2x1xf32>
    %227 = arith.subf %225, %226 : vector<2x1xf32>
    %cst_100 = arith.constant 0.000000e+00 : f32
    %228 = vector.broadcast %cst_100 : f32 to vector<2x1xf32>
    %229 = arith.maximumf %227, %228 : vector<2x1xf32>
    %230 = vector.broadcast %220 : vector<2x1xf32> to vector<2x32xf32>
    %231 = arith.subf %216, %230 : vector<2x32xf32>
    %cst_101 = arith.constant 9.99999974E-6 : f32
    %232 = vector.broadcast %cst_101 : f32 to vector<2x1xf32>
    %233 = arith.addf %229, %232 : vector<2x1xf32>
    %234 = math.rsqrt %233 : vector<2x1xf32>
    %235 = vector.broadcast %234 : vector<2x1xf32> to vector<2x32xf32>
    %236 = arith.mulf %231, %235 : vector<2x32xf32>
    %c14 = arith.constant 14 : index
    %c0_102 = arith.constant 0 : index
    %237 = vector.load %arg7[%c14, %c0_102] : memref<48x32xf32, #tpu.memory_space<vmem>>, vector<1x32xf32>
    %238 = vector.broadcast %237 : vector<1x32xf32> to vector<2x32xf32>
    %239 = arith.mulf %236, %238 : vector<2x32xf32>
    %c15 = arith.constant 15 : index
    %c0_103 = arith.constant 0 : index
    %240 = vector.load %arg7[%c15, %c0_103] : memref<48x32xf32, #tpu.memory_space<vmem>>, vector<1x32xf32>
    %241 = vector.broadcast %240 : vector<1x32xf32> to vector<2x32xf32>
    %242 = arith.addf %239, %241 : vector<2x32xf32>
    %243 = arith.truncf %197 : vector<16x32xf32> to vector<16x32xbf16>
    %244 = arith.truncf %242 : vector<2x32xf32> to vector<2x32xbf16>
    %cst_104 = arith.constant dense<0.000000e+00> : vector<32x32xf32>
    %245 = tpu.matmul %13, %243, %cst_104 {dimension_numbers = #tpu.dot_dimension_numbers<[1], [0], [0], [1], [0, 0, 1, 1], [], []>} : vector<32x16xbf16>, vector<16x32xbf16>, vector<32x32xf32> -> vector<32x32xf32>
    %cst_105 = arith.constant dense<0.000000e+00> : vector<32x32xf32>
    %246 = tpu.matmul %20, %243, %cst_105 {dimension_numbers = #tpu.dot_dimension_numbers<[1], [0], [0], [1], [0, 0, 1, 1], [], []>} : vector<32x16xbf16>, vector<16x32xbf16>, vector<32x32xf32> -> vector<32x32xf32>
    %cst_106 = arith.constant dense<0.000000e+00> : vector<32x32xf32>
    %247 = tpu.matmul %27, %244, %cst_106 {dimension_numbers = #tpu.dot_dimension_numbers<[1], [0], [0], [1], [0, 0, 1, 1], [], []>} : vector<32x2xbf16>, vector<2x32xbf16>, vector<32x32xf32> -> vector<32x32xf32>
    %cst_107 = arith.constant dense<0.000000e+00> : vector<16x32xf32>
    %248 = tpu.matmul %34, %244, %cst_107 {dimension_numbers = #tpu.dot_dimension_numbers<[1], [0], [0], [1], [0, 0, 1, 1], [], []>} : vector<16x2xbf16>, vector<2x32xbf16>, vector<16x32xf32> -> vector<16x32xf32>
    %249 = tpu.concatenate %245, %246, %111, %247 in 1 : vector<32x32xf32>, vector<32x32xf32>, vector<32x32xf32>, vector<32x32xf32> -> vector<32x128xf32>
    %250 = arith.truncf %249 : vector<32x128xf32> to vector<32x128xbf16>
    %c0_108 = arith.constant 0 : index
    %c0_109 = arith.constant 0 : index
    %251 = vector.load %arg9[%c0_108, %c0_109] : memref<512x32xbf16, #tpu.memory_space<vmem>>, vector<128x32xbf16>
    %cst_110 = arith.constant dense<0.000000e+00> : vector<32x32xf32>
    %252 = tpu.matmul %250, %251, %cst_110 {dimension_numbers = #tpu.dot_dimension_numbers<[1], [0], [0], [1], [0, 0, 1, 1], [], []>} : vector<32x128xbf16>, vector<128x32xbf16>, vector<32x32xf32> -> vector<32x32xf32>
    %c16 = arith.constant 16 : index
    %c0_111 = arith.constant 0 : index
    %253 = vector.load %arg7[%c16, %c0_111] : memref<48x32xf32, #tpu.memory_space<vmem>>, vector<1x32xf32>
    %254 = vector.broadcast %253 : vector<1x32xf32> to vector<32x32xf32>
    %255 = arith.addf %252, %254 : vector<32x32xf32>
    %cst_112 = arith.constant 0.000000e+00 : f32
    %256 = vector.broadcast %cst_112 : f32 to vector<32x32xf32>
    %257 = arith.maximumf %255, %256 : vector<32x32xf32>
    %258 = arith.truncf %257 : vector<32x32xf32> to vector<32x32xbf16>
    %c128 = arith.constant 128 : index
    %c0_113 = arith.constant 0 : index
    %259 = vector.load %arg9[%c128, %c0_113] : memref<512x32xbf16, #tpu.memory_space<vmem>>, vector<32x32xbf16>
    %cst_114 = arith.constant dense<0.000000e+00> : vector<32x32xf32>
    %260 = tpu.matmul %258, %259, %cst_114 {dimension_numbers = #tpu.dot_dimension_numbers<[1], [0], [0], [1], [0, 0, 1, 1], [], []>} : vector<32x32xbf16>, vector<32x32xbf16>, vector<32x32xf32> -> vector<32x32xf32>
    %c17 = arith.constant 17 : index
    %c0_115 = arith.constant 0 : index
    %261 = vector.load %arg7[%c17, %c0_115] : memref<48x32xf32, #tpu.memory_space<vmem>>, vector<1x32xf32>
    %262 = vector.broadcast %261 : vector<1x32xf32> to vector<32x32xf32>
    %263 = arith.addf %260, %262 : vector<32x32xf32>
    %cst_116 = arith.constant dense<0.000000e+00> : vector<32xf32>
    %264 = vector.multi_reduction <add>, %263, %cst_116 [1] : vector<32x32xf32> to vector<32xf32>
    %265 = vector.shape_cast %264 : vector<32xf32> to vector<32x1xf32>
    %cst_117 = arith.constant 3.200000e+01 : f32
    %266 = vector.broadcast %cst_117 : f32 to vector<32x1xf32>
    %267 = arith.divf %265, %266 : vector<32x1xf32>
    %268 = arith.mulf %263, %263 : vector<32x32xf32>
    %cst_118 = arith.constant dense<0.000000e+00> : vector<32xf32>
    %269 = vector.multi_reduction <add>, %268, %cst_118 [1] : vector<32x32xf32> to vector<32xf32>
    %270 = vector.shape_cast %269 : vector<32xf32> to vector<32x1xf32>
    %cst_119 = arith.constant 3.200000e+01 : f32
    %271 = vector.broadcast %cst_119 : f32 to vector<32x1xf32>
    %272 = arith.divf %270, %271 : vector<32x1xf32>
    %273 = arith.mulf %267, %267 : vector<32x1xf32>
    %274 = arith.subf %272, %273 : vector<32x1xf32>
    %cst_120 = arith.constant 0.000000e+00 : f32
    %275 = vector.broadcast %cst_120 : f32 to vector<32x1xf32>
    %276 = arith.maximumf %274, %275 : vector<32x1xf32>
    %277 = vector.broadcast %267 : vector<32x1xf32> to vector<32x32xf32>
    %278 = arith.subf %263, %277 : vector<32x32xf32>
    %cst_121 = arith.constant 9.99999974E-6 : f32
    %279 = vector.broadcast %cst_121 : f32 to vector<32x1xf32>
    %280 = arith.addf %276, %279 : vector<32x1xf32>
    %281 = math.rsqrt %280 : vector<32x1xf32>
    %282 = vector.broadcast %281 : vector<32x1xf32> to vector<32x32xf32>
    %283 = arith.mulf %278, %282 : vector<32x32xf32>
    %c18 = arith.constant 18 : index
    %c0_122 = arith.constant 0 : index
    %284 = vector.load %arg7[%c18, %c0_122] : memref<48x32xf32, #tpu.memory_space<vmem>>, vector<1x32xf32>
    %285 = vector.broadcast %284 : vector<1x32xf32> to vector<32x32xf32>
    %286 = arith.mulf %283, %285 : vector<32x32xf32>
    %c19 = arith.constant 19 : index
    %c0_123 = arith.constant 0 : index
    %287 = vector.load %arg7[%c19, %c0_123] : memref<48x32xf32, #tpu.memory_space<vmem>>, vector<1x32xf32>
    %288 = vector.broadcast %287 : vector<1x32xf32> to vector<32x32xf32>
    %289 = arith.addf %286, %288 : vector<32x32xf32>
    %290 = tpu.concatenate %246, %289 in 1 : vector<32x32xf32>, vector<32x32xf32> -> vector<32x64xf32>
    %291 = arith.truncf %290 : vector<32x64xf32> to vector<32x64xbf16>
    %c160 = arith.constant 160 : index
    %c0_124 = arith.constant 0 : index
    %292 = vector.load %arg9[%c160, %c0_124] : memref<512x32xbf16, #tpu.memory_space<vmem>>, vector<64x32xbf16>
    %cst_125 = arith.constant dense<0.000000e+00> : vector<32x32xf32>
    %293 = tpu.matmul %291, %292, %cst_125 {dimension_numbers = #tpu.dot_dimension_numbers<[1], [0], [0], [1], [0, 0, 1, 1], [], []>} : vector<32x64xbf16>, vector<64x32xbf16>, vector<32x32xf32> -> vector<32x32xf32>
    %c20 = arith.constant 20 : index
    %c0_126 = arith.constant 0 : index
    %294 = vector.load %arg7[%c20, %c0_126] : memref<48x32xf32, #tpu.memory_space<vmem>>, vector<1x32xf32>
    %295 = vector.broadcast %294 : vector<1x32xf32> to vector<32x32xf32>
    %296 = arith.addf %293, %295 : vector<32x32xf32>
    %cst_127 = arith.constant 0.000000e+00 : f32
    %297 = vector.broadcast %cst_127 : f32 to vector<32x32xf32>
    %298 = arith.maximumf %296, %297 : vector<32x32xf32>
    %299 = arith.truncf %298 : vector<32x32xf32> to vector<32x32xbf16>
    %c224_128 = arith.constant 224 : index
    %c0_129 = arith.constant 0 : index
    %300 = vector.load %arg9[%c224_128, %c0_129] : memref<512x32xbf16, #tpu.memory_space<vmem>>, vector<32x32xbf16>
    %cst_130 = arith.constant dense<0.000000e+00> : vector<32x32xf32>
    %301 = tpu.matmul %299, %300, %cst_130 {dimension_numbers = #tpu.dot_dimension_numbers<[1], [0], [0], [1], [0, 0, 1, 1], [], []>} : vector<32x32xbf16>, vector<32x32xbf16>, vector<32x32xf32> -> vector<32x32xf32>
    %c21 = arith.constant 21 : index
    %c0_131 = arith.constant 0 : index
    %302 = vector.load %arg7[%c21, %c0_131] : memref<48x32xf32, #tpu.memory_space<vmem>>, vector<1x32xf32>
    %303 = vector.broadcast %302 : vector<1x32xf32> to vector<32x32xf32>
    %304 = arith.addf %301, %303 : vector<32x32xf32>
    %cst_132 = arith.constant dense<0.000000e+00> : vector<32xf32>
    %305 = vector.multi_reduction <add>, %304, %cst_132 [1] : vector<32x32xf32> to vector<32xf32>
    %306 = vector.shape_cast %305 : vector<32xf32> to vector<32x1xf32>
    %cst_133 = arith.constant 3.200000e+01 : f32
    %307 = vector.broadcast %cst_133 : f32 to vector<32x1xf32>
    %308 = arith.divf %306, %307 : vector<32x1xf32>
    %309 = arith.mulf %304, %304 : vector<32x32xf32>
    %cst_134 = arith.constant dense<0.000000e+00> : vector<32xf32>
    %310 = vector.multi_reduction <add>, %309, %cst_134 [1] : vector<32x32xf32> to vector<32xf32>
    %311 = vector.shape_cast %310 : vector<32xf32> to vector<32x1xf32>
    %cst_135 = arith.constant 3.200000e+01 : f32
    %312 = vector.broadcast %cst_135 : f32 to vector<32x1xf32>
    %313 = arith.divf %311, %312 : vector<32x1xf32>
    %314 = arith.mulf %308, %308 : vector<32x1xf32>
    %315 = arith.subf %313, %314 : vector<32x1xf32>
    %cst_136 = arith.constant 0.000000e+00 : f32
    %316 = vector.broadcast %cst_136 : f32 to vector<32x1xf32>
    %317 = arith.maximumf %315, %316 : vector<32x1xf32>
    %318 = vector.broadcast %308 : vector<32x1xf32> to vector<32x32xf32>
    %319 = arith.subf %304, %318 : vector<32x32xf32>
    %cst_137 = arith.constant 9.99999974E-6 : f32
    %320 = vector.broadcast %cst_137 : f32 to vector<32x1xf32>
    %321 = arith.addf %317, %320 : vector<32x1xf32>
    %322 = math.rsqrt %321 : vector<32x1xf32>
    %323 = vector.broadcast %322 : vector<32x1xf32> to vector<32x32xf32>
    %324 = arith.mulf %319, %323 : vector<32x32xf32>
    %c22 = arith.constant 22 : index
    %c0_138 = arith.constant 0 : index
    %325 = vector.load %arg7[%c22, %c0_138] : memref<48x32xf32, #tpu.memory_space<vmem>>, vector<1x32xf32>
    %326 = vector.broadcast %325 : vector<1x32xf32> to vector<32x32xf32>
    %327 = arith.mulf %324, %326 : vector<32x32xf32>
    %c23 = arith.constant 23 : index
    %c0_139 = arith.constant 0 : index
    %328 = vector.load %arg7[%c23, %c0_139] : memref<48x32xf32, #tpu.memory_space<vmem>>, vector<1x32xf32>
    %329 = vector.broadcast %328 : vector<1x32xf32> to vector<32x32xf32>
    %330 = arith.addf %327, %329 : vector<32x32xf32>
    %331 = arith.truncf %330 : vector<32x32xf32> to vector<32x32xbf16>
    %cst_140 = arith.constant dense<0.000000e+00> : vector<16x32xf32>
    %332 = tpu.matmul %41, %331, %cst_140 {dimension_numbers = #tpu.dot_dimension_numbers<[1], [0], [0], [1], [0, 0, 1, 1], [], []>} : vector<16x32xbf16>, vector<32x32xbf16>, vector<16x32xf32> -> vector<16x32xf32>
    %333 = vector.broadcast %61 : vector<16x1xf32> to vector<16x32xf32>
    %334 = arith.mulf %332, %333 : vector<16x32xf32>
    %335 = tpu.concatenate %197, %334, %248 in 1 : vector<16x32xf32>, vector<16x32xf32>, vector<16x32xf32> -> vector<16x96xf32>
    %336 = arith.truncf %335 : vector<16x96xf32> to vector<16x96xbf16>
    %c256 = arith.constant 256 : index
    %c0_141 = arith.constant 0 : index
    %337 = vector.load %arg9[%c256, %c0_141] : memref<512x32xbf16, #tpu.memory_space<vmem>>, vector<96x32xbf16>
    %cst_142 = arith.constant dense<0.000000e+00> : vector<16x32xf32>
    %338 = tpu.matmul %336, %337, %cst_142 {dimension_numbers = #tpu.dot_dimension_numbers<[1], [0], [0], [1], [0, 0, 1, 1], [], []>} : vector<16x96xbf16>, vector<96x32xbf16>, vector<16x32xf32> -> vector<16x32xf32>
    %c24 = arith.constant 24 : index
    %c0_143 = arith.constant 0 : index
    %339 = vector.load %arg7[%c24, %c0_143] : memref<48x32xf32, #tpu.memory_space<vmem>>, vector<1x32xf32>
    %340 = vector.broadcast %339 : vector<1x32xf32> to vector<16x32xf32>
    %341 = arith.addf %338, %340 : vector<16x32xf32>
    %cst_144 = arith.constant 0.000000e+00 : f32
    %342 = vector.broadcast %cst_144 : f32 to vector<16x32xf32>
    %343 = arith.maximumf %341, %342 : vector<16x32xf32>
    %344 = arith.truncf %343 : vector<16x32xf32> to vector<16x32xbf16>
    %c352 = arith.constant 352 : index
    %c0_145 = arith.constant 0 : index
    %345 = vector.load %arg9[%c352, %c0_145] : memref<512x32xbf16, #tpu.memory_space<vmem>>, vector<32x32xbf16>
    %cst_146 = arith.constant dense<0.000000e+00> : vector<16x32xf32>
    %346 = tpu.matmul %344, %345, %cst_146 {dimension_numbers = #tpu.dot_dimension_numbers<[1], [0], [0], [1], [0, 0, 1, 1], [], []>} : vector<16x32xbf16>, vector<32x32xbf16>, vector<16x32xf32> -> vector<16x32xf32>
    %c25 = arith.constant 25 : index
    %c0_147 = arith.constant 0 : index
    %347 = vector.load %arg7[%c25, %c0_147] : memref<48x32xf32, #tpu.memory_space<vmem>>, vector<1x32xf32>
    %348 = vector.broadcast %347 : vector<1x32xf32> to vector<16x32xf32>
    %349 = arith.addf %346, %348 : vector<16x32xf32>
    %cst_148 = arith.constant dense<0.000000e+00> : vector<16xf32>
    %350 = vector.multi_reduction <add>, %349, %cst_148 [1] : vector<16x32xf32> to vector<16xf32>
    %351 = vector.shape_cast %350 : vector<16xf32> to vector<16x1xf32>
    %cst_149 = arith.constant 3.200000e+01 : f32
    %352 = vector.broadcast %cst_149 : f32 to vector<16x1xf32>
    %353 = arith.divf %351, %352 : vector<16x1xf32>
    %354 = arith.mulf %349, %349 : vector<16x32xf32>
    %cst_150 = arith.constant dense<0.000000e+00> : vector<16xf32>
    %355 = vector.multi_reduction <add>, %354, %cst_150 [1] : vector<16x32xf32> to vector<16xf32>
    %356 = vector.shape_cast %355 : vector<16xf32> to vector<16x1xf32>
    %cst_151 = arith.constant 3.200000e+01 : f32
    %357 = vector.broadcast %cst_151 : f32 to vector<16x1xf32>
    %358 = arith.divf %356, %357 : vector<16x1xf32>
    %359 = arith.mulf %353, %353 : vector<16x1xf32>
    %360 = arith.subf %358, %359 : vector<16x1xf32>
    %cst_152 = arith.constant 0.000000e+00 : f32
    %361 = vector.broadcast %cst_152 : f32 to vector<16x1xf32>
    %362 = arith.maximumf %360, %361 : vector<16x1xf32>
    %363 = vector.broadcast %353 : vector<16x1xf32> to vector<16x32xf32>
    %364 = arith.subf %349, %363 : vector<16x32xf32>
    %cst_153 = arith.constant 9.99999974E-6 : f32
    %365 = vector.broadcast %cst_153 : f32 to vector<16x1xf32>
    %366 = arith.addf %362, %365 : vector<16x1xf32>
    %367 = math.rsqrt %366 : vector<16x1xf32>
    %368 = vector.broadcast %367 : vector<16x1xf32> to vector<16x32xf32>
    %369 = arith.mulf %364, %368 : vector<16x32xf32>
    %c26 = arith.constant 26 : index
    %c0_154 = arith.constant 0 : index
    %370 = vector.load %arg7[%c26, %c0_154] : memref<48x32xf32, #tpu.memory_space<vmem>>, vector<1x32xf32>
    %371 = vector.broadcast %370 : vector<1x32xf32> to vector<16x32xf32>
    %372 = arith.mulf %369, %371 : vector<16x32xf32>
    %c27 = arith.constant 27 : index
    %c0_155 = arith.constant 0 : index
    %373 = vector.load %arg7[%c27, %c0_155] : memref<48x32xf32, #tpu.memory_space<vmem>>, vector<1x32xf32>
    %374 = vector.broadcast %373 : vector<1x32xf32> to vector<16x32xf32>
    %375 = arith.addf %372, %374 : vector<16x32xf32>
    %376 = arith.truncf %375 : vector<16x32xf32> to vector<16x32xbf16>
    %cst_156 = arith.constant dense<0.000000e+00> : vector<2x32xf32>
    %377 = tpu.matmul %48, %376, %cst_156 {dimension_numbers = #tpu.dot_dimension_numbers<[1], [0], [0], [1], [0, 0, 1, 1], [], []>} : vector<2x16xbf16>, vector<16x32xbf16>, vector<2x32xf32> -> vector<2x32xf32>
    %378 = arith.truncf %289 : vector<32x32xf32> to vector<32x32xbf16>
    %cst_157 = arith.constant dense<0.000000e+00> : vector<2x32xf32>
    %379 = tpu.matmul %55, %378, %cst_157 {dimension_numbers = #tpu.dot_dimension_numbers<[1], [0], [0], [1], [0, 0, 1, 1], [], []>} : vector<2x32xbf16>, vector<32x32xbf16>, vector<2x32xf32> -> vector<2x32xf32>
    %380 = tpu.concatenate %242, %377, %379 in 1 : vector<2x32xf32>, vector<2x32xf32>, vector<2x32xf32> -> vector<2x96xf32>
    %381 = arith.truncf %380 : vector<2x96xf32> to vector<2x96xbf16>
    %c384 = arith.constant 384 : index
    %c0_158 = arith.constant 0 : index
    %382 = vector.load %arg9[%c384, %c0_158] : memref<512x32xbf16, #tpu.memory_space<vmem>>, vector<96x32xbf16>
    %cst_159 = arith.constant dense<0.000000e+00> : vector<2x32xf32>
    %383 = tpu.matmul %381, %382, %cst_159 {dimension_numbers = #tpu.dot_dimension_numbers<[1], [0], [0], [1], [0, 0, 1, 1], [], []>} : vector<2x96xbf16>, vector<96x32xbf16>, vector<2x32xf32> -> vector<2x32xf32>
    %c28 = arith.constant 28 : index
    %c0_160 = arith.constant 0 : index
    %384 = vector.load %arg7[%c28, %c0_160] : memref<48x32xf32, #tpu.memory_space<vmem>>, vector<1x32xf32>
    %385 = vector.broadcast %384 : vector<1x32xf32> to vector<2x32xf32>
    %386 = arith.addf %383, %385 : vector<2x32xf32>
    %cst_161 = arith.constant 0.000000e+00 : f32
    %387 = vector.broadcast %cst_161 : f32 to vector<2x32xf32>
    %388 = arith.maximumf %386, %387 : vector<2x32xf32>
    %389 = arith.truncf %388 : vector<2x32xf32> to vector<2x32xbf16>
    %c480 = arith.constant 480 : index
    %c0_162 = arith.constant 0 : index
    %390 = vector.load %arg9[%c480, %c0_162] : memref<512x32xbf16, #tpu.memory_space<vmem>>, vector<32x32xbf16>
    %cst_163 = arith.constant dense<0.000000e+00> : vector<2x32xf32>
    %391 = tpu.matmul %389, %390, %cst_163 {dimension_numbers = #tpu.dot_dimension_numbers<[1], [0], [0], [1], [0, 0, 1, 1], [], []>} : vector<2x32xbf16>, vector<32x32xbf16>, vector<2x32xf32> -> vector<2x32xf32>
    %c29 = arith.constant 29 : index
    %c0_164 = arith.constant 0 : index
    %392 = vector.load %arg7[%c29, %c0_164] : memref<48x32xf32, #tpu.memory_space<vmem>>, vector<1x32xf32>
    %393 = vector.broadcast %392 : vector<1x32xf32> to vector<2x32xf32>
    %394 = arith.addf %391, %393 : vector<2x32xf32>
    %cst_165 = arith.constant dense<0.000000e+00> : vector<2xf32>
    %395 = vector.multi_reduction <add>, %394, %cst_165 [1] : vector<2x32xf32> to vector<2xf32>
    %396 = vector.shape_cast %395 : vector<2xf32> to vector<2x1xf32>
    %cst_166 = arith.constant 3.200000e+01 : f32
    %397 = vector.broadcast %cst_166 : f32 to vector<2x1xf32>
    %398 = arith.divf %396, %397 : vector<2x1xf32>
    %399 = arith.mulf %394, %394 : vector<2x32xf32>
    %cst_167 = arith.constant dense<0.000000e+00> : vector<2xf32>
    %400 = vector.multi_reduction <add>, %399, %cst_167 [1] : vector<2x32xf32> to vector<2xf32>
    %401 = vector.shape_cast %400 : vector<2xf32> to vector<2x1xf32>
    %cst_168 = arith.constant 3.200000e+01 : f32
    %402 = vector.broadcast %cst_168 : f32 to vector<2x1xf32>
    %403 = arith.divf %401, %402 : vector<2x1xf32>
    %404 = arith.mulf %398, %398 : vector<2x1xf32>
    %405 = arith.subf %403, %404 : vector<2x1xf32>
    %cst_169 = arith.constant 0.000000e+00 : f32
    %406 = vector.broadcast %cst_169 : f32 to vector<2x1xf32>
    %407 = arith.maximumf %405, %406 : vector<2x1xf32>
    %408 = vector.broadcast %398 : vector<2x1xf32> to vector<2x32xf32>
    %409 = arith.subf %394, %408 : vector<2x32xf32>
    %cst_170 = arith.constant 9.99999974E-6 : f32
    %410 = vector.broadcast %cst_170 : f32 to vector<2x1xf32>
    %411 = arith.addf %407, %410 : vector<2x1xf32>
    %412 = math.rsqrt %411 : vector<2x1xf32>
    %413 = vector.broadcast %412 : vector<2x1xf32> to vector<2x32xf32>
    %414 = arith.mulf %409, %413 : vector<2x32xf32>
    %c30 = arith.constant 30 : index
    %c0_171 = arith.constant 0 : index
    %415 = vector.load %arg7[%c30, %c0_171] : memref<48x32xf32, #tpu.memory_space<vmem>>, vector<1x32xf32>
    %416 = vector.broadcast %415 : vector<1x32xf32> to vector<2x32xf32>
    %417 = arith.mulf %414, %416 : vector<2x32xf32>
    %c31 = arith.constant 31 : index
    %c0_172 = arith.constant 0 : index
    %418 = vector.load %arg7[%c31, %c0_172] : memref<48x32xf32, #tpu.memory_space<vmem>>, vector<1x32xf32>
    %419 = vector.broadcast %418 : vector<1x32xf32> to vector<2x32xf32>
    %420 = arith.addf %417, %419 : vector<2x32xf32>
    %421 = arith.truncf %375 : vector<16x32xf32> to vector<16x32xbf16>
    %422 = arith.truncf %420 : vector<2x32xf32> to vector<2x32xbf16>
    %cst_173 = arith.constant dense<0.000000e+00> : vector<32x32xf32>
    %423 = tpu.matmul %13, %421, %cst_173 {dimension_numbers = #tpu.dot_dimension_numbers<[1], [0], [0], [1], [0, 0, 1, 1], [], []>} : vector<32x16xbf16>, vector<16x32xbf16>, vector<32x32xf32> -> vector<32x32xf32>
    %cst_174 = arith.constant dense<0.000000e+00> : vector<32x32xf32>
    %424 = tpu.matmul %20, %421, %cst_174 {dimension_numbers = #tpu.dot_dimension_numbers<[1], [0], [0], [1], [0, 0, 1, 1], [], []>} : vector<32x16xbf16>, vector<16x32xbf16>, vector<32x32xf32> -> vector<32x32xf32>
    %cst_175 = arith.constant dense<0.000000e+00> : vector<32x32xf32>
    %425 = tpu.matmul %27, %422, %cst_175 {dimension_numbers = #tpu.dot_dimension_numbers<[1], [0], [0], [1], [0, 0, 1, 1], [], []>} : vector<32x2xbf16>, vector<2x32xbf16>, vector<32x32xf32> -> vector<32x32xf32>
    %cst_176 = arith.constant dense<0.000000e+00> : vector<16x32xf32>
    %426 = tpu.matmul %34, %422, %cst_176 {dimension_numbers = #tpu.dot_dimension_numbers<[1], [0], [0], [1], [0, 0, 1, 1], [], []>} : vector<16x2xbf16>, vector<2x32xbf16>, vector<16x32xf32> -> vector<16x32xf32>
    %427 = tpu.concatenate %423, %424, %289, %425 in 1 : vector<32x32xf32>, vector<32x32xf32>, vector<32x32xf32>, vector<32x32xf32> -> vector<32x128xf32>
    %428 = arith.truncf %427 : vector<32x128xf32> to vector<32x128xbf16>
    %c0_177 = arith.constant 0 : index
    %c0_178 = arith.constant 0 : index
    %429 = vector.load %arg10[%c0_177, %c0_178] : memref<512x32xbf16, #tpu.memory_space<vmem>>, vector<128x32xbf16>
    %cst_179 = arith.constant dense<0.000000e+00> : vector<32x32xf32>
    %430 = tpu.matmul %428, %429, %cst_179 {dimension_numbers = #tpu.dot_dimension_numbers<[1], [0], [0], [1], [0, 0, 1, 1], [], []>} : vector<32x128xbf16>, vector<128x32xbf16>, vector<32x32xf32> -> vector<32x32xf32>
    %c32_180 = arith.constant 32 : index
    %c0_181 = arith.constant 0 : index
    %431 = vector.load %arg7[%c32_180, %c0_181] : memref<48x32xf32, #tpu.memory_space<vmem>>, vector<1x32xf32>
    %432 = vector.broadcast %431 : vector<1x32xf32> to vector<32x32xf32>
    %433 = arith.addf %430, %432 : vector<32x32xf32>
    %cst_182 = arith.constant 0.000000e+00 : f32
    %434 = vector.broadcast %cst_182 : f32 to vector<32x32xf32>
    %435 = arith.maximumf %433, %434 : vector<32x32xf32>
    %436 = arith.truncf %435 : vector<32x32xf32> to vector<32x32xbf16>
    %c128_183 = arith.constant 128 : index
    %c0_184 = arith.constant 0 : index
    %437 = vector.load %arg10[%c128_183, %c0_184] : memref<512x32xbf16, #tpu.memory_space<vmem>>, vector<32x32xbf16>
    %cst_185 = arith.constant dense<0.000000e+00> : vector<32x32xf32>
    %438 = tpu.matmul %436, %437, %cst_185 {dimension_numbers = #tpu.dot_dimension_numbers<[1], [0], [0], [1], [0, 0, 1, 1], [], []>} : vector<32x32xbf16>, vector<32x32xbf16>, vector<32x32xf32> -> vector<32x32xf32>
    %c33 = arith.constant 33 : index
    %c0_186 = arith.constant 0 : index
    %439 = vector.load %arg7[%c33, %c0_186] : memref<48x32xf32, #tpu.memory_space<vmem>>, vector<1x32xf32>
    %440 = vector.broadcast %439 : vector<1x32xf32> to vector<32x32xf32>
    %441 = arith.addf %438, %440 : vector<32x32xf32>
    %cst_187 = arith.constant dense<0.000000e+00> : vector<32xf32>
    %442 = vector.multi_reduction <add>, %441, %cst_187 [1] : vector<32x32xf32> to vector<32xf32>
    %443 = vector.shape_cast %442 : vector<32xf32> to vector<32x1xf32>
    %cst_188 = arith.constant 3.200000e+01 : f32
    %444 = vector.broadcast %cst_188 : f32 to vector<32x1xf32>
    %445 = arith.divf %443, %444 : vector<32x1xf32>
    %446 = arith.mulf %441, %441 : vector<32x32xf32>
    %cst_189 = arith.constant dense<0.000000e+00> : vector<32xf32>
    %447 = vector.multi_reduction <add>, %446, %cst_189 [1] : vector<32x32xf32> to vector<32xf32>
    %448 = vector.shape_cast %447 : vector<32xf32> to vector<32x1xf32>
    %cst_190 = arith.constant 3.200000e+01 : f32
    %449 = vector.broadcast %cst_190 : f32 to vector<32x1xf32>
    %450 = arith.divf %448, %449 : vector<32x1xf32>
    %451 = arith.mulf %445, %445 : vector<32x1xf32>
    %452 = arith.subf %450, %451 : vector<32x1xf32>
    %cst_191 = arith.constant 0.000000e+00 : f32
    %453 = vector.broadcast %cst_191 : f32 to vector<32x1xf32>
    %454 = arith.maximumf %452, %453 : vector<32x1xf32>
    %455 = vector.broadcast %445 : vector<32x1xf32> to vector<32x32xf32>
    %456 = arith.subf %441, %455 : vector<32x32xf32>
    %cst_192 = arith.constant 9.99999974E-6 : f32
    %457 = vector.broadcast %cst_192 : f32 to vector<32x1xf32>
    %458 = arith.addf %454, %457 : vector<32x1xf32>
    %459 = math.rsqrt %458 : vector<32x1xf32>
    %460 = vector.broadcast %459 : vector<32x1xf32> to vector<32x32xf32>
    %461 = arith.mulf %456, %460 : vector<32x32xf32>
    %c34 = arith.constant 34 : index
    %c0_193 = arith.constant 0 : index
    %462 = vector.load %arg7[%c34, %c0_193] : memref<48x32xf32, #tpu.memory_space<vmem>>, vector<1x32xf32>
    %463 = vector.broadcast %462 : vector<1x32xf32> to vector<32x32xf32>
    %464 = arith.mulf %461, %463 : vector<32x32xf32>
    %c35 = arith.constant 35 : index
    %c0_194 = arith.constant 0 : index
    %465 = vector.load %arg7[%c35, %c0_194] : memref<48x32xf32, #tpu.memory_space<vmem>>, vector<1x32xf32>
    %466 = vector.broadcast %465 : vector<1x32xf32> to vector<32x32xf32>
    %467 = arith.addf %464, %466 : vector<32x32xf32>
    %468 = tpu.concatenate %424, %467 in 1 : vector<32x32xf32>, vector<32x32xf32> -> vector<32x64xf32>
    %469 = arith.truncf %468 : vector<32x64xf32> to vector<32x64xbf16>
    %c160_195 = arith.constant 160 : index
    %c0_196 = arith.constant 0 : index
    %470 = vector.load %arg10[%c160_195, %c0_196] : memref<512x32xbf16, #tpu.memory_space<vmem>>, vector<64x32xbf16>
    %cst_197 = arith.constant dense<0.000000e+00> : vector<32x32xf32>
    %471 = tpu.matmul %469, %470, %cst_197 {dimension_numbers = #tpu.dot_dimension_numbers<[1], [0], [0], [1], [0, 0, 1, 1], [], []>} : vector<32x64xbf16>, vector<64x32xbf16>, vector<32x32xf32> -> vector<32x32xf32>
    %c36 = arith.constant 36 : index
    %c0_198 = arith.constant 0 : index
    %472 = vector.load %arg7[%c36, %c0_198] : memref<48x32xf32, #tpu.memory_space<vmem>>, vector<1x32xf32>
    %473 = vector.broadcast %472 : vector<1x32xf32> to vector<32x32xf32>
    %474 = arith.addf %471, %473 : vector<32x32xf32>
    %cst_199 = arith.constant 0.000000e+00 : f32
    %475 = vector.broadcast %cst_199 : f32 to vector<32x32xf32>
    %476 = arith.maximumf %474, %475 : vector<32x32xf32>
    %477 = arith.truncf %476 : vector<32x32xf32> to vector<32x32xbf16>
    %c224_200 = arith.constant 224 : index
    %c0_201 = arith.constant 0 : index
    %478 = vector.load %arg10[%c224_200, %c0_201] : memref<512x32xbf16, #tpu.memory_space<vmem>>, vector<32x32xbf16>
    %cst_202 = arith.constant dense<0.000000e+00> : vector<32x32xf32>
    %479 = tpu.matmul %477, %478, %cst_202 {dimension_numbers = #tpu.dot_dimension_numbers<[1], [0], [0], [1], [0, 0, 1, 1], [], []>} : vector<32x32xbf16>, vector<32x32xbf16>, vector<32x32xf32> -> vector<32x32xf32>
    %c37 = arith.constant 37 : index
    %c0_203 = arith.constant 0 : index
    %480 = vector.load %arg7[%c37, %c0_203] : memref<48x32xf32, #tpu.memory_space<vmem>>, vector<1x32xf32>
    %481 = vector.broadcast %480 : vector<1x32xf32> to vector<32x32xf32>
    %482 = arith.addf %479, %481 : vector<32x32xf32>
    %cst_204 = arith.constant dense<0.000000e+00> : vector<32xf32>
    %483 = vector.multi_reduction <add>, %482, %cst_204 [1] : vector<32x32xf32> to vector<32xf32>
    %484 = vector.shape_cast %483 : vector<32xf32> to vector<32x1xf32>
    %cst_205 = arith.constant 3.200000e+01 : f32
    %485 = vector.broadcast %cst_205 : f32 to vector<32x1xf32>
    %486 = arith.divf %484, %485 : vector<32x1xf32>
    %487 = arith.mulf %482, %482 : vector<32x32xf32>
    %cst_206 = arith.constant dense<0.000000e+00> : vector<32xf32>
    %488 = vector.multi_reduction <add>, %487, %cst_206 [1] : vector<32x32xf32> to vector<32xf32>
    %489 = vector.shape_cast %488 : vector<32xf32> to vector<32x1xf32>
    %cst_207 = arith.constant 3.200000e+01 : f32
    %490 = vector.broadcast %cst_207 : f32 to vector<32x1xf32>
    %491 = arith.divf %489, %490 : vector<32x1xf32>
    %492 = arith.mulf %486, %486 : vector<32x1xf32>
    %493 = arith.subf %491, %492 : vector<32x1xf32>
    %cst_208 = arith.constant 0.000000e+00 : f32
    %494 = vector.broadcast %cst_208 : f32 to vector<32x1xf32>
    %495 = arith.maximumf %493, %494 : vector<32x1xf32>
    %496 = vector.broadcast %486 : vector<32x1xf32> to vector<32x32xf32>
    %497 = arith.subf %482, %496 : vector<32x32xf32>
    %cst_209 = arith.constant 9.99999974E-6 : f32
    %498 = vector.broadcast %cst_209 : f32 to vector<32x1xf32>
    %499 = arith.addf %495, %498 : vector<32x1xf32>
    %500 = math.rsqrt %499 : vector<32x1xf32>
    %501 = vector.broadcast %500 : vector<32x1xf32> to vector<32x32xf32>
    %502 = arith.mulf %497, %501 : vector<32x32xf32>
    %c38 = arith.constant 38 : index
    %c0_210 = arith.constant 0 : index
    %503 = vector.load %arg7[%c38, %c0_210] : memref<48x32xf32, #tpu.memory_space<vmem>>, vector<1x32xf32>
    %504 = vector.broadcast %503 : vector<1x32xf32> to vector<32x32xf32>
    %505 = arith.mulf %502, %504 : vector<32x32xf32>
    %c39 = arith.constant 39 : index
    %c0_211 = arith.constant 0 : index
    %506 = vector.load %arg7[%c39, %c0_211] : memref<48x32xf32, #tpu.memory_space<vmem>>, vector<1x32xf32>
    %507 = vector.broadcast %506 : vector<1x32xf32> to vector<32x32xf32>
    %508 = arith.addf %505, %507 : vector<32x32xf32>
    %509 = arith.truncf %508 : vector<32x32xf32> to vector<32x32xbf16>
    %cst_212 = arith.constant dense<0.000000e+00> : vector<16x32xf32>
    %510 = tpu.matmul %41, %509, %cst_212 {dimension_numbers = #tpu.dot_dimension_numbers<[1], [0], [0], [1], [0, 0, 1, 1], [], []>} : vector<16x32xbf16>, vector<32x32xbf16>, vector<16x32xf32> -> vector<16x32xf32>
    %511 = vector.broadcast %61 : vector<16x1xf32> to vector<16x32xf32>
    %512 = arith.mulf %510, %511 : vector<16x32xf32>
    %513 = tpu.concatenate %375, %512, %426 in 1 : vector<16x32xf32>, vector<16x32xf32>, vector<16x32xf32> -> vector<16x96xf32>
    %514 = arith.truncf %513 : vector<16x96xf32> to vector<16x96xbf16>
    %c256_213 = arith.constant 256 : index
    %c0_214 = arith.constant 0 : index
    %515 = vector.load %arg10[%c256_213, %c0_214] : memref<512x32xbf16, #tpu.memory_space<vmem>>, vector<96x32xbf16>
    %cst_215 = arith.constant dense<0.000000e+00> : vector<16x32xf32>
    %516 = tpu.matmul %514, %515, %cst_215 {dimension_numbers = #tpu.dot_dimension_numbers<[1], [0], [0], [1], [0, 0, 1, 1], [], []>} : vector<16x96xbf16>, vector<96x32xbf16>, vector<16x32xf32> -> vector<16x32xf32>
    %c40 = arith.constant 40 : index
    %c0_216 = arith.constant 0 : index
    %517 = vector.load %arg7[%c40, %c0_216] : memref<48x32xf32, #tpu.memory_space<vmem>>, vector<1x32xf32>
    %518 = vector.broadcast %517 : vector<1x32xf32> to vector<16x32xf32>
    %519 = arith.addf %516, %518 : vector<16x32xf32>
    %cst_217 = arith.constant 0.000000e+00 : f32
    %520 = vector.broadcast %cst_217 : f32 to vector<16x32xf32>
    %521 = arith.maximumf %519, %520 : vector<16x32xf32>
    %522 = arith.truncf %521 : vector<16x32xf32> to vector<16x32xbf16>
    %c352_218 = arith.constant 352 : index
    %c0_219 = arith.constant 0 : index
    %523 = vector.load %arg10[%c352_218, %c0_219] : memref<512x32xbf16, #tpu.memory_space<vmem>>, vector<32x32xbf16>
    %cst_220 = arith.constant dense<0.000000e+00> : vector<16x32xf32>
    %524 = tpu.matmul %522, %523, %cst_220 {dimension_numbers = #tpu.dot_dimension_numbers<[1], [0], [0], [1], [0, 0, 1, 1], [], []>} : vector<16x32xbf16>, vector<32x32xbf16>, vector<16x32xf32> -> vector<16x32xf32>
    %c41 = arith.constant 41 : index
    %c0_221 = arith.constant 0 : index
    %525 = vector.load %arg7[%c41, %c0_221] : memref<48x32xf32, #tpu.memory_space<vmem>>, vector<1x32xf32>
    %526 = vector.broadcast %525 : vector<1x32xf32> to vector<16x32xf32>
    %527 = arith.addf %524, %526 : vector<16x32xf32>
    %cst_222 = arith.constant dense<0.000000e+00> : vector<16xf32>
    %528 = vector.multi_reduction <add>, %527, %cst_222 [1] : vector<16x32xf32> to vector<16xf32>
    %529 = vector.shape_cast %528 : vector<16xf32> to vector<16x1xf32>
    %cst_223 = arith.constant 3.200000e+01 : f32
    %530 = vector.broadcast %cst_223 : f32 to vector<16x1xf32>
    %531 = arith.divf %529, %530 : vector<16x1xf32>
    %532 = arith.mulf %527, %527 : vector<16x32xf32>
    %cst_224 = arith.constant dense<0.000000e+00> : vector<16xf32>
    %533 = vector.multi_reduction <add>, %532, %cst_224 [1] : vector<16x32xf32> to vector<16xf32>
    %534 = vector.shape_cast %533 : vector<16xf32> to vector<16x1xf32>
    %cst_225 = arith.constant 3.200000e+01 : f32
    %535 = vector.broadcast %cst_225 : f32 to vector<16x1xf32>
    %536 = arith.divf %534, %535 : vector<16x1xf32>
    %537 = arith.mulf %531, %531 : vector<16x1xf32>
    %538 = arith.subf %536, %537 : vector<16x1xf32>
    %cst_226 = arith.constant 0.000000e+00 : f32
    %539 = vector.broadcast %cst_226 : f32 to vector<16x1xf32>
    %540 = arith.maximumf %538, %539 : vector<16x1xf32>
    %541 = vector.broadcast %531 : vector<16x1xf32> to vector<16x32xf32>
    %542 = arith.subf %527, %541 : vector<16x32xf32>
    %cst_227 = arith.constant 9.99999974E-6 : f32
    %543 = vector.broadcast %cst_227 : f32 to vector<16x1xf32>
    %544 = arith.addf %540, %543 : vector<16x1xf32>
    %545 = math.rsqrt %544 : vector<16x1xf32>
    %546 = vector.broadcast %545 : vector<16x1xf32> to vector<16x32xf32>
    %547 = arith.mulf %542, %546 : vector<16x32xf32>
    %c42 = arith.constant 42 : index
    %c0_228 = arith.constant 0 : index
    %548 = vector.load %arg7[%c42, %c0_228] : memref<48x32xf32, #tpu.memory_space<vmem>>, vector<1x32xf32>
    %549 = vector.broadcast %548 : vector<1x32xf32> to vector<16x32xf32>
    %550 = arith.mulf %547, %549 : vector<16x32xf32>
    %c43 = arith.constant 43 : index
    %c0_229 = arith.constant 0 : index
    %551 = vector.load %arg7[%c43, %c0_229] : memref<48x32xf32, #tpu.memory_space<vmem>>, vector<1x32xf32>
    %552 = vector.broadcast %551 : vector<1x32xf32> to vector<16x32xf32>
    %553 = arith.addf %550, %552 : vector<16x32xf32>
    %554 = arith.truncf %553 : vector<16x32xf32> to vector<16x32xbf16>
    %cst_230 = arith.constant dense<0.000000e+00> : vector<2x32xf32>
    %555 = tpu.matmul %48, %554, %cst_230 {dimension_numbers = #tpu.dot_dimension_numbers<[1], [0], [0], [1], [0, 0, 1, 1], [], []>} : vector<2x16xbf16>, vector<16x32xbf16>, vector<2x32xf32> -> vector<2x32xf32>
    %556 = arith.truncf %467 : vector<32x32xf32> to vector<32x32xbf16>
    %cst_231 = arith.constant dense<0.000000e+00> : vector<2x32xf32>
    %557 = tpu.matmul %55, %556, %cst_231 {dimension_numbers = #tpu.dot_dimension_numbers<[1], [0], [0], [1], [0, 0, 1, 1], [], []>} : vector<2x32xbf16>, vector<32x32xbf16>, vector<2x32xf32> -> vector<2x32xf32>
    %558 = tpu.concatenate %420, %555, %557 in 1 : vector<2x32xf32>, vector<2x32xf32>, vector<2x32xf32> -> vector<2x96xf32>
    %559 = arith.truncf %558 : vector<2x96xf32> to vector<2x96xbf16>
    %c384_232 = arith.constant 384 : index
    %c0_233 = arith.constant 0 : index
    %560 = vector.load %arg10[%c384_232, %c0_233] : memref<512x32xbf16, #tpu.memory_space<vmem>>, vector<96x32xbf16>
    %cst_234 = arith.constant dense<0.000000e+00> : vector<2x32xf32>
    %561 = tpu.matmul %559, %560, %cst_234 {dimension_numbers = #tpu.dot_dimension_numbers<[1], [0], [0], [1], [0, 0, 1, 1], [], []>} : vector<2x96xbf16>, vector<96x32xbf16>, vector<2x32xf32> -> vector<2x32xf32>
    %c44 = arith.constant 44 : index
    %c0_235 = arith.constant 0 : index
    %562 = vector.load %arg7[%c44, %c0_235] : memref<48x32xf32, #tpu.memory_space<vmem>>, vector<1x32xf32>
    %563 = vector.broadcast %562 : vector<1x32xf32> to vector<2x32xf32>
    %564 = arith.addf %561, %563 : vector<2x32xf32>
    %cst_236 = arith.constant 0.000000e+00 : f32
    %565 = vector.broadcast %cst_236 : f32 to vector<2x32xf32>
    %566 = arith.maximumf %564, %565 : vector<2x32xf32>
    %567 = arith.truncf %566 : vector<2x32xf32> to vector<2x32xbf16>
    %c480_237 = arith.constant 480 : index
    %c0_238 = arith.constant 0 : index
    %568 = vector.load %arg10[%c480_237, %c0_238] : memref<512x32xbf16, #tpu.memory_space<vmem>>, vector<32x32xbf16>
    %cst_239 = arith.constant dense<0.000000e+00> : vector<2x32xf32>
    %569 = tpu.matmul %567, %568, %cst_239 {dimension_numbers = #tpu.dot_dimension_numbers<[1], [0], [0], [1], [0, 0, 1, 1], [], []>} : vector<2x32xbf16>, vector<32x32xbf16>, vector<2x32xf32> -> vector<2x32xf32>
    %c45 = arith.constant 45 : index
    %c0_240 = arith.constant 0 : index
    %570 = vector.load %arg7[%c45, %c0_240] : memref<48x32xf32, #tpu.memory_space<vmem>>, vector<1x32xf32>
    %571 = vector.broadcast %570 : vector<1x32xf32> to vector<2x32xf32>
    %572 = arith.addf %569, %571 : vector<2x32xf32>
    %cst_241 = arith.constant dense<0.000000e+00> : vector<2xf32>
    %573 = vector.multi_reduction <add>, %572, %cst_241 [1] : vector<2x32xf32> to vector<2xf32>
    %574 = vector.shape_cast %573 : vector<2xf32> to vector<2x1xf32>
    %cst_242 = arith.constant 3.200000e+01 : f32
    %575 = vector.broadcast %cst_242 : f32 to vector<2x1xf32>
    %576 = arith.divf %574, %575 : vector<2x1xf32>
    %577 = arith.mulf %572, %572 : vector<2x32xf32>
    %cst_243 = arith.constant dense<0.000000e+00> : vector<2xf32>
    %578 = vector.multi_reduction <add>, %577, %cst_243 [1] : vector<2x32xf32> to vector<2xf32>
    %579 = vector.shape_cast %578 : vector<2xf32> to vector<2x1xf32>
    %cst_244 = arith.constant 3.200000e+01 : f32
    %580 = vector.broadcast %cst_244 : f32 to vector<2x1xf32>
    %581 = arith.divf %579, %580 : vector<2x1xf32>
    %582 = arith.mulf %576, %576 : vector<2x1xf32>
    %583 = arith.subf %581, %582 : vector<2x1xf32>
    %cst_245 = arith.constant 0.000000e+00 : f32
    %584 = vector.broadcast %cst_245 : f32 to vector<2x1xf32>
    %585 = arith.maximumf %583, %584 : vector<2x1xf32>
    %586 = vector.broadcast %576 : vector<2x1xf32> to vector<2x32xf32>
    %587 = arith.subf %572, %586 : vector<2x32xf32>
    %cst_246 = arith.constant 9.99999974E-6 : f32
    %588 = vector.broadcast %cst_246 : f32 to vector<2x1xf32>
    %589 = arith.addf %585, %588 : vector<2x1xf32>
    %590 = math.rsqrt %589 : vector<2x1xf32>
    %591 = vector.broadcast %590 : vector<2x1xf32> to vector<2x32xf32>
    %592 = arith.mulf %587, %591 : vector<2x32xf32>
    %c46 = arith.constant 46 : index
    %c0_247 = arith.constant 0 : index
    %593 = vector.load %arg7[%c46, %c0_247] : memref<48x32xf32, #tpu.memory_space<vmem>>, vector<1x32xf32>
    %594 = vector.broadcast %593 : vector<1x32xf32> to vector<2x32xf32>
    %595 = arith.mulf %592, %594 : vector<2x32xf32>
    %c47 = arith.constant 47 : index
    %c0_248 = arith.constant 0 : index
    %596 = vector.load %arg7[%c47, %c0_248] : memref<48x32xf32, #tpu.memory_space<vmem>>, vector<1x32xf32>
    %597 = vector.broadcast %596 : vector<1x32xf32> to vector<2x32xf32>
    %598 = arith.addf %595, %597 : vector<2x32xf32>
    %c0_249 = arith.constant 0 : index
    %c0_250 = arith.constant 0 : index
    %599 = vector.load %arg11[%c0_249, %c0_250] : memref<16x32xf32, #tpu.memory_space<vmem>>, vector<16x32xf32>
    tpu.vector_store %arg11[%c0_249, %c0_250], %553 {strides = array<i32>} : memref<16x32xf32, #tpu.memory_space<vmem>>, vector<16x32xf32>,
    %c0_251 = arith.constant 0 : index
    %c0_252 = arith.constant 0 : index
    %600 = vector.load %arg12[%c0_251, %c0_252] : memref<32x32xf32, #tpu.memory_space<vmem>>, vector<32x32xf32>
    tpu.vector_store %arg12[%c0_251, %c0_252], %467 {strides = array<i32>} : memref<32x32xf32, #tpu.memory_space<vmem>>, vector<32x32xf32>,
    %c0_253 = arith.constant 0 : index
    %c0_254 = arith.constant 0 : index
    %601 = vector.load %arg13[%c0_253, %c0_254] : memref<2x32xf32, #tpu.memory_space<vmem>>, vector<2x32xf32>
    tpu.vector_store %arg13[%c0_253, %c0_254], %598 {strides = array<i32>} : memref<2x32xf32, #tpu.memory_space<vmem>>, vector<2x32xf32>,
    return
  }
}

</mosaic_0001>

<llo_original>
// kernel: graph_network_ltp_forward.1
$region0: #{graph_network_ltp_forward.1}
  #allocation0 [shape = 'u32[]', space=smem, size = 0x4, offset = 0x4, fixed_abs, tag = 'smem constant byte address 0x4 - core index']
  #allocation1 [shape = 'u32[144,128]{1,0:T(1,128)}', space=vmem, size = 0x12000, scoped, tag = 'internal scratch']
  %s0 = inlined_call_operand.vmem [shape: s32[32,3], index: 0, kind: input, shape index: {}]
  %s1 = inlined_call_operand.vmem [shape: s32[3,32], index: 1, kind: input, shape index: {}]
  %s2 = inlined_call_operand.vmem [shape: s32[16,1], index: 2, kind: input, shape index: {}]
  %s3 = inlined_call_operand.vmem [shape: s32[1,16], index: 3, kind: input, shape index: {}]
  %s4 = inlined_call_operand.vmem [shape: f32[16,6], index: 4, kind: input, shape index: {}]
  %s5 = inlined_call_operand.vmem [shape: f32[32,5], index: 5, kind: input, shape index: {}]
  %s6 = inlined_call_operand.vmem [shape: f32[2,4], index: 6, kind: input, shape index: {}]
  %s7 = inlined_call_operand.vmem [shape: f32[48,32], index: 7, kind: input, shape index: {}]
  %s8 = inlined_call_operand.vmem [shape: bf16[336,32], index: 8, kind: input, shape index: {}]
  %s9 = inlined_call_operand.vmem [shape: bf16[512,32], index: 9, kind: input, shape index: {}]
  %s10 = inlined_call_operand.vmem [shape: bf16[512,32], index: 10, kind: input, shape index: {}]
  %s11 = inlined_call_operand.hbm [shape: f32[16,32], index: 11, kind: output, shape index: {0}]
  %s12 = inlined_call_operand.hbm [shape: f32[32,32], index: 12, kind: output, shape index: {1}]
  %s13 = inlined_call_operand.hbm [shape: f32[2,32], index: 13, kind: output, shape index: {2}]
  %14 = xla_tuple %s11, %s12, %s13
  %s15 = sld [smem:[#allocation0]]
  $region70: #{graph_network_ltp_forward.1} parent=0
    _
  %s17 = ssub.s32 1, %s15
  %s18 = scalar_select 0, %s17, %s15
  $region1: #{graph_network_ltp_forward.1} parent=0
    #allocation2 [shape = 'u8[8192]{0}', space=vmem, size = 0x2000, scoped, tag = 'output window, operand 0, single buffered']
    #allocation3 [shape = 's32[1]{0}', space=sflag, size = 0x4, scoped, tag = 'scoped memory for graph_network_ltp_forward.1']
    #allocation4 [shape = 'u8[16384]{0}', space=vmem, size = 0x4000, scoped, tag = 'output window, operand 1, single buffered']
    #allocation5 [shape = 's32[1]{0}', space=sflag, size = 0x4, scoped, tag = 'scoped memory for graph_network_ltp_forward.1']
    #allocation6 [shape = 'u8[1024]{0}', space=vmem, size = 0x400, scoped, tag = 'output window, operand 2, single buffered']
    %19 = vsyncpa [#allocation3], 0
    %20 = vsyncpa [#allocation5], 0
    // Predicated region
    $region2: #{graph_network_ltp_forward.1} parent=1 // pred_check
      _
    $region3: #{graph_network_ltp_forward.1} parent=1 // pred_check_branch
      %22 = sbr.rel (0) target = $region5
    $region4: #{graph_network_ltp_forward.1} parent=1 // pred_region
      _
    $region5: #{graph_network_ltp_forward.1} parent=1 // pred_fallthru
      _
    // Predicated region
    $region6: #{graph_network_ltp_forward.1} parent=1 // pred_check
      _
    $region7: #{graph_network_ltp_forward.1} parent=1 // pred_check_branch
      %24 = sbr.rel (0) target = $region9
    $region8: #{graph_network_ltp_forward.1} parent=1 // pred_region
      _
    $region9: #{graph_network_ltp_forward.1} parent=1 // pred_fallthru
      _
    // Predicated region
    $region10: #{graph_network_ltp_forward.1} parent=1 // pred_check
      _
    $region11: #{graph_network_ltp_forward.1} parent=1 // pred_check_branch
      %26 = sbr.rel (0) target = $region13
    $region12: #{graph_network_ltp_forward.1} parent=1 // pred_region
      _
    $region13: #{graph_network_ltp_forward.1} parent=1 // pred_fallthru
      _
    // Predicated region
    $region14: #{graph_network_ltp_forward.1} parent=1 // pred_check
      _
    $region15: #{graph_network_ltp_forward.1} parent=1 // pred_check_branch
      %28 = sbr.rel (0) target = $region17
    $region16: #{graph_network_ltp_forward.1} parent=1 // pred_region
      _
    $region17: #{graph_network_ltp_forward.1} parent=1 // pred_fallthru
      _
    // Predicated region
    $region18: #{graph_network_ltp_forward.1} parent=1 // pred_check
      _
    $region19: #{graph_network_ltp_forward.1} parent=1 // pred_check_branch
      %30 = sbr.rel (0) target = $region21
    $region20: #{graph_network_ltp_forward.1} parent=1 // pred_region
      _
    $region21: #{graph_network_ltp_forward.1} parent=1 // pred_fallthru
      _
    // Predicated region
    $region22: #{graph_network_ltp_forward.1} parent=1 // pred_check
      _
    $region23: #{graph_network_ltp_forward.1} parent=1 // pred_check_branch
      %32 = sbr.rel (0) target = $region25
    $region24: #{graph_network_ltp_forward.1} parent=1 // pred_region
      _
    $region25: #{graph_network_ltp_forward.1} parent=1 // pred_fallthru
      _
    // Predicated region
    $region26: #{graph_network_ltp_forward.1} parent=1 // pred_check
      _
    $region27: #{graph_network_ltp_forward.1} parent=1 // pred_check_branch
      %34 = sbr.rel (0) target = $region29
    $region28: #{graph_network_ltp_forward.1} parent=1 // pred_region
      _
    $region29: #{graph_network_ltp_forward.1} parent=1 // pred_fallthru
      _
    // Predicated region
    $region30: #{graph_network_ltp_forward.1} parent=1 // pred_check
      _
    $region31: #{graph_network_ltp_forward.1} parent=1 // pred_check_branch
      %36 = sbr.rel (0) target = $region33
    $region32: #{graph_network_ltp_forward.1} parent=1 // pred_region
      _
    $region33: #{graph_network_ltp_forward.1} parent=1 // pred_fallthru
      _
    // Predicated region
    $region34: #{graph_network_ltp_forward.1} parent=1 // pred_check
      _
    $region35: #{graph_network_ltp_forward.1} parent=1 // pred_check_branch
      %38 = sbr.rel (0) target = $region37
    $region36: #{graph_network_ltp_forward.1} parent=1 // pred_region
      _
    $region37: #{graph_network_ltp_forward.1} parent=1 // pred_fallthru
      _
    // Predicated region
    $region38: #{graph_network_ltp_forward.1} parent=1 // pred_check
      _
    $region39: #{graph_network_ltp_forward.1} parent=1 // pred_check_branch
      %40 = sbr.rel (0) target = $region41
    $region40: #{graph_network_ltp_forward.1} parent=1 // pred_region
      _
    $region41: #{graph_network_ltp_forward.1} parent=1 // pred_fallthru
      _
    // Predicated region
    $region42: #{graph_network_ltp_forward.1} parent=1 // pred_check
      _
    $region43: #{graph_network_ltp_forward.1} parent=1 // pred_check_branch
      %42 = sbr.rel (0) target = $region45
    $region44: #{graph_network_ltp_forward.1} parent=1 // pred_region
      _
    $region45: #{graph_network_ltp_forward.1} parent=1 // pred_fallthru
      _
    %v44 = vld [vmem:[%s0] sm:$0xff]
    %v45 = vld [vmem:[%s0 + $0x8] sm:$0xff]
    %v46 = vld [vmem:[%s0 + $0x10] sm:$0xff]
    %v47 = vld [vmem:[%s0 + $0x18] sm:$0xff]
    %v48 = vld [vmem:[%s1] sm:$0x1]
    %v49 = vld [vmem:[%s1 + $0x2] sm:$0x1]
    %v50 = vld [vmem:[%s2] sm:$0xff]
    %v51 = vld [vmem:[%s2 + $0x8] sm:$0xff]
    %v52 = vld [vmem:[%s3] sm:$0x1]
    %v53 = vlaneseq
    %v54 = vand.u32 %v53, 127
    %55 = vset.pattern.permute.xlu0 0
    %56 = vperm.xlu0 %55, %v44
    %v57 = vpop.permute.xlu0 %56
    %58 = vset.pattern.permute.xlu0 0
    %59 = vperm.xlu0 %58, %v45
    %v60 = vpop.permute.xlu0 %59
    %61 = vset.pattern.permute.xlu0 0
    %62 = vperm.xlu0 %61, %v46
    %v63 = vpop.permute.xlu0 %62
    %64 = vset.pattern.permute.xlu0 0
    %65 = vperm.xlu0 %64, %v47
    %v66 = vpop.permute.xlu0 %65
    %vm67 = vcmp.eq.s32.totalorder %v54, %v57
    %vm68 = vcmp.eq.s32.totalorder %v54, %v60
    %vm69 = vcmp.eq.s32.totalorder %v54, %v63
    %vm70 = vcmp.eq.s32.totalorder %v54, %v66
    %v71 = vsel %vm67, 1.0, 0.0
    %v72 = vsel %vm68, 1.0, 0.0
    %v73 = vsel %vm69, 1.0, 0.0
    %v74 = vsel %vm70, 1.0, 0.0
    %v75 = vpack.c.bf16 %v72, %v71
    %v76 = vpack.c.bf16 %v74, %v73
    %77 = vset.pattern.permute.xlu0 1
    %78 = vperm.xlu0 %77, %v44
    %v79 = vpop.permute.xlu0 %78
    %80 = vset.pattern.permute.xlu0 1
    %81 = vperm.xlu0 %80, %v45
    %v82 = vpop.permute.xlu0 %81
    %83 = vset.pattern.permute.xlu0 1
    %84 = vperm.xlu0 %83, %v46
    %v85 = vpop.permute.xlu0 %84
    %86 = vset.pattern.permute.xlu0 1
    %87 = vperm.xlu0 %86, %v47
    %v88 = vpop.permute.xlu0 %87
    %vm89 = vcmp.eq.s32.totalorder %v54, %v79
    %vm90 = vcmp.eq.s32.totalorder %v54, %v82
    %vm91 = vcmp.eq.s32.totalorder %v54, %v85
    %vm92 = vcmp.eq.s32.totalorder %v54, %v88
    %v93 = vsel %vm89, 1.0, 0.0
    %v94 = vsel %vm90, 1.0, 0.0
    %v95 = vsel %vm91, 1.0, 0.0
    %v96 = vsel %vm92, 1.0, 0.0
    %v97 = vpack.c.bf16 %v94, %v93
    %v98 = vpack.c.bf16 %v96, %v95
    %99 = vset.pattern.permute.xlu0 2
    %100 = vperm.xlu0 %99, %v44
    %v101 = vpop.permute.xlu0 %100
    %102 = vset.pattern.permute.xlu0 2
    %103 = vperm.xlu0 %102, %v45
    %v104 = vpop.permute.xlu0 %103
    %105 = vset.pattern.permute.xlu0 2
    %106 = vperm.xlu0 %105, %v46
    %v107 = vpop.permute.xlu0 %106
    %108 = vset.pattern.permute.xlu0 2
    %109 = vperm.xlu0 %108, %v47
    %v110 = vpop.permute.xlu0 %109
    %vm111 = vcmp.eq.s32.totalorder %v54, %v101
    %vm112 = vcmp.eq.s32.totalorder %v54, %v104
    %vm113 = vcmp.eq.s32.totalorder %v54, %v107
    %vm114 = vcmp.eq.s32.totalorder %v54, %v110
    %v115 = vsel %vm111, 1.0, 0.0
    %v116 = vsel %vm112, 1.0, 0.0
    %v117 = vsel %vm113, 1.0, 0.0
    %v118 = vsel %vm114, 1.0, 0.0
    %v119 = vpack.c.bf16 %v116, %v115
    %v120 = vpack.c.bf16 %v118, %v117
    %121 = vset.pattern.permute.xlu0 0
    %122 = vperm.xlu0 %121, %v50
    %v123 = vpop.permute.xlu0 %122
    %124 = vset.pattern.permute.xlu0 0
    %125 = vperm.xlu0 %124, %v51
    %v126 = vpop.permute.xlu0 %125
    %vm127 = vcmp.eq.s32.totalorder %v54, %v123
    %vm128 = vcmp.eq.s32.totalorder %v54, %v126
    %v129 = vsel %vm127, 1.0, 0.0
    %v130 = vsel %vm128, 1.0, 0.0
    %v131 = vpack.c.bf16 %v130, %v129
    %v132 = vlaneseq
    %v133 = vshrl.u32 %v132, 7
    %v134 = vadd.s32 %v133, 8
    %v135 = vlaneseq
    %v136 = vshrl.u32 %v135, 7
    %v137 = vsub.s32 0, %v136
    %v138 = vrot.slane %v48, %v137
    %vm139 = vcmp.eq.s32.totalorder %v133, %v138
    %vm140 = vcmp.eq.s32.totalorder %v134, %v138
    %v141 = vsel %vm139, 1.0, 0.0
    %v142 = vsel %vm140, 1.0, 0.0
    %v143 = vpack.c.bf16 %v142, %v141
    %v144 = vlaneseq
    %v145 = vshrl.u32 %v144, 7
    %v146 = vsub.s32 0, %v145
    %v147 = vrot.slane %v52, %v146
    %vm148 = vcmp.eq.s32.totalorder %v133, %v147
    %v149 = vsel %vm148, 1.0, 0.0
    %v150 = vpack.c.bf16 %v149, %v149
    %v151 = vlaneseq
    %v152 = vshrl.u32 %v151, 7
    %v153 = vsub.s32 0, %v152
    %v154 = vrot.slane %v49, %v153
    %vm155 = vcmp.eq.s32.totalorder %v133, %v154
    %v156 = vsel %vm155, 1.0, 0.0
    %v157 = vpack.c.bf16 %v156, %v156
    %vm158 = vcmask 261120
    %v159 = vsel %vm158, %v141, 0.0
    %160 = vadd.xlane.f32.xlu0 %v159
    %v161 = vpop.xlane.xlu0 %160
    %v162 = vsel %vm158, %v142, 0.0
    %163 = vadd.xlane.f32.xlu0 %v162
    %v164 = vpop.xlane.xlu0 %163
    %v165 = vmax.f32 %v161, 1.0
    %v166 = vmax.f32 %v164, 1.0
    %v167 = vrcp.pop %v165
    %v168 = vmul.f32 1.0, %v167
    %v169 = vrcp.pop %v166
    %v170 = vmul.f32 1.0, %v169
    %v171 = vld [vmem:[%s4] sm:$0xff]
    %v172 = vld [vmem:[%s4 + $0x8] sm:$0xff]
    %v173 = vld [vmem:[%s5] sm:$0xff]
    %v174 = vld [vmem:[%s5 + $0x8] sm:$0xff]
    %v175 = vld [vmem:[%s5 + $0x10] sm:$0xff]
    %v176 = vld [vmem:[%s5 + $0x18] sm:$0xff]
    %v177 = vld [vmem:[%s6] sm:$0x3]
    %v178 = vpack.c.bf16 %v172, %v171
    %v179 = vpack.c.bf16 %v177, %v177
    %vm180 = vcmask 130048
    %v182 = vsel %vm180, %v75, 0
    %v185 = vsel %vm180, %v76, 0
    %187 = vmatprep.subr.bf16.mxu0 0
    %188 = vmatpush1.bf16.msra.mxu0 %v178
    %189 = vmatprep.subr.bf16.mxu0 0
    %190 = vmatpush1.bf16.msra.mxu0 0
    %191 = vmatprep.subr.bf16.mxu0 0
    %192 = vmatpush1.bf16.msra.mxu0 0
    %193 = vmatprep.subr.bf16.mxu0 0
    %194 = vmatpush1.bf16.msra.mxu0 0
    %195 = vmatprep.subr.bf16.mxu0 0
    %196 = vmatpush1.bf16.msra.mxu0 0
    %197 = vmatprep.subr.bf16.mxu0 0
    %198 = vmatpush1.bf16.msra.mxu0 0
    %199 = vmatprep.subr.bf16.mxu0 0
    %200 = vmatpush1.bf16.msra.mxu0 0
    %201 = vmatprep.subr.bf16.mxu0 0
    %202 = vmatpush1.bf16.msra.mxu0 0
    %203 = vmatprep.subr.bf16.mxu0 0
    %204 = vmatpush1.bf16.msra.mxu0 0
    %205 = vmatprep.subr.bf16.mxu0 0
    %206 = vmatpush1.bf16.msra.mxu0 0
    %207 = vmatprep.subr.bf16.mxu0 0
    %208 = vmatpush1.bf16.msra.mxu0 0
    %209 = vmatprep.subr.bf16.mxu0 0
    %210 = vmatpush1.bf16.msra.mxu0 0
    %211 = vmatprep.subr.bf16.mxu0 0
    %212 = vmatpush1.bf16.msra.mxu0 0
    %213 = vmatprep.subr.bf16.mxu0 0
    %214 = vmatpush1.bf16.msra.mxu0 0
    %215 = vmatprep.subr.bf16.mxu0 0
    %216 = vmatpush1.bf16.msra.mxu0 0
    %217 = vmatprep.subr.bf16.mxu0 0
    %218 = vmatpush1.bf16.msra.mxu0 0
    %219 = vmatprep.mubr.bf16.mxu0 0
    %220 = vmatmul.mubr.bf16.gmra.mrb[0].mxu0 %v182
    %v221 = vpop.f32.mrb[0].mxu0
    %v222 = vadd.f32 0.0, %v221
    %v223 = vpop.f32.mrb[0].mxu0
    %v224 = vpop.f32.mrb[0].mxu0
    %v225 = vadd.f32 0.0, %v224
    %v226 = vpop.f32.mrb[0].mxu0
    %227 = vmatprep.mubr.bf16.mxu0 0
    %228 = vmatmul.mubr.bf16.gmra.mrb[0].mxu0 %v185
    %v229 = vpop.f32.mrb[0].mxu0
    %v230 = vadd.f32 0.0, %v229
    %v231 = vpop.f32.mrb[0].mxu0
    %v232 = vpop.f32.mrb[0].mxu0
    %v233 = vadd.f32 0.0, %v232
    %v234 = vpop.f32.mrb[0].mxu0
    %235 = vdwg.mxu0
    %v237 = vsel %vm180, %v97, 0
    %v240 = vsel %vm180, %v98, 0
    %242 = vmatprep.subr.bf16.mxu0 0
    %243 = vmatpush1.bf16.msra.mxu0 %v178
    %244 = vmatprep.subr.bf16.mxu0 0
    %245 = vmatpush1.bf16.msra.mxu0 0
    %246 = vmatprep.subr.bf16.mxu0 0
    %247 = vmatpush1.bf16.msra.mxu0 0
    %248 = vmatprep.subr.bf16.mxu0 0
    %249 = vmatpush1.bf16.msra.mxu0 0
    %250 = vmatprep.subr.bf16.mxu0 0
    %251 = vmatpush1.bf16.msra.mxu0 0
    %252 = vmatprep.subr.bf16.mxu0 0
    %253 = vmatpush1.bf16.msra.mxu0 0
    %254 = vmatprep.subr.bf16.mxu0 0
    %255 = vmatpush1.bf16.msra.mxu0 0
    %256 = vmatprep.subr.bf16.mxu0 0
    %257 = vmatpush1.bf16.msra.mxu0 0
    %258 = vmatprep.subr.bf16.mxu0 0
    %259 = vmatpush1.bf16.msra.mxu0 0
    %260 = vmatprep.subr.bf16.mxu0 0
    %261 = vmatpush1.bf16.msra.mxu0 0
    %262 = vmatprep.subr.bf16.mxu0 0
    %263 = vmatpush1.bf16.msra.mxu0 0
    %264 = vmatprep.subr.bf16.mxu0 0
    %265 = vmatpush1.bf16.msra.mxu0 0
    %266 = vmatprep.subr.bf16.mxu0 0
    %267 = vmatpush1.bf16.msra.mxu0 0
    %268 = vmatprep.subr.bf16.mxu0 0
    %269 = vmatpush1.bf16.msra.mxu0 0
    %270 = vmatprep.subr.bf16.mxu0 0
    %271 = vmatpush1.bf16.msra.mxu0 0
    %272 = vmatprep.subr.bf16.mxu0 0
    %273 = vmatpush1.bf16.msra.mxu0 0
    %274 = vmatprep.mubr.bf16.mxu0 0
    %275 = vmatmul.mubr.bf16.gmra.mrb[0].mxu0 %v237
    %v276 = vpop.f32.mrb[0].mxu0
    %v277 = vadd.f32 0.0, %v276
    %v278 = vpop.f32.mrb[0].mxu0
    %v279 = vpop.f32.mrb[0].mxu0
    %v280 = vadd.f32 0.0, %v279
    %v281 = vpop.f32.mrb[0].mxu0
    %282 = vmatprep.mubr.bf16.mxu0 0
    %283 = vmatmul.mubr.bf16.gmra.mrb[0].mxu0 %v240
    %v284 = vpop.f32.mrb[0].mxu0
    %v285 = vadd.f32 0.0, %v284
    %v286 = vpop.f32.mrb[0].mxu0
    %v287 = vpop.f32.mrb[0].mxu0
    %v288 = vadd.f32 0.0, %v287
    %v289 = vpop.f32.mrb[0].mxu0
    %290 = vdwg.mxu0
    %vm291 = vcmask 15360
    %v293 = vsel %vm291, %v119, 0
    %v296 = vsel %vm291, %v120, 0
    %vm298 = vcmask 1040384
    %v300 = vsel %vm298, %v179, 0
    %302 = vmatprep.subr.bf16.mxu0 0
    %303 = vmatpush1.bf16.msra.mxu0 %v300
    %304 = vmatprep.subr.bf16.mxu0 0
    %305 = vmatpush1.bf16.msra.mxu0 0
    %306 = vmatprep.subr.bf16.mxu0 0
    %307 = vmatpush1.bf16.msra.mxu0 0
    %308 = vmatprep.subr.bf16.mxu0 0
    %309 = vmatpush1.bf16.msra.mxu0 0
    %310 = vmatprep.subr.bf16.mxu0 0
    %311 = vmatpush1.bf16.msra.mxu0 0
    %312 = vmatprep.subr.bf16.mxu0 0
    %313 = vmatpush1.bf16.msra.mxu0 0
    %314 = vmatprep.subr.bf16.mxu0 0
    %315 = vmatpush1.bf16.msra.mxu0 0
    %316 = vmatprep.subr.bf16.mxu0 0
    %317 = vmatpush1.bf16.msra.mxu0 0
    %318 = vmatprep.subr.bf16.mxu0 0
    %319 = vmatpush1.bf16.msra.mxu0 0
    %320 = vmatprep.subr.bf16.mxu0 0
    %321 = vmatpush1.bf16.msra.mxu0 0
    %322 = vmatprep.subr.bf16.mxu0 0
    %323 = vmatpush1.bf16.msra.mxu0 0
    %324 = vmatprep.subr.bf16.mxu0 0
    %325 = vmatpush1.bf16.msra.mxu0 0
    %326 = vmatprep.subr.bf16.mxu0 0
    %327 = vmatpush1.bf16.msra.mxu0 0
    %328 = vmatprep.subr.bf16.mxu0 0
    %329 = vmatpush1.bf16.msra.mxu0 0
    %330 = vmatprep.subr.bf16.mxu0 0
    %331 = vmatpush1.bf16.msra.mxu0 0
    %332 = vmatprep.subr.bf16.mxu0 0
    %333 = vmatpush1.bf16.msra.mxu0 0
    %334 = vmatprep.mubr.bf16.mxu0 0
    %335 = vmatmul.mubr.bf16.gmra.mrb[0].mxu0 %v293
    %v336 = vpop.f32.mrb[0].mxu0
    %v337 = vadd.f32 0.0, %v336
    %v338 = vpop.f32.mrb[0].mxu0
    %v339 = vpop.f32.mrb[0].mxu0
    %v340 = vadd.f32 0.0, %v339
    %v341 = vpop.f32.mrb[0].mxu0
    %342 = vmatprep.mubr.bf16.mxu0 0
    %343 = vmatmul.mubr.bf16.gmra.mrb[0].mxu0 %v296
    %v344 = vpop.f32.mrb[0].mxu0
    %v345 = vadd.f32 0.0, %v344
    %v346 = vpop.f32.mrb[0].mxu0
    %v347 = vpop.f32.mrb[0].mxu0
    %v348 = vadd.f32 0.0, %v347
    %v349 = vpop.f32.mrb[0].mxu0
    %350 = vdwg.mxu0
    %v352 = vsel %vm291, %v131, 0
    %354 = vmatprep.subr.bf16.mxu0 0
    %355 = vmatpush1.bf16.msra.mxu0 %v300
    %356 = vmatprep.subr.bf16.mxu0 0
    %357 = vmatpush1.bf16.msra.mxu0 0
    %358 = vmatprep.subr.bf16.mxu0 0
    %359 = vmatpush1.bf16.msra.mxu0 0
    %360 = vmatprep.subr.bf16.mxu0 0
    %361 = vmatpush1.bf16.msra.mxu0 0
    %362 = vmatprep.subr.bf16.mxu0 0
    %363 = vmatpush1.bf16.msra.mxu0 0
    %364 = vmatprep.subr.bf16.mxu0 0
    %365 = vmatpush1.bf16.msra.mxu0 0
    %366 = vmatprep.subr.bf16.mxu0 0
    %367 = vmatpush1.bf16.msra.mxu0 0
    %368 = vmatprep.subr.bf16.mxu0 0
    %369 = vmatpush1.bf16.msra.mxu0 0
    %370 = vmatprep.subr.bf16.mxu0 0
    %371 = vmatpush1.bf16.msra.mxu0 0
    %372 = vmatprep.subr.bf16.mxu0 0
    %373 = vmatpush1.bf16.msra.mxu0 0
    %374 = vmatprep.subr.bf16.mxu0 0
    %375 = vmatpush1.bf16.msra.mxu0 0
    %376 = vmatprep.subr.bf16.mxu0 0
    %377 = vmatpush1.bf16.msra.mxu0 0
    %378 = vmatprep.subr.bf16.mxu0 0
    %379 = vmatpush1.bf16.msra.mxu0 0
    %380 = vmatprep.subr.bf16.mxu0 0
    %381 = vmatpush1.bf16.msra.mxu0 0
    %382 = vmatprep.subr.bf16.mxu0 0
    %383 = vmatpush1.bf16.msra.mxu0 0
    %384 = vmatprep.subr.bf16.mxu0 0
    %385 = vmatpush1.bf16.msra.mxu0 0
    %386 = vmatprep.mubr.bf16.mxu0 0
    %387 = vmatmul.mubr.bf16.gmra.mrb[0].mxu0 %v352
    %v388 = vpop.f32.mrb[0].mxu0
    %v389 = vadd.f32 0.0, %v388
    %v390 = vpop.f32.mrb[0].mxu0
    %v391 = vpop.f32.mrb[0].mxu0
    %v392 = vadd.f32 0.0, %v391
    %v393 = vpop.f32.mrb[0].mxu0
    %394 = vdwg.mxu0
    %399 = vrot.lane.b32.xlu0 %v277, 6
    %v400 = vpop.permute.xlu0 %399
    %401 = vrot.lane.b32.xlu0 %v280, 6
    %v402 = vpop.permute.xlu0 %401
    %403 = vrot.lane.b32.xlu0 %v285, 6
    %v404 = vpop.permute.xlu0 %403
    %405 = vrot.lane.b32.xlu0 %v288, 6
    %v406 = vpop.permute.xlu0 %405
    %415 = vrot.lane.b32.xlu0 %v173, 12
    %v416 = vpop.permute.xlu0 %415
    %417 = vrot.lane.b32.xlu0 %v174, 12
    %v418 = vpop.permute.xlu0 %417
    %419 = vrot.lane.b32.xlu0 %v175, 12
    %v420 = vpop.permute.xlu0 %419
    %421 = vrot.lane.b32.xlu0 %v176, 12
    %v422 = vpop.permute.xlu0 %421
    %431 = vrot.lane.b32.xlu0 %v337, 17
    %v432 = vpop.permute.xlu0 %431
    %433 = vrot.lane.b32.xlu0 %v340, 17
    %v434 = vpop.permute.xlu0 %433
    %435 = vrot.lane.b32.xlu0 %v345, 17
    %v436 = vpop.permute.xlu0 %435
    %437 = vrot.lane.b32.xlu0 %v348, 17
    %v438 = vpop.permute.xlu0 %437
    %vm443 = vcmask 48128
    %v444 = vsel %vm443, %v222, %v400
    %v445 = vsel %vm443, %v225, %v402
    %v446 = vsel %vm443, %v230, %v404
    %v447 = vsel %vm443, %v233, %v406
    %vm448 = vcmask 97280
    %v449 = vsel %vm448, %v444, %v416
    %v450 = vsel %vm448, %v445, %v418
    %v451 = vsel %vm448, %v446, %v420
    %v452 = vsel %vm448, %v447, %v422
    %vm453 = vcmask 138240
    %v454 = vsel %vm453, %v449, %v432
    %v455 = vsel %vm453, %v450, %v434
    %v456 = vsel %vm453, %v451, %v436
    %v457 = vsel %vm453, %v452, %v438
    %v458 = vpack.c.bf16 %v455, %v454
    %v459 = vpack.c.bf16 %v457, %v456
    %v460 = vld [vmem:[%s8] sm:$0xf]
    %v461 = vld [vmem:[%s8 + $0x4] sm:$0xf]
    %v462 = vld [vmem:[%s8 + $0x8] sm:$0x7]
    %v463 = vld [vmem:[%s7] sm:$0x1]
    %v464 = vlaneseq
    %v465 = vshrl.u32 %v464, 7
    %v466 = vsub.s32 0, %v465
    %v467 = vrot.slane %v463, %v466
    %v471 = vunpack.c.l.b16 %v460
    %v472 = vunpack.c.l.b16 %v461
    %v473 = vunpack.c.l.b16 %v462
    %v474 = vpack.c.b16 %v472, %v471
    %v475 = vpack.c.b16 %v473, %v473
    %vm477 = vcmask 171008
    %v479 = vsel %vm477, %v458, 0
    %v482 = vsel %vm477, %v459, 0
    %vm484 = vcmask 1041408
    %vm485 = vcmask 1042432
    %v486 = vsel %vm484, 4294967295, 65535
    %v487 = vsel %vm485, %v486, 0
    %v489 = vand.u32 %v475, %v487
    %491 = vmatprep.subr.bf16.mxu0 0
    %492 = vmatpush1.bf16.msra.mxu0 %v474
    %493 = vmatprep.subr.bf16.mxu0 0
    %494 = vmatpush1.bf16.msra.mxu0 %v489
    %495 = vmatprep.subr.bf16.mxu0 0
    %496 = vmatpush1.bf16.msra.mxu0 0
    %497 = vmatprep.subr.bf16.mxu0 0
    %498 = vmatpush1.bf16.msra.mxu0 0
    %499 = vmatprep.subr.bf16.mxu0 0
    %500 = vmatpush1.bf16.msra.mxu0 0
    %501 = vmatprep.subr.bf16.mxu0 0
    %502 = vmatpush1.bf16.msra.mxu0 0
    %503 = vmatprep.subr.bf16.mxu0 0
    %504 = vmatpush1.bf16.msra.mxu0 0
    %505 = vmatprep.subr.bf16.mxu0 0
    %506 = vmatpush1.bf16.msra.mxu0 0
    %507 = vmatprep.subr.bf16.mxu0 0
    %508 = vmatpush1.bf16.msra.mxu0 0
    %509 = vmatprep.subr.bf16.mxu0 0
    %510 = vmatpush1.bf16.msra.mxu0 0
    %511 = vmatprep.subr.bf16.mxu0 0
    %512 = vmatpush1.bf16.msra.mxu0 0
    %513 = vmatprep.subr.bf16.mxu0 0
    %514 = vmatpush1.bf16.msra.mxu0 0
    %515 = vmatprep.subr.bf16.mxu0 0
    %516 = vmatpush1.bf16.msra.mxu0 0
    %517 = vmatprep.subr.bf16.mxu0 0
    %518 = vmatpush1.bf16.msra.mxu0 0
    %519 = vmatprep.subr.bf16.mxu0 0
    %520 = vmatpush1.bf16.msra.mxu0 0
    %521 = vmatprep.subr.bf16.mxu0 0
    %522 = vmatpush1.bf16.msra.mxu0 0
    %523 = vmatprep.mubr.bf16.mxu0 0
    %524 = vmatmul.mubr.bf16.gmra.mrb[0].mxu0 %v479
    %v525 = vpop.f32.mrb[0].mxu0
    %v526 = vadd.f32 %v467, %v525
    %v527 = vpop.f32.mrb[0].mxu0
    %v528 = vpop.f32.mrb[0].mxu0
    %v529 = vadd.f32 %v467, %v528
    %v530 = vpop.f32.mrb[0].mxu0
    %531 = vmatprep.mubr.bf16.mxu0 0
    %532 = vmatmul.mubr.bf16.gmra.mrb[0].mxu0 %v482
    %v533 = vpop.f32.mrb[0].mxu0
    %v534 = vadd.f32 %v467, %v533
    %v535 = vpop.f32.mrb[0].mxu0
    %v536 = vpop.f32.mrb[0].mxu0
    %v537 = vadd.f32 %v467, %v536
    %v538 = vpop.f32.mrb[0].mxu0
    %539 = vdwg.mxu0
    %v540 = vmax.f32 %v526, 0.0
    %v541 = vmax.f32 %v529, 0.0
    %v542 = vmax.f32 %v534, 0.0
    %v543 = vmax.f32 %v537, 0.0
    %v544 = vpack.c.bf16 %v541, %v540
    %v545 = vpack.c.bf16 %v543, %v542
    %v546 = vld [vmem:[%s8 + $0x10] sm:$0xf]
    %v547 = vld [vmem:[%s8 + $0x14] sm:$0xf]
    %v548 = vld [vmem:[%s8 + $0x18] sm:$0xf]
    %v549 = vld [vmem:[%s8 + $0x1c] sm:$0xf]
    %v550 = vld [vmem:[%s7 + $0x1] sm:$0x1]
    %v551 = vlaneseq
    %v552 = vshrl.u32 %v551, 7
    %v553 = vsub.s32 0, %v552
    %v554 = vrot.slane %v550, %v553
    %v559 = vunpack.c.l.b16 %v546
    %v560 = vunpack.c.l.b16 %v547
    %v561 = vunpack.c.l.b16 %v548
    %v562 = vunpack.c.l.b16 %v549
    %v563 = vpack.c.b16 %v560, %v559
    %v564 = vpack.c.b16 %v562, %v561
    %v568 = vsel %vm158, %v544, 0
    %v571 = vsel %vm158, %v545, 0
    %573 = vmatprep.subr.bf16.mxu0 0
    %574 = vmatpush1.bf16.msra.mxu0 %v563
    %575 = vmatprep.subr.bf16.mxu0 0
    %576 = vmatpush1.bf16.msra.mxu0 %v564
    %577 = vmatprep.subr.bf16.mxu0 0
    %578 = vmatpush1.bf16.msra.mxu0 0
    %579 = vmatprep.subr.bf16.mxu0 0
    %580 = vmatpush1.bf16.msra.mxu0 0
    %581 = vmatprep.subr.bf16.mxu0 0
    %582 = vmatpush1.bf16.msra.mxu0 0
    %583 = vmatprep.subr.bf16.mxu0 0
    %584 = vmatpush1.bf16.msra.mxu0 0
    %585 = vmatprep.subr.bf16.mxu0 0
    %586 = vmatpush1.bf16.msra.mxu0 0
    %587 = vmatprep.subr.bf16.mxu0 0
    %588 = vmatpush1.bf16.msra.mxu0 0
    %589 = vmatprep.subr.bf16.mxu0 0
    %590 = vmatpush1.bf16.msra.mxu0 0
    %591 = vmatprep.subr.bf16.mxu0 0
    %592 = vmatpush1.bf16.msra.mxu0 0
    %593 = vmatprep.subr.bf16.mxu0 0
    %594 = vmatpush1.bf16.msra.mxu0 0
    %595 = vmatprep.subr.bf16.mxu0 0
    %596 = vmatpush1.bf16.msra.mxu0 0
    %597 = vmatprep.subr.bf16.mxu0 0
    %598 = vmatpush1.bf16.msra.mxu0 0
    %599 = vmatprep.subr.bf16.mxu0 0
    %600 = vmatpush1.bf16.msra.mxu0 0
    %601 = vmatprep.subr.bf16.mxu0 0
    %602 = vmatpush1.bf16.msra.mxu0 0
    %603 = vmatprep.subr.bf16.mxu0 0
    %604 = vmatpush1.bf16.msra.mxu0 0
    %605 = vmatprep.mubr.bf16.mxu0 0
    %606 = vmatmul.mubr.bf16.gmra.mrb[0].mxu0 %v568
    %v607 = vpop.f32.mrb[0].mxu0
    %v608 = vadd.f32 %v554, %v607
    %v609 = vpop.f32.mrb[0].mxu0
    %v610 = vpop.f32.mrb[0].mxu0
    %v611 = vadd.f32 %v554, %v610
    %v612 = vpop.f32.mrb[0].mxu0
    %613 = vmatprep.mubr.bf16.mxu0 0
    %614 = vmatmul.mubr.bf16.gmra.mrb[0].mxu0 %v571
    %v615 = vpop.f32.mrb[0].mxu0
    %v616 = vadd.f32 %v554, %v615
    %v617 = vpop.f32.mrb[0].mxu0
    %v618 = vpop.f32.mrb[0].mxu0
    %v619 = vadd.f32 %v554, %v618
    %v620 = vpop.f32.mrb[0].mxu0
    %621 = vdwg.mxu0
    %v622 = vsel %vm158, %v608, 0.0
    %623 = vadd.xlane.f32.xlu0 %v622
    %v624 = vpop.xlane.xlu0 %623
    %v625 = vsel %vm158, %v611, 0.0
    %626 = vadd.xlane.f32.xlu0 %v625
    %v627 = vpop.xlane.xlu0 %626
    %v628 = vsel %vm158, %v616, 0.0
    %629 = vadd.xlane.f32.xlu0 %v628
    %v630 = vpop.xlane.xlu0 %629
    %v631 = vsel %vm158, %v619, 0.0
    %632 = vadd.xlane.f32.xlu0 %v631
    %v633 = vpop.xlane.xlu0 %632
    %v634 = vrcp.pop 32.0
    %v635 = vmul.f32 %v624, %v634
    %v636 = vmul.f32 %v627, %v634
    %v637 = vmul.f32 %v630, %v634
    %v638 = vmul.f32 %v633, %v634
    %v639 = vmul.f32 %v608, %v608
    %v640 = vmul.f32 %v611, %v611
    %v641 = vmul.f32 %v616, %v616
    %v642 = vmul.f32 %v619, %v619
    %v643 = vsel %vm158, %v639, 0.0
    %644 = vadd.xlane.f32.xlu0 %v643
    %v645 = vpop.xlane.xlu0 %644
    %v646 = vsel %vm158, %v640, 0.0
    %647 = vadd.xlane.f32.xlu0 %v646
    %v648 = vpop.xlane.xlu0 %647
    %v649 = vsel %vm158, %v641, 0.0
    %650 = vadd.xlane.f32.xlu0 %v649
    %v651 = vpop.xlane.xlu0 %650
    %v652 = vsel %vm158, %v642, 0.0
    %653 = vadd.xlane.f32.xlu0 %v652
    %v654 = vpop.xlane.xlu0 %653
    %v655 = vmul.f32 %v645, %v634
    %v656 = vmul.f32 %v648, %v634
    %v657 = vmul.f32 %v651, %v634
    %v658 = vmul.f32 %v654, %v634
    %v659 = vmul.f32 %v635, %v635
    %v660 = vmul.f32 %v636, %v636
    %v661 = vmul.f32 %v637, %v637
    %v662 = vmul.f32 %v638, %v638
    %v663 = vsub.f32 %v655, %v659
    %v664 = vsub.f32 %v656, %v660
    %v665 = vsub.f32 %v657, %v661
    %v666 = vsub.f32 %v658, %v662
    %v667 = vmax.f32 %v663, 0.0
    %v668 = vmax.f32 %v664, 0.0
    %v669 = vmax.f32 %v665, 0.0
    %v670 = vmax.f32 %v666, 0.0
    %v671 = vsub.f32 %v608, %v635
    %v672 = vsub.f32 %v611, %v636
    %v673 = vsub.f32 %v616, %v637
    %v674 = vsub.f32 %v619, %v638
    %v675 = vadd.f32 %v667, 1e-05
    %v676 = vadd.f32 %v668, 1e-05
    %v677 = vadd.f32 %v669, 1e-05
    %v678 = vadd.f32 %v670, 1e-05
    %v679 = vrsqrt.pop %v675
    %v680 = vrsqrt.pop %v676
    %v681 = vrsqrt.pop %v677
    %v682 = vrsqrt.pop %v678
    %v683 = vmul.f32 %v671, %v679
    %v684 = vmul.f32 %v672, %v680
    %v685 = vmul.f32 %v673, %v681
    %v686 = vmul.f32 %v674, %v682
    %v687 = vld [vmem:[%s7 + $0x2] sm:$0x1]
    %v688 = vlaneseq
    %v689 = vshrl.u32 %v688, 7
    %v690 = vsub.s32 0, %v689
    %v691 = vrot.slane %v687, %v690
    %v692 = vmul.f32 %v683, %v691
    %v693 = vmul.f32 %v684, %v691
    %v694 = vmul.f32 %v685, %v691
    %v695 = vmul.f32 %v686, %v691
    %v696 = vld [vmem:[%s7 + $0x3] sm:$0x1]
    %v697 = vlaneseq
    %v698 = vshrl.u32 %v697, 7
    %v699 = vsub.s32 0, %v698
    %v700 = vrot.slane %v696, %v699
    %v701 = vadd.f32 %v692, %v700
    %v702 = vadd.f32 %v693, %v700
    %v703 = vadd.f32 %v694, %v700
    %v704 = vadd.f32 %v695, %v700
    %709 = vrot.lane.b32.xlu0 %v701, 6
    %v710 = vpop.permute.xlu0 %709
    %711 = vrot.lane.b32.xlu0 %v702, 6
    %v712 = vpop.permute.xlu0 %711
    %713 = vrot.lane.b32.xlu0 %v703, 6
    %v714 = vpop.permute.xlu0 %713
    %715 = vrot.lane.b32.xlu0 %v704, 6
    %v716 = vpop.permute.xlu0 %715
    %v721 = vsel %vm443, %v277, %v710
    %v722 = vsel %vm443, %v280, %v712
    %v723 = vsel %vm443, %v285, %v714
    %v724 = vsel %vm443, %v288, %v716
    %v725 = vpack.c.bf16 %v722, %v721
    %v726 = vpack.c.bf16 %v724, %v723
    %v727 = vld [vmem:[%s8 + $0x20] sm:$0xf]
    %v728 = vld [vmem:[%s8 + $0x24] sm:$0xf]
    %v729 = vld [vmem:[%s8 + $0x28] sm:$0xf]
    %v730 = vld [vmem:[%s8 + $0x2c] sm:$0xf]
    %v731 = vld [vmem:[%s8 + $0x30] sm:$0x7]
    %v732 = vld [vmem:[%s7 + $0x4] sm:$0x1]
    %v733 = vlaneseq
    %v734 = vshrl.u32 %v733, 7
    %v735 = vsub.s32 0, %v734
    %v736 = vrot.slane %v732, %v735
    %v742 = vunpack.c.l.b16 %v727
    %v743 = vunpack.c.l.b16 %v728
    %v744 = vunpack.c.l.b16 %v729
    %v745 = vunpack.c.l.b16 %v730
    %v746 = vunpack.c.l.b16 %v731
    %v747 = vpack.c.b16 %v743, %v742
    %v748 = vpack.c.b16 %v745, %v744
    %v749 = vpack.c.b16 %v746, %v746
    %vm752 = vcmask 310272
    %v754 = vsel %vm752, %v725, 0
    %v757 = vsel %vm752, %v726, 0
    %v760 = vsel %vm485, %v749, 0
    %762 = vmatprep.subr.bf16.mxu0 0
    %763 = vmatpush1.bf16.msra.mxu0 %v747
    %764 = vmatprep.subr.bf16.mxu0 0
    %765 = vmatpush1.bf16.msra.mxu0 %v748
    %766 = vmatprep.subr.bf16.mxu0 0
    %767 = vmatpush1.bf16.msra.mxu0 %v760
    %768 = vmatprep.subr.bf16.mxu0 0
    %769 = vmatpush1.bf16.msra.mxu0 0
    %770 = vmatprep.subr.bf16.mxu0 0
    %771 = vmatpush1.bf16.msra.mxu0 0
    %772 = vmatprep.subr.bf16.mxu0 0
    %773 = vmatpush1.bf16.msra.mxu0 0
    %774 = vmatprep.subr.bf16.mxu0 0
    %775 = vmatpush1.bf16.msra.mxu0 0
    %776 = vmatprep.subr.bf16.mxu0 0
    %777 = vmatpush1.bf16.msra.mxu0 0
    %778 = vmatprep.subr.bf16.mxu0 0
    %779 = vmatpush1.bf16.msra.mxu0 0
    %780 = vmatprep.subr.bf16.mxu0 0
    %781 = vmatpush1.bf16.msra.mxu0 0
    %782 = vmatprep.subr.bf16.mxu0 0
    %783 = vmatpush1.bf16.msra.mxu0 0
    %784 = vmatprep.subr.bf16.mxu0 0
    %785 = vmatpush1.bf16.msra.mxu0 0
    %786 = vmatprep.subr.bf16.mxu0 0
    %787 = vmatpush1.bf16.msra.mxu0 0
    %788 = vmatprep.subr.bf16.mxu0 0
    %789 = vmatpush1.bf16.msra.mxu0 0
    %790 = vmatprep.subr.bf16.mxu0 0
    %791 = vmatpush1.bf16.msra.mxu0 0
    %792 = vmatprep.subr.bf16.mxu0 0
    %793 = vmatpush1.bf16.msra.mxu0 0
    %794 = vmatprep.mubr.bf16.mxu0 0
    %795 = vmatmul.mubr.bf16.gmra.mrb[0].mxu0 %v754
    %v796 = vpop.f32.mrb[0].mxu0
    %v797 = vadd.f32 %v736, %v796
    %v798 = vpop.f32.mrb[0].mxu0
    %v799 = vpop.f32.mrb[0].mxu0
    %v800 = vadd.f32 %v736, %v799
    %v801 = vpop.f32.mrb[0].mxu0
    %802 = vmatprep.mubr.bf16.mxu0 0
    %803 = vmatmul.mubr.bf16.gmra.mrb[0].mxu0 %v757
    %v804 = vpop.f32.mrb[0].mxu0
    %v805 = vadd.f32 %v736, %v804
    %v806 = vpop.f32.mrb[0].mxu0
    %v807 = vpop.f32.mrb[0].mxu0
    %v808 = vadd.f32 %v736, %v807
    %v809 = vpop.f32.mrb[0].mxu0
    %810 = vdwg.mxu0
    %v811 = vmax.f32 %v797, 0.0
    %v812 = vmax.f32 %v800, 0.0
    %v813 = vmax.f32 %v805, 0.0
    %v814 = vmax.f32 %v808, 0.0
    %v815 = vpack.c.bf16 %v812, %v811
    %v816 = vpack.c.bf16 %v814, %v813
    %v817 = vld [vmem:[%s8 + $0x38] sm:$0xf]
    %v818 = vld [vmem:[%s8 + $0x3c] sm:$0xf]
    %v819 = vld [vmem:[%s8 + $0x40] sm:$0xf]
    %v820 = vld [vmem:[%s8 + $0x44] sm:$0xf]
    %v821 = vld [vmem:[%s7 + $0x5] sm:$0x1]
    %v822 = vlaneseq
    %v823 = vshrl.u32 %v822, 7
    %v824 = vsub.s32 0, %v823
    %v825 = vrot.slane %v821, %v824
    %v830 = vunpack.c.l.b16 %v817
    %v831 = vunpack.c.l.b16 %v818
    %v832 = vunpack.c.l.b16 %v819
    %v833 = vunpack.c.l.b16 %v820
    %v834 = vpack.c.b16 %v831, %v830
    %v835 = vpack.c.b16 %v833, %v832
    %v839 = vsel %vm158, %v815, 0
    %v842 = vsel %vm158, %v816, 0
    %844 = vmatprep.subr.bf16.mxu0 0
    %845 = vmatpush1.bf16.msra.mxu0 %v834
    %846 = vmatprep.subr.bf16.mxu0 0
    %847 = vmatpush1.bf16.msra.mxu0 %v835
    %848 = vmatprep.subr.bf16.mxu0 0
    %849 = vmatpush1.bf16.msra.mxu0 0
    %850 = vmatprep.subr.bf16.mxu0 0
    %851 = vmatpush1.bf16.msra.mxu0 0
    %852 = vmatprep.subr.bf16.mxu0 0
    %853 = vmatpush1.bf16.msra.mxu0 0
    %854 = vmatprep.subr.bf16.mxu0 0
    %855 = vmatpush1.bf16.msra.mxu0 0
    %856 = vmatprep.subr.bf16.mxu0 0
    %857 = vmatpush1.bf16.msra.mxu0 0
    %858 = vmatprep.subr.bf16.mxu0 0
    %859 = vmatpush1.bf16.msra.mxu0 0
    %860 = vmatprep.subr.bf16.mxu0 0
    %861 = vmatpush1.bf16.msra.mxu0 0
    %862 = vmatprep.subr.bf16.mxu0 0
    %863 = vmatpush1.bf16.msra.mxu0 0
    %864 = vmatprep.subr.bf16.mxu0 0
    %865 = vmatpush1.bf16.msra.mxu0 0
    %866 = vmatprep.subr.bf16.mxu0 0
    %867 = vmatpush1.bf16.msra.mxu0 0
    %868 = vmatprep.subr.bf16.mxu0 0
    %869 = vmatpush1.bf16.msra.mxu0 0
    %870 = vmatprep.subr.bf16.mxu0 0
    %871 = vmatpush1.bf16.msra.mxu0 0
    %872 = vmatprep.subr.bf16.mxu0 0
    %873 = vmatpush1.bf16.msra.mxu0 0
    %874 = vmatprep.subr.bf16.mxu0 0
    %875 = vmatpush1.bf16.msra.mxu0 0
    %876 = vmatprep.mubr.bf16.mxu0 0
    %877 = vmatmul.mubr.bf16.gmra.mrb[0].mxu0 %v839
    %v878 = vpop.f32.mrb[0].mxu0
    %v879 = vadd.f32 %v825, %v878
    %v880 = vpop.f32.mrb[0].mxu0
    %v881 = vpop.f32.mrb[0].mxu0
    %v882 = vadd.f32 %v825, %v881
    %v883 = vpop.f32.mrb[0].mxu0
    %884 = vmatprep.mubr.bf16.mxu0 0
    %885 = vmatmul.mubr.bf16.gmra.mrb[0].mxu0 %v842
    %v886 = vpop.f32.mrb[0].mxu0
    %v887 = vadd.f32 %v825, %v886
    %v888 = vpop.f32.mrb[0].mxu0
    %v889 = vpop.f32.mrb[0].mxu0
    %v890 = vadd.f32 %v825, %v889
    %v891 = vpop.f32.mrb[0].mxu0
    %892 = vdwg.mxu0
    %v893 = vsel %vm158, %v879, 0.0
    %894 = vadd.xlane.f32.xlu0 %v893
    %v895 = vpop.xlane.xlu0 %894
    %v896 = vsel %vm158, %v882, 0.0
    %897 = vadd.xlane.f32.xlu0 %v896
    %v898 = vpop.xlane.xlu0 %897
    %v899 = vsel %vm158, %v887, 0.0
    %900 = vadd.xlane.f32.xlu0 %v899
    %v901 = vpop.xlane.xlu0 %900
    %v902 = vsel %vm158, %v890, 0.0
    %903 = vadd.xlane.f32.xlu0 %v902
    %v904 = vpop.xlane.xlu0 %903
    %v905 = vmul.f32 %v895, %v634
    %v906 = vmul.f32 %v898, %v634
    %v907 = vmul.f32 %v901, %v634
    %v908 = vmul.f32 %v904, %v634
    %v909 = vmul.f32 %v879, %v879
    %v910 = vmul.f32 %v882, %v882
    %v911 = vmul.f32 %v887, %v887
    %v912 = vmul.f32 %v890, %v890
    %v913 = vsel %vm158, %v909, 0.0
    %914 = vadd.xlane.f32.xlu0 %v913
    %v915 = vpop.xlane.xlu0 %914
    %v916 = vsel %vm158, %v910, 0.0
    %917 = vadd.xlane.f32.xlu0 %v916
    %v918 = vpop.xlane.xlu0 %917
    %v919 = vsel %vm158, %v911, 0.0
    %920 = vadd.xlane.f32.xlu0 %v919
    %v921 = vpop.xlane.xlu0 %920
    %v922 = vsel %vm158, %v912, 0.0
    %923 = vadd.xlane.f32.xlu0 %v922
    %v924 = vpop.xlane.xlu0 %923
    %v925 = vmul.f32 %v915, %v634
    %v926 = vmul.f32 %v918, %v634
    %v927 = vmul.f32 %v921, %v634
    %v928 = vmul.f32 %v924, %v634
    %v929 = vmul.f32 %v905, %v905
    %v930 = vmul.f32 %v906, %v906
    %v931 = vmul.f32 %v907, %v907
    %v932 = vmul.f32 %v908, %v908
    %v933 = vsub.f32 %v925, %v929
    %v934 = vsub.f32 %v926, %v930
    %v935 = vsub.f32 %v927, %v931
    %v936 = vsub.f32 %v928, %v932
    %v937 = vmax.f32 %v933, 0.0
    %v938 = vmax.f32 %v934, 0.0
    %v939 = vmax.f32 %v935, 0.0
    %v940 = vmax.f32 %v936, 0.0
    %v941 = vsub.f32 %v879, %v905
    %v942 = vsub.f32 %v882, %v906
    %v943 = vsub.f32 %v887, %v907
    %v944 = vsub.f32 %v890, %v908
    %v945 = vadd.f32 %v937, 1e-05
    %v946 = vadd.f32 %v938, 1e-05
    %v947 = vadd.f32 %v939, 1e-05
    %v948 = vadd.f32 %v940, 1e-05
    %v949 = vrsqrt.pop %v945
    %v950 = vrsqrt.pop %v946
    %v951 = vrsqrt.pop %v947
    %v952 = vrsqrt.pop %v948
    %v953 = vmul.f32 %v941, %v949
    %v954 = vmul.f32 %v942, %v950
    %v955 = vmul.f32 %v943, %v951
    %v956 = vmul.f32 %v944, %v952
    %v957 = vld [vmem:[%s7 + $0x6] sm:$0x1]
    %v958 = vlaneseq
    %v959 = vshrl.u32 %v958, 7
    %v960 = vsub.s32 0, %v959
    %v961 = vrot.slane %v957, %v960
    %v962 = vmul.f32 %v953, %v961
    %v963 = vmul.f32 %v954, %v961
    %v964 = vmul.f32 %v955, %v961
    %v965 = vmul.f32 %v956, %v961
    %v966 = vld [vmem:[%s7 + $0x7] sm:$0x1]
    %v967 = vlaneseq
    %v968 = vshrl.u32 %v967, 7
    %v969 = vsub.s32 0, %v968
    %v970 = vrot.slane %v966, %v969
    %v971 = vadd.f32 %v962, %v970
    %v972 = vadd.f32 %v963, %v970
    %v973 = vadd.f32 %v964, %v970
    %v974 = vadd.f32 %v965, %v970
    %v975 = vpack.c.bf16 %v972, %v971
    %v976 = vpack.c.bf16 %v974, %v973
    %v978 = vsel %vm158, %v143, 0
    %980 = vmatprep.subr.bf16.mxu0 0
    %981 = vmatpush1.bf16.msra.mxu0 %v975
    %982 = vmatprep.subr.bf16.mxu0 0
    %983 = vmatpush1.bf16.msra.mxu0 %v976
    %984 = vmatprep.subr.bf16.mxu0 0
    %985 = vmatpush1.bf16.msra.mxu0 0
    %986 = vmatprep.subr.bf16.mxu0 0
    %987 = vmatpush1.bf16.msra.mxu0 0
    %988 = vmatprep.subr.bf16.mxu0 0
    %989 = vmatpush1.bf16.msra.mxu0 0
    %990 = vmatprep.subr.bf16.mxu0 0
    %991 = vmatpush1.bf16.msra.mxu0 0
    %992 = vmatprep.subr.bf16.mxu0 0
    %993 = vmatpush1.bf16.msra.mxu0 0
    %994 = vmatprep.subr.bf16.mxu0 0
    %995 = vmatpush1.bf16.msra.mxu0 0
    %996 = vmatprep.subr.bf16.mxu0 0
    %997 = vmatpush1.bf16.msra.mxu0 0
    %998 = vmatprep.subr.bf16.mxu0 0
    %999 = vmatpush1.bf16.msra.mxu0 0
    %1000 = vmatprep.subr.bf16.mxu0 0
    %1001 = vmatpush1.bf16.msra.mxu0 0
    %1002 = vmatprep.subr.bf16.mxu0 0
    %1003 = vmatpush1.bf16.msra.mxu0 0
    %1004 = vmatprep.subr.bf16.mxu0 0
    %1005 = vmatpush1.bf16.msra.mxu0 0
    %1006 = vmatprep.subr.bf16.mxu0 0
    %1007 = vmatpush1.bf16.msra.mxu0 0
    %1008 = vmatprep.subr.bf16.mxu0 0
    %1009 = vmatpush1.bf16.msra.mxu0 0
    %1010 = vmatprep.subr.bf16.mxu0 0
    %1011 = vmatpush1.bf16.msra.mxu0 0
    %1012 = vmatprep.mubr.bf16.mxu0 0
    %1013 = vmatmul.mubr.bf16.gmra.mrb[0].mxu0 %v978
    %v1014 = vpop.f32.mrb[0].mxu0
    %v1015 = vadd.f32 0.0, %v1014
    %v1016 = vpop.f32.mrb[0].mxu0
    %v1017 = vpop.f32.mrb[0].mxu0
    %v1018 = vadd.f32 0.0, %v1017
    %v1019 = vpop.f32.mrb[0].mxu0
    %1020 = vdwg.mxu0
    %v1021 = vmul.f32 %v1015, %v168
    %v1022 = vmul.f32 %v1018, %v170
    %1025 = vrot.lane.b32.xlu0 %v1021, 6
    %v1026 = vpop.permute.xlu0 %1025
    %1027 = vrot.lane.b32.xlu0 %v1022, 6
    %v1028 = vpop.permute.xlu0 %1027
    %1033 = vrot.lane.b32.xlu0 %v389, 38
    %v1034 = vpop.permute.xlu0 %1033
    %1035 = vrot.lane.b32.xlu0 %v392, 38
    %v1036 = vpop.permute.xlu0 %1035
    %v1039 = vsel %vm443, %v171, %v1026
    %v1040 = vsel %vm443, %v172, %v1028
    %v1041 = vsel %vm752, %v1039, %v1034
    %v1042 = vsel %vm752, %v1040, %v1036
    %v1043 = vpack.c.bf16 %v1042, %v1041
    %v1044 = vld [vmem:[%s8 + $0x48] sm:$0xf]
    %v1045 = vld [vmem:[%s8 + $0x4c] sm:$0xf]
    %v1046 = vld [vmem:[%s8 + $0x50] sm:$0xf]
    %v1047 = vld [vmem:[%s8 + $0x54] sm:$0xf]
    %v1048 = vld [vmem:[%s8 + $0x58] sm:$0xf]
    %v1049 = vld [vmem:[%s8 + $0x5c] sm:$0x1]
    %v1050 = vld [vmem:[%s7 + $0x8] sm:$0x1]
    %v1051 = vlaneseq
    %v1052 = vshrl.u32 %v1051, 7
    %v1053 = vsub.s32 0, %v1052
    %v1054 = vrot.slane %v1050, %v1053
    %v1061 = vunpack.c.l.b16 %v1044
    %v1062 = vunpack.c.l.b16 %v1045
    %v1063 = vunpack.c.l.b16 %v1046
    %v1064 = vunpack.c.l.b16 %v1047
    %v1065 = vunpack.c.l.b16 %v1048
    %v1066 = vunpack.c.l.b16 %v1049
    %v1067 = vpack.c.b16 %v1062, %v1061
    %v1068 = vpack.c.b16 %v1064, %v1063
    %v1069 = vpack.c.b16 %v1066, %v1065
    %vm1072 = vcmask 343040
    %v1074 = vsel %vm1072, %v1043, 0
    %vm1076 = vcmask 1044480
    %v1078 = vsel %vm1076, %v1069, 0
    %1080 = vmatprep.subr.bf16.mxu0 0
    %1081 = vmatpush1.bf16.msra.mxu0 %v1067
    %1082 = vmatprep.subr.bf16.mxu0 0
    %1083 = vmatpush1.bf16.msra.mxu0 %v1068
    %1084 = vmatprep.subr.bf16.mxu0 0
    %1085 = vmatpush1.bf16.msra.mxu0 %v1078
    %1086 = vmatprep.subr.bf16.mxu0 0
    %1087 = vmatpush1.bf16.msra.mxu0 0
    %1088 = vmatprep.subr.bf16.mxu0 0
    %1089 = vmatpush1.bf16.msra.mxu0 0
    %1090 = vmatprep.subr.bf16.mxu0 0
    %1091 = vmatpush1.bf16.msra.mxu0 0
    %1092 = vmatprep.subr.bf16.mxu0 0
    %1093 = vmatpush1.bf16.msra.mxu0 0
    %1094 = vmatprep.subr.bf16.mxu0 0
    %1095 = vmatpush1.bf16.msra.mxu0 0
    %1096 = vmatprep.subr.bf16.mxu0 0
    %1097 = vmatpush1.bf16.msra.mxu0 0
    %1098 = vmatprep.subr.bf16.mxu0 0
    %1099 = vmatpush1.bf16.msra.mxu0 0
    %1100 = vmatprep.subr.bf16.mxu0 0
    %1101 = vmatpush1.bf16.msra.mxu0 0
    %1102 = vmatprep.subr.bf16.mxu0 0
    %1103 = vmatpush1.bf16.msra.mxu0 0
    %1104 = vmatprep.subr.bf16.mxu0 0
    %1105 = vmatpush1.bf16.msra.mxu0 0
    %1106 = vmatprep.subr.bf16.mxu0 0
    %1107 = vmatpush1.bf16.msra.mxu0 0
    %1108 = vmatprep.subr.bf16.mxu0 0
    %1109 = vmatpush1.bf16.msra.mxu0 0
    %1110 = vmatprep.subr.bf16.mxu0 0
    %1111 = vmatpush1.bf16.msra.mxu0 0
    %1112 = vmatprep.mubr.bf16.mxu0 0
    %1113 = vmatmul.mubr.bf16.gmra.mrb[0].mxu0 %v1074
    %v1114 = vpop.f32.mrb[0].mxu0
    %v1115 = vadd.f32 %v1054, %v1114
    %v1116 = vpop.f32.mrb[0].mxu0
    %v1117 = vpop.f32.mrb[0].mxu0
    %v1118 = vadd.f32 %v1054, %v1117
    %v1119 = vpop.f32.mrb[0].mxu0
    %1120 = vdwg.mxu0
    %v1121 = vmax.f32 %v1115, 0.0
    %v1122 = vmax.f32 %v1118, 0.0
    %v1123 = vpack.c.bf16 %v1122, %v1121
    %v1124 = vld [vmem:[%s8 + $0x60] sm:$0xf]
    %v1125 = vld [vmem:[%s8 + $0x64] sm:$0xf]
    %v1126 = vld [vmem:[%s8 + $0x68] sm:$0xf]
    %v1127 = vld [vmem:[%s8 + $0x6c] sm:$0xf]
    %v1128 = vld [vmem:[%s7 + $0x9] sm:$0x1]
    %v1129 = vlaneseq
    %v1130 = vshrl.u32 %v1129, 7
    %v1131 = vsub.s32 0, %v1130
    %v1132 = vrot.slane %v1128, %v1131
    %v1137 = vunpack.c.l.b16 %v1124
    %v1138 = vunpack.c.l.b16 %v1125
    %v1139 = vunpack.c.l.b16 %v1126
    %v1140 = vunpack.c.l.b16 %v1127
    %v1141 = vpack.c.b16 %v1138, %v1137
    %v1142 = vpack.c.b16 %v1140, %v1139
    %v1146 = vsel %vm158, %v1123, 0
    %1148 = vmatprep.subr.bf16.mxu0 0
    %1149 = vmatpush1.bf16.msra.mxu0 %v1141
    %1150 = vmatprep.subr.bf16.mxu0 0
    %1151 = vmatpush1.bf16.msra.mxu0 %v1142
    %1152 = vmatprep.subr.bf16.mxu0 0
    %1153 = vmatpush1.bf16.msra.mxu0 0
    %1154 = vmatprep.subr.bf16.mxu0 0
    %1155 = vmatpush1.bf16.msra.mxu0 0
    %1156 = vmatprep.subr.bf16.mxu0 0
    %1157 = vmatpush1.bf16.msra.mxu0 0
    %1158 = vmatprep.subr.bf16.mxu0 0
    %1159 = vmatpush1.bf16.msra.mxu0 0
    %1160 = vmatprep.subr.bf16.mxu0 0
    %1161 = vmatpush1.bf16.msra.mxu0 0
    %1162 = vmatprep.subr.bf16.mxu0 0
    %1163 = vmatpush1.bf16.msra.mxu0 0
    %1164 = vmatprep.subr.bf16.mxu0 0
    %1165 = vmatpush1.bf16.msra.mxu0 0
    %1166 = vmatprep.subr.bf16.mxu0 0
    %1167 = vmatpush1.bf16.msra.mxu0 0
    %1168 = vmatprep.subr.bf16.mxu0 0
    %1169 = vmatpush1.bf16.msra.mxu0 0
    %1170 = vmatprep.subr.bf16.mxu0 0
    %1171 = vmatpush1.bf16.msra.mxu0 0
    %1172 = vmatprep.subr.bf16.mxu0 0
    %1173 = vmatpush1.bf16.msra.mxu0 0
    %1174 = vmatprep.subr.bf16.mxu0 0
    %1175 = vmatpush1.bf16.msra.mxu0 0
    %1176 = vmatprep.subr.bf16.mxu0 0
    %1177 = vmatpush1.bf16.msra.mxu0 0
    %1178 = vmatprep.subr.bf16.mxu0 0
    %1179 = vmatpush1.bf16.msra.mxu0 0
    %1180 = vmatprep.mubr.bf16.mxu0 0
    %1181 = vmatmul.mubr.bf16.gmra.mrb[0].mxu0 %v1146
    %v1182 = vpop.f32.mrb[0].mxu0
    %v1183 = vadd.f32 %v1132, %v1182
    %v1184 = vpop.f32.mrb[0].mxu0
    %v1185 = vpop.f32.mrb[0].mxu0
    %v1186 = vadd.f32 %v1132, %v1185
    %v1187 = vpop.f32.mrb[0].mxu0
    %1188 = vdwg.mxu0
    %v1189 = vsel %vm158, %v1183, 0.0
    %1190 = vadd.xlane.f32.xlu0 %v1189
    %v1191 = vpop.xlane.xlu0 %1190
    %v1192 = vsel %vm158, %v1186, 0.0
    %1193 = vadd.xlane.f32.xlu0 %v1192
    %v1194 = vpop.xlane.xlu0 %1193
    %v1195 = vmul.f32 %v1191, %v634
    %v1196 = vmul.f32 %v1194, %v634
    %v1197 = vmul.f32 %v1183, %v1183
    %v1198 = vmul.f32 %v1186, %v1186
    %v1199 = vsel %vm158, %v1197, 0.0
    %1200 = vadd.xlane.f32.xlu0 %v1199
    %v1201 = vpop.xlane.xlu0 %1200
    %v1202 = vsel %vm158, %v1198, 0.0
    %1203 = vadd.xlane.f32.xlu0 %v1202
    %v1204 = vpop.xlane.xlu0 %1203
    %v1205 = vmul.f32 %v1201, %v634
    %v1206 = vmul.f32 %v1204, %v634
    %v1207 = vmul.f32 %v1195, %v1195
    %v1208 = vmul.f32 %v1196, %v1196
    %v1209 = vsub.f32 %v1205, %v1207
    %v1210 = vsub.f32 %v1206, %v1208
    %v1211 = vmax.f32 %v1209, 0.0
    %v1212 = vmax.f32 %v1210, 0.0
    %v1213 = vsub.f32 %v1183, %v1195
    %v1214 = vsub.f32 %v1186, %v1196
    %v1215 = vadd.f32 %v1211, 1e-05
    %v1216 = vadd.f32 %v1212, 1e-05
    %v1217 = vrsqrt.pop %v1215
    %v1218 = vrsqrt.pop %v1216
    %v1219 = vmul.f32 %v1213, %v1217
    %v1220 = vmul.f32 %v1214, %v1218
    %v1221 = vld [vmem:[%s7 + $0xa] sm:$0x1]
    %v1222 = vlaneseq
    %v1223 = vshrl.u32 %v1222, 7
    %v1224 = vsub.s32 0, %v1223
    %v1225 = vrot.slane %v1221, %v1224
    %v1226 = vmul.f32 %v1219, %v1225
    %v1227 = vmul.f32 %v1220, %v1225
    %v1228 = vld [vmem:[%s7 + $0xb] sm:$0x1]
    %v1229 = vlaneseq
    %v1230 = vshrl.u32 %v1229, 7
    %v1231 = vsub.s32 0, %v1230
    %v1232 = vrot.slane %v1228, %v1231
    %v1233 = vadd.f32 %v1226, %v1232
    %v1234 = vadd.f32 %v1227, %v1232
    %v1235 = vpack.c.bf16 %v1234, %v1233
    %v1237 = vsel %vm180, %v150, 0
    %1239 = vmatprep.subr.bf16.mxu0 0
    %1240 = vmatpush1.bf16.msra.mxu0 %v1235
    %1241 = vmatprep.subr.bf16.mxu0 0
    %1242 = vmatpush1.bf16.msra.mxu0 0
    %1243 = vmatprep.subr.bf16.mxu0 0
    %1244 = vmatpush1.bf16.msra.mxu0 0
    %1245 = vmatprep.subr.bf16.mxu0 0
    %1246 = vmatpush1.bf16.msra.mxu0 0
    %1247 = vmatprep.subr.bf16.mxu0 0
    %1248 = vmatpush1.bf16.msra.mxu0 0
    %1249 = vmatprep.subr.bf16.mxu0 0
    %1250 = vmatpush1.bf16.msra.mxu0 0
    %1251 = vmatprep.subr.bf16.mxu0 0
    %1252 = vmatpush1.bf16.msra.mxu0 0
    %1253 = vmatprep.subr.bf16.mxu0 0
    %1254 = vmatpush1.bf16.msra.mxu0 0
    %1255 = vmatprep.subr.bf16.mxu0 0
    %1256 = vmatpush1.bf16.msra.mxu0 0
    %1257 = vmatprep.subr.bf16.mxu0 0
    %1258 = vmatpush1.bf16.msra.mxu0 0
    %1259 = vmatprep.subr.bf16.mxu0 0
    %1260 = vmatpush1.bf16.msra.mxu0 0
    %1261 = vmatprep.subr.bf16.mxu0 0
    %1262 = vmatpush1.bf16.msra.mxu0 0
    %1263 = vmatprep.subr.bf16.mxu0 0
    %1264 = vmatpush1.bf16.msra.mxu0 0
    %1265 = vmatprep.subr.bf16.mxu0 0
    %1266 = vmatpush1.bf16.msra.mxu0 0
    %1267 = vmatprep.subr.bf16.mxu0 0
    %1268 = vmatpush1.bf16.msra.mxu0 0
    %1269 = vmatprep.subr.bf16.mxu0 0
    %1270 = vmatpush1.bf16.msra.mxu0 0
    %1271 = vmatprep.mubr.bf16.mxu0 0
    %1272 = vmatmul.mubr.bf16.gmra.mrb[0].mxu0 %v1237
    %v1273 = vpop.f32.mrb[0].mxu0
    %v1274 = vadd.f32 0.0, %v1273
    %v1275 = vpop.f32.mrb[0].mxu0
    %v1276 = vpop.f32.mrb[0].mxu0
    %v1277 = vpop.f32.mrb[0].mxu0
    %1278 = vdwg.mxu0
    %v1279 = vpack.c.bf16 %v702, %v701
    %v1280 = vpack.c.bf16 %v704, %v703
    %v1282 = vsel %vm158, %v157, 0
    %1284 = vmatprep.subr.bf16.mxu0 0
    %1285 = vmatpush1.bf16.msra.mxu0 %v1279
    %1286 = vmatprep.subr.bf16.mxu0 0
    %1287 = vmatpush1.bf16.msra.mxu0 %v1280
    %1288 = vmatprep.subr.bf16.mxu0 0
    %1289 = vmatpush1.bf16.msra.mxu0 0
    %1290 = vmatprep.subr.bf16.mxu0 0
    %1291 = vmatpush1.bf16.msra.mxu0 0
    %1292 = vmatprep.subr.bf16.mxu0 0
    %1293 = vmatpush1.bf16.msra.mxu0 0
    %1294 = vmatprep.subr.bf16.mxu0 0
    %1295 = vmatpush1.bf16.msra.mxu0 0
    %1296 = vmatprep.subr.bf16.mxu0 0
    %1297 = vmatpush1.bf16.msra.mxu0 0
    %1298 = vmatprep.subr.bf16.mxu0 0
    %1299 = vmatpush1.bf16.msra.mxu0 0
    %1300 = vmatprep.subr.bf16.mxu0 0
    %1301 = vmatpush1.bf16.msra.mxu0 0
    %1302 = vmatprep.subr.bf16.mxu0 0
    %1303 = vmatpush1.bf16.msra.mxu0 0
    %1304 = vmatprep.subr.bf16.mxu0 0
    %1305 = vmatpush1.bf16.msra.mxu0 0
    %1306 = vmatprep.subr.bf16.mxu0 0
    %1307 = vmatpush1.bf16.msra.mxu0 0
    %1308 = vmatprep.subr.bf16.mxu0 0
    %1309 = vmatpush1.bf16.msra.mxu0 0
    %1310 = vmatprep.subr.bf16.mxu0 0
    %1311 = vmatpush1.bf16.msra.mxu0 0
    %1312 = vmatprep.subr.bf16.mxu0 0
    %1313 = vmatpush1.bf16.msra.mxu0 0
    %1314 = vmatprep.subr.bf16.mxu0 0
    %1315 = vmatpush1.bf16.msra.mxu0 0
    %1316 = vmatprep.mubr.bf16.mxu0 0
    %1317 = vmatmul.mubr.bf16.gmra.mrb[0].mxu0 %v1282
    %v1318 = vpop.f32.mrb[0].mxu0
    %v1319 = vadd.f32 0.0, %v1318
    %v1320 = vpop.f32.mrb[0].mxu0
    %v1321 = vpop.f32.mrb[0].mxu0
    %v1322 = vpop.f32.mrb[0].mxu0
    %1323 = vdwg.mxu0
    %1325 = vrot.lane.b32.xlu0 %v1274, 4
    %v1326 = vpop.permute.xlu0 %1325
    %1329 = vrot.lane.b32.xlu0 %v1319, 36
    %v1330 = vpop.permute.xlu0 %1329
    %vm1332 = vcmask 31744
    %v1333 = vsel %vm1332, %v177, %v1326
    %vm1334 = vcmask 293888
    %v1335 = vsel %vm1334, %v1333, %v1330
    %v1336 = vpack.c.bf16 %v1335, %v1335
    %v1337 = vld [vmem:[%s8 + $0x70] sm:$0xf]
    %v1338 = vld [vmem:[%s8 + $0x74] sm:$0xf]
    %v1339 = vld [vmem:[%s8 + $0x78] sm:$0xf]
    %v1340 = vld [vmem:[%s8 + $0x7c] sm:$0xf]
    %v1341 = vld [vmem:[%s8 + $0x80] sm:$0xf]
    %v1342 = vld [vmem:[%s8 + $0x84] sm:$0xf]
    %v1343 = vld [vmem:[%s8 + $0x88] sm:$0xf]
    %v1344 = vld [vmem:[%s8 + $0x8c] sm:$0xf]
    %v1345 = vld [vmem:[%s8 + $0x90] sm:$0x3]
    %v1346 = vld [vmem:[%s7 + $0xc] sm:$0x1]
    %v1347 = vlaneseq
    %v1348 = vshrl.u32 %v1347, 7
    %v1349 = vsub.s32 0, %v1348
    %v1350 = vrot.slane %v1346, %v1349
    %v1360 = vunpack.c.l.b16 %v1337
    %v1361 = vunpack.c.l.b16 %v1338
    %v1362 = vunpack.c.l.b16 %v1339
    %v1363 = vunpack.c.l.b16 %v1340
    %v1364 = vunpack.c.l.b16 %v1341
    %v1365 = vunpack.c.l.b16 %v1342
    %v1366 = vunpack.c.l.b16 %v1343
    %v1367 = vunpack.c.l.b16 %v1344
    %v1368 = vunpack.c.l.b16 %v1345
    %v1369 = vpack.c.b16 %v1361, %v1360
    %v1370 = vpack.c.b16 %v1363, %v1362
    %v1371 = vpack.c.b16 %v1365, %v1364
    %v1372 = vpack.c.b16 %v1367, %v1366
    %v1373 = vpack.c.b16 %v1368, %v1368
    %vm1378 = vcmask 556032
    %v1380 = vsel %vm1378, %v1336, 0
    %v1383 = vsel %vm484, %v1373, 0
    %1385 = vmatprep.subr.bf16.mxu0 0
    %1386 = vmatpush1.bf16.msra.mxu0 %v1369
    %1387 = vmatprep.subr.bf16.mxu0 0
    %1388 = vmatpush1.bf16.msra.mxu0 %v1370
    %1389 = vmatprep.subr.bf16.mxu0 0
    %1390 = vmatpush1.bf16.msra.mxu0 %v1371
    %1391 = vmatprep.subr.bf16.mxu0 0
    %1392 = vmatpush1.bf16.msra.mxu0 %v1372
    %1393 = vmatprep.subr.bf16.mxu0 0
    %1394 = vmatpush1.bf16.msra.mxu0 %v1383
    %1395 = vmatprep.subr.bf16.mxu0 0
    %1396 = vmatpush1.bf16.msra.mxu0 0
    %1397 = vmatprep.subr.bf16.mxu0 0
    %1398 = vmatpush1.bf16.msra.mxu0 0
    %1399 = vmatprep.subr.bf16.mxu0 0
    %1400 = vmatpush1.bf16.msra.mxu0 0
    %1401 = vmatprep.subr.bf16.mxu0 0
    %1402 = vmatpush1.bf16.msra.mxu0 0
    %1403 = vmatprep.subr.bf16.mxu0 0
    %1404 = vmatpush1.bf16.msra.mxu0 0
    %1405 = vmatprep.subr.bf16.mxu0 0
    %1406 = vmatpush1.bf16.msra.mxu0 0
    %1407 = vmatprep.subr.bf16.mxu0 0
    %1408 = vmatpush1.bf16.msra.mxu0 0
    %1409 = vmatprep.subr.bf16.mxu0 0
    %1410 = vmatpush1.bf16.msra.mxu0 0
    %1411 = vmatprep.subr.bf16.mxu0 0
    %1412 = vmatpush1.bf16.msra.mxu0 0
    %1413 = vmatprep.subr.bf16.mxu0 0
    %1414 = vmatpush1.bf16.msra.mxu0 0
    %1415 = vmatprep.subr.bf16.mxu0 0
    %1416 = vmatpush1.bf16.msra.mxu0 0
    %1417 = vmatprep.mubr.bf16.mxu0 0
    %1418 = vmatmul.mubr.bf16.gmra.mrb[0].mxu0 %v1380
    %v1419 = vpop.f32.mrb[0].mxu0
    %v1420 = vadd.f32 %v1350, %v1419
    %v1421 = vpop.f32.mrb[0].mxu0
    %v1422 = vpop.f32.mrb[0].mxu0
    %v1423 = vpop.f32.mrb[0].mxu0
    %1424 = vdwg.mxu0
    %v1425 = vmax.f32 %v1420, 0.0
    %v1426 = vpack.c.bf16 %v1425, %v1425
    %v1427 = vld [vmem:[%s8 + $0x98] sm:$0xf]
    %v1428 = vld [vmem:[%s8 + $0x9c] sm:$0xf]
    %v1429 = vld [vmem:[%s8 + $0xa0] sm:$0xf]
    %v1430 = vld [vmem:[%s8 + $0xa4] sm:$0xf]
    %v1431 = vld [vmem:[%s7 + $0xd] sm:$0x1]
    %v1432 = vlaneseq
    %v1433 = vshrl.u32 %v1432, 7
    %v1434 = vsub.s32 0, %v1433
    %v1435 = vrot.slane %v1431, %v1434
    %v1440 = vunpack.c.l.b16 %v1427
    %v1441 = vunpack.c.l.b16 %v1428
    %v1442 = vunpack.c.l.b16 %v1429
    %v1443 = vunpack.c.l.b16 %v1430
    %v1444 = vpack.c.b16 %v1441, %v1440
    %v1445 = vpack.c.b16 %v1443, %v1442
    %v1449 = vsel %vm158, %v1426, 0
    %1451 = vmatprep.subr.bf16.mxu0 0
    %1452 = vmatpush1.bf16.msra.mxu0 %v1444
    %1453 = vmatprep.subr.bf16.mxu0 0
    %1454 = vmatpush1.bf16.msra.mxu0 %v1445
    %1455 = vmatprep.subr.bf16.mxu0 0
    %1456 = vmatpush1.bf16.msra.mxu0 0
    %1457 = vmatprep.subr.bf16.mxu0 0
    %1458 = vmatpush1.bf16.msra.mxu0 0
    %1459 = vmatprep.subr.bf16.mxu0 0
    %1460 = vmatpush1.bf16.msra.mxu0 0
    %1461 = vmatprep.subr.bf16.mxu0 0
    %1462 = vmatpush1.bf16.msra.mxu0 0
    %1463 = vmatprep.subr.bf16.mxu0 0
    %1464 = vmatpush1.bf16.msra.mxu0 0
    %1465 = vmatprep.subr.bf16.mxu0 0
    %1466 = vmatpush1.bf16.msra.mxu0 0
    %1467 = vmatprep.subr.bf16.mxu0 0
    %1468 = vmatpush1.bf16.msra.mxu0 0
    %1469 = vmatprep.subr.bf16.mxu0 0
    %1470 = vmatpush1.bf16.msra.mxu0 0
    %1471 = vmatprep.subr.bf16.mxu0 0
    %1472 = vmatpush1.bf16.msra.mxu0 0
    %1473 = vmatprep.subr.bf16.mxu0 0
    %1474 = vmatpush1.bf16.msra.mxu0 0
    %1475 = vmatprep.subr.bf16.mxu0 0
    %1476 = vmatpush1.bf16.msra.mxu0 0
    %1477 = vmatprep.subr.bf16.mxu0 0
    %1478 = vmatpush1.bf16.msra.mxu0 0
    %1479 = vmatprep.subr.bf16.mxu0 0
    %1480 = vmatpush1.bf16.msra.mxu0 0
    %1481 = vmatprep.subr.bf16.mxu0 0
    %1482 = vmatpush1.bf16.msra.mxu0 0
    %1483 = vmatprep.mubr.bf16.mxu0 0
    %1484 = vmatmul.mubr.bf16.gmra.mrb[0].mxu0 %v1449
    %v1485 = vpop.f32.mrb[0].mxu0
    %v1486 = vadd.f32 %v1435, %v1485
    %v1487 = vpop.f32.mrb[0].mxu0
    %v1488 = vpop.f32.mrb[0].mxu0
    %v1489 = vpop.f32.mrb[0].mxu0
    %1490 = vdwg.mxu0
    %vm1491 = vcmask 254976
    %v1492 = vsel %vm1491, %v1486, 0.0
    %1493 = vadd.xlane.f32.xlu0 %v1492
    %v1494 = vpop.xlane.xlu0 %1493
    %v1495 = vmul.f32 %v1494, %v634
    %v1496 = vmul.f32 %v1486, %v1486
    %v1497 = vsel %vm1491, %v1496, 0.0
    %1498 = vadd.xlane.f32.xlu0 %v1497
    %v1499 = vpop.xlane.xlu0 %1498
    %v1500 = vmul.f32 %v1499, %v634
    %v1501 = vmul.f32 %v1495, %v1495
    %v1502 = vsub.f32 %v1500, %v1501
    %v1503 = vmax.f32 %v1502, 0.0
    %v1504 = vsub.f32 %v1486, %v1495
    %v1505 = vadd.f32 %v1503, 1e-05
    %v1506 = vrsqrt.pop %v1505
    %v1507 = vmul.f32 %v1504, %v1506
    %v1508 = vld [vmem:[%s7 + $0xe] sm:$0x1]
    %v1509 = vlaneseq
    %v1510 = vshrl.u32 %v1509, 7
    %v1511 = vsub.s32 0, %v1510
    %v1512 = vrot.slane %v1508, %v1511
    %v1513 = vmul.f32 %v1507, %v1512
    %v1514 = vld [vmem:[%s7 + $0xf] sm:$0x1]
    %v1515 = vlaneseq
    %v1516 = vshrl.u32 %v1515, 7
    %v1517 = vsub.s32 0, %v1516
    %v1518 = vrot.slane %v1514, %v1517
    %v1519 = vadd.f32 %v1513, %v1518
    %v1520 = vpack.c.bf16 %v1519, %v1519
    %1521 = vmatprep.subr.bf16.mxu0 0
    %1522 = vmatpush1.bf16.msra.mxu0 %v1235
    %1523 = vmatprep.subr.bf16.mxu0 0
    %1524 = vmatpush1.bf16.msra.mxu0 0
    %1525 = vmatprep.subr.bf16.mxu0 0
    %1526 = vmatpush1.bf16.msra.mxu0 0
    %1527 = vmatprep.subr.bf16.mxu0 0
    %1528 = vmatpush1.bf16.msra.mxu0 0
    %1529 = vmatprep.subr.bf16.mxu0 0
    %1530 = vmatpush1.bf16.msra.mxu0 0
    %1531 = vmatprep.subr.bf16.mxu0 0
    %1532 = vmatpush1.bf16.msra.mxu0 0
    %1533 = vmatprep.subr.bf16.mxu0 0
    %1534 = vmatpush1.bf16.msra.mxu0 0
    %1535 = vmatprep.subr.bf16.mxu0 0
    %1536 = vmatpush1.bf16.msra.mxu0 0
    %1537 = vmatprep.subr.bf16.mxu0 0
    %1538 = vmatpush1.bf16.msra.mxu0 0
    %1539 = vmatprep.subr.bf16.mxu0 0
    %1540 = vmatpush1.bf16.msra.mxu0 0
    %1541 = vmatprep.subr.bf16.mxu0 0
    %1542 = vmatpush1.bf16.msra.mxu0 0
    %1543 = vmatprep.subr.bf16.mxu0 0
    %1544 = vmatpush1.bf16.msra.mxu0 0
    %1545 = vmatprep.subr.bf16.mxu0 0
    %1546 = vmatpush1.bf16.msra.mxu0 0
    %1547 = vmatprep.subr.bf16.mxu0 0
    %1548 = vmatpush1.bf16.msra.mxu0 0
    %1549 = vmatprep.subr.bf16.mxu0 0
    %1550 = vmatpush1.bf16.msra.mxu0 0
    %1551 = vmatprep.subr.bf16.mxu0 0
    %1552 = vmatpush1.bf16.msra.mxu0 0
    %1553 = vmatprep.mubr.bf16.mxu0 0
    %1554 = vmatmul.mubr.bf16.gmra.mrb[0].mxu0 %v182
    %v1555 = vpop.f32.mrb[0].mxu0
    %v1556 = vadd.f32 0.0, %v1555
    %v1557 = vpop.f32.mrb[0].mxu0
    %v1558 = vpop.f32.mrb[0].mxu0
    %v1559 = vadd.f32 0.0, %v1558
    %v1560 = vpop.f32.mrb[0].mxu0
    %1561 = vmatprep.mubr.bf16.mxu0 0
    %1562 = vmatmul.mubr.bf16.gmra.mrb[0].mxu0 %v185
    %v1563 = vpop.f32.mrb[0].mxu0
    %v1564 = vadd.f32 0.0, %v1563
    %v1565 = vpop.f32.mrb[0].mxu0
    %v1566 = vpop.f32.mrb[0].mxu0
    %v1567 = vadd.f32 0.0, %v1566
    %v1568 = vpop.f32.mrb[0].mxu0
    %1569 = vdwg.mxu0
    %1570 = vmatprep.subr.bf16.mxu0 0
    %1571 = vmatpush1.bf16.msra.mxu0 %v1235
    %1572 = vmatprep.subr.bf16.mxu0 0
    %1573 = vmatpush1.bf16.msra.mxu0 0
    %1574 = vmatprep.subr.bf16.mxu0 0
    %1575 = vmatpush1.bf16.msra.mxu0 0
    %1576 = vmatprep.subr.bf16.mxu0 0
    %1577 = vmatpush1.bf16.msra.mxu0 0
    %1578 = vmatprep.subr.bf16.mxu0 0
    %1579 = vmatpush1.bf16.msra.mxu0 0
    %1580 = vmatprep.subr.bf16.mxu0 0
    %1581 = vmatpush1.bf16.msra.mxu0 0
    %1582 = vmatprep.subr.bf16.mxu0 0
    %1583 = vmatpush1.bf16.msra.mxu0 0
    %1584 = vmatprep.subr.bf16.mxu0 0
    %1585 = vmatpush1.bf16.msra.mxu0 0
    %1586 = vmatprep.subr.bf16.mxu0 0
    %1587 = vmatpush1.bf16.msra.mxu0 0
    %1588 = vmatprep.subr.bf16.mxu0 0
    %1589 = vmatpush1.bf16.msra.mxu0 0
    %1590 = vmatprep.subr.bf16.mxu0 0
    %1591 = vmatpush1.bf16.msra.mxu0 0
    %1592 = vmatprep.subr.bf16.mxu0 0
    %1593 = vmatpush1.bf16.msra.mxu0 0
    %1594 = vmatprep.subr.bf16.mxu0 0
    %1595 = vmatpush1.bf16.msra.mxu0 0
    %1596 = vmatprep.subr.bf16.mxu0 0
    %1597 = vmatpush1.bf16.msra.mxu0 0
    %1598 = vmatprep.subr.bf16.mxu0 0
    %1599 = vmatpush1.bf16.msra.mxu0 0
    %1600 = vmatprep.subr.bf16.mxu0 0
    %1601 = vmatpush1.bf16.msra.mxu0 0
    %1602 = vmatprep.mubr.bf16.mxu0 0
    %1603 = vmatmul.mubr.bf16.gmra.mrb[0].mxu0 %v237
    %v1604 = vpop.f32.mrb[0].mxu0
    %v1605 = vadd.f32 0.0, %v1604
    %v1606 = vpop.f32.mrb[0].mxu0
    %v1607 = vpop.f32.mrb[0].mxu0
    %v1608 = vadd.f32 0.0, %v1607
    %v1609 = vpop.f32.mrb[0].mxu0
    %1610 = vmatprep.mubr.bf16.mxu0 0
    %1611 = vmatmul.mubr.bf16.gmra.mrb[0].mxu0 %v240
    %v1612 = vpop.f32.mrb[0].mxu0
    %v1613 = vadd.f32 0.0, %v1612
    %v1614 = vpop.f32.mrb[0].mxu0
    %v1615 = vpop.f32.mrb[0].mxu0
    %v1616 = vadd.f32 0.0, %v1615
    %v1617 = vpop.f32.mrb[0].mxu0
    %1618 = vdwg.mxu0
    %v1620 = vsel %vm298, %v1520, 0
    %1622 = vmatprep.subr.bf16.mxu0 0
    %1623 = vmatpush1.bf16.msra.mxu0 %v1620
    %1624 = vmatprep.subr.bf16.mxu0 0
    %1625 = vmatpush1.bf16.msra.mxu0 0
    %1626 = vmatprep.subr.bf16.mxu0 0
    %1627 = vmatpush1.bf16.msra.mxu0 0
    %1628 = vmatprep.subr.bf16.mxu0 0
    %1629 = vmatpush1.bf16.msra.mxu0 0
    %1630 = vmatprep.subr.bf16.mxu0 0
    %1631 = vmatpush1.bf16.msra.mxu0 0
    %1632 = vmatprep.subr.bf16.mxu0 0
    %1633 = vmatpush1.bf16.msra.mxu0 0
    %1634 = vmatprep.subr.bf16.mxu0 0
    %1635 = vmatpush1.bf16.msra.mxu0 0
    %1636 = vmatprep.subr.bf16.mxu0 0
    %1637 = vmatpush1.bf16.msra.mxu0 0
    %1638 = vmatprep.subr.bf16.mxu0 0
    %1639 = vmatpush1.bf16.msra.mxu0 0
    %1640 = vmatprep.subr.bf16.mxu0 0
    %1641 = vmatpush1.bf16.msra.mxu0 0
    %1642 = vmatprep.subr.bf16.mxu0 0
    %1643 = vmatpush1.bf16.msra.mxu0 0
    %1644 = vmatprep.subr.bf16.mxu0 0
    %1645 = vmatpush1.bf16.msra.mxu0 0
    %1646 = vmatprep.subr.bf16.mxu0 0
    %1647 = vmatpush1.bf16.msra.mxu0 0
    %1648 = vmatprep.subr.bf16.mxu0 0
    %1649 = vmatpush1.bf16.msra.mxu0 0
    %1650 = vmatprep.subr.bf16.mxu0 0
    %1651 = vmatpush1.bf16.msra.mxu0 0
    %1652 = vmatprep.subr.bf16.mxu0 0
    %1653 = vmatpush1.bf16.msra.mxu0 0
    %1654 = vmatprep.mubr.bf16.mxu0 0
    %1655 = vmatmul.mubr.bf16.gmra.mrb[0].mxu0 %v293
    %v1656 = vpop.f32.mrb[0].mxu0
    %v1657 = vadd.f32 0.0, %v1656
    %v1658 = vpop.f32.mrb[0].mxu0
    %v1659 = vpop.f32.mrb[0].mxu0
    %v1660 = vadd.f32 0.0, %v1659
    %v1661 = vpop.f32.mrb[0].mxu0
    %1662 = vmatprep.mubr.bf16.mxu0 0
    %1663 = vmatmul.mubr.bf16.gmra.mrb[0].mxu0 %v296
    %v1664 = vpop.f32.mrb[0].mxu0
    %v1665 = vadd.f32 0.0, %v1664
    %v1666 = vpop.f32.mrb[0].mxu0
    %v1667 = vpop.f32.mrb[0].mxu0
    %v1668 = vadd.f32 0.0, %v1667
    %v1669 = vpop.f32.mrb[0].mxu0
    %1670 = vdwg.mxu0
    %1671 = vmatprep.subr.bf16.mxu0 0
    %1672 = vmatpush1.bf16.msra.mxu0 %v1620
    %1673 = vmatprep.subr.bf16.mxu0 0
    %1674 = vmatpush1.bf16.msra.mxu0 0
    %1675 = vmatprep.subr.bf16.mxu0 0
    %1676 = vmatpush1.bf16.msra.mxu0 0
    %1677 = vmatprep.subr.bf16.mxu0 0
    %1678 = vmatpush1.bf16.msra.mxu0 0
    %1679 = vmatprep.subr.bf16.mxu0 0
    %1680 = vmatpush1.bf16.msra.mxu0 0
    %1681 = vmatprep.subr.bf16.mxu0 0
    %1682 = vmatpush1.bf16.msra.mxu0 0
    %1683 = vmatprep.subr.bf16.mxu0 0
    %1684 = vmatpush1.bf16.msra.mxu0 0
    %1685 = vmatprep.subr.bf16.mxu0 0
    %1686 = vmatpush1.bf16.msra.mxu0 0
    %1687 = vmatprep.subr.bf16.mxu0 0
    %1688 = vmatpush1.bf16.msra.mxu0 0
    %1689 = vmatprep.subr.bf16.mxu0 0
    %1690 = vmatpush1.bf16.msra.mxu0 0
    %1691 = vmatprep.subr.bf16.mxu0 0
    %1692 = vmatpush1.bf16.msra.mxu0 0
    %1693 = vmatprep.subr.bf16.mxu0 0
    %1694 = vmatpush1.bf16.msra.mxu0 0
    %1695 = vmatprep.subr.bf16.mxu0 0
    %1696 = vmatpush1.bf16.msra.mxu0 0
    %1697 = vmatprep.subr.bf16.mxu0 0
    %1698 = vmatpush1.bf16.msra.mxu0 0
    %1699 = vmatprep.subr.bf16.mxu0 0
    %1700 = vmatpush1.bf16.msra.mxu0 0
    %1701 = vmatprep.subr.bf16.mxu0 0
    %1702 = vmatpush1.bf16.msra.mxu0 0
    %1703 = vmatprep.mubr.bf16.mxu0 0
    %1704 = vmatmul.mubr.bf16.gmra.mrb[0].mxu0 %v352
    %v1705 = vpop.f32.mrb[0].mxu0
    %v1706 = vadd.f32 0.0, %v1705
    %v1707 = vpop.f32.mrb[0].mxu0
    %v1708 = vpop.f32.mrb[0].mxu0
    %v1709 = vadd.f32 0.0, %v1708
    %v1710 = vpop.f32.mrb[0].mxu0
    %1711 = vdwg.mxu0
    %1716 = vrot.lane.b32.xlu0 %v1605, 32
    %v1717 = vpop.permute.xlu0 %1716
    %1718 = vrot.lane.b32.xlu0 %v1608, 32
    %v1719 = vpop.permute.xlu0 %1718
    %1720 = vrot.lane.b32.xlu0 %v1613, 32
    %v1721 = vpop.permute.xlu0 %1720
    %1722 = vrot.lane.b32.xlu0 %v1616, 32
    %v1723 = vpop.permute.xlu0 %1722
    %1728 = vrot.lane.b32.xlu0 %v701, 64
    %v1729 = vpop.permute.xlu0 %1728
    %1730 = vrot.lane.b32.xlu0 %v702, 64
    %v1731 = vpop.permute.xlu0 %1730
    %1732 = vrot.lane.b32.xlu0 %v703, 64
    %v1733 = vpop.permute.xlu0 %1732
    %1734 = vrot.lane.b32.xlu0 %v704, 64
    %v1735 = vpop.permute.xlu0 %1734
    %1744 = vrot.lane.b32.xlu0 %v1657, 96
    %v1745 = vpop.permute.xlu0 %1744
    %1746 = vrot.lane.b32.xlu0 %v1660, 96
    %v1747 = vpop.permute.xlu0 %1746
    %1748 = vrot.lane.b32.xlu0 %v1665, 96
    %v1749 = vpop.permute.xlu0 %1748
    %1750 = vrot.lane.b32.xlu0 %v1668, 96
    %v1751 = vpop.permute.xlu0 %1750
    %v1756 = vsel %vm158, %v1556, %v1717
    %v1757 = vsel %vm158, %v1559, %v1719
    %v1758 = vsel %vm158, %v1564, %v1721
    %v1759 = vsel %vm158, %v1567, %v1723
    %vm1760 = vcmask 523264
    %v1761 = vsel %vm1760, %v1756, %v1729
    %v1762 = vsel %vm1760, %v1757, %v1731
    %v1763 = vsel %vm1760, %v1758, %v1733
    %v1764 = vsel %vm1760, %v1759, %v1735
    %vm1765 = vcmask 785408
    %v1766 = vsel %vm1765, %v1761, %v1745
    %v1767 = vsel %vm1765, %v1762, %v1747
    %v1768 = vsel %vm1765, %v1763, %v1749
    %v1769 = vsel %vm1765, %v1764, %v1751
    %v1770 = vpack.c.bf16 %v1767, %v1766
    %v1771 = vpack.c.bf16 %v1769, %v1768
    %v1772 = vld [vmem:[%s9] sm:$0xf]
    %v1773 = vld [vmem:[%s9 + $0x4] sm:$0xf]
    %v1774 = vld [vmem:[%s9 + $0x8] sm:$0xf]
    %v1775 = vld [vmem:[%s9 + $0xc] sm:$0xf]
    %v1776 = vld [vmem:[%s9 + $0x10] sm:$0xf]
    %v1777 = vld [vmem:[%s9 + $0x14] sm:$0xf]
    %v1778 = vld [vmem:[%s9 + $0x18] sm:$0xf]
    %v1779 = vld [vmem:[%s9 + $0x1c] sm:$0xf]
    %v1780 = vld [vmem:[%s9 + $0x20] sm:$0xf]
    %v1781 = vld [vmem:[%s9 + $0x24] sm:$0xf]
    %v1782 = vld [vmem:[%s9 + $0x28] sm:$0xf]
    %v1783 = vld [vmem:[%s9 + $0x2c] sm:$0xf]
    %v1784 = vld [vmem:[%s9 + $0x30] sm:$0xf]
    %v1785 = vld [vmem:[%s9 + $0x34] sm:$0xf]
    %v1786 = vld [vmem:[%s9 + $0x38] sm:$0xf]
    %v1787 = vld [vmem:[%s9 + $0x3c] sm:$0xf]
    %v1788 = vld [vmem:[%s7 + $0x10] sm:$0x1]
    %v1789 = vlaneseq
    %v1790 = vshrl.u32 %v1789, 7
    %v1791 = vsub.s32 0, %v1790
    %v1792 = vrot.slane %v1788, %v1791
    %v1809 = vunpack.c.l.b16 %v1772
    %v1810 = vunpack.c.l.b16 %v1773
    %v1811 = vunpack.c.l.b16 %v1774
    %v1812 = vunpack.c.l.b16 %v1775
    %v1813 = vunpack.c.l.b16 %v1776
    %v1814 = vunpack.c.l.b16 %v1777
    %v1815 = vunpack.c.l.b16 %v1778
    %v1816 = vunpack.c.l.b16 %v1779
    %v1817 = vunpack.c.l.b16 %v1780
    %v1818 = vunpack.c.l.b16 %v1781
    %v1819 = vunpack.c.l.b16 %v1782
    %v1820 = vunpack.c.l.b16 %v1783
    %v1821 = vunpack.c.l.b16 %v1784
    %v1822 = vunpack.c.l.b16 %v1785
    %v1823 = vunpack.c.l.b16 %v1786
    %v1824 = vunpack.c.l.b16 %v1787
    %v1825 = vpack.c.b16 %v1810, %v1809
    %v1826 = vpack.c.b16 %v1812, %v1811
    %v1827 = vpack.c.b16 %v1814, %v1813
    %v1828 = vpack.c.b16 %v1816, %v1815
    %v1829 = vpack.c.b16 %v1818, %v1817
    %v1830 = vpack.c.b16 %v1820, %v1819
    %v1831 = vpack.c.b16 %v1822, %v1821
    %v1832 = vpack.c.b16 %v1824, %v1823
    %1841 = vmatprep.subr.bf16.mxu0 0
    %1842 = vmatpush1.bf16.msra.mxu0 %v1825
    %1843 = vmatprep.subr.bf16.mxu0 0
    %1844 = vmatpush1.bf16.msra.mxu0 %v1826
    %1845 = vmatprep.subr.bf16.mxu0 0
    %1846 = vmatpush1.bf16.msra.mxu0 %v1827
    %1847 = vmatprep.subr.bf16.mxu0 0
    %1848 = vmatpush1.bf16.msra.mxu0 %v1828
    %1849 = vmatprep.subr.bf16.mxu0 0
    %1850 = vmatpush1.bf16.msra.mxu0 %v1829
    %1851 = vmatprep.subr.bf16.mxu0 0
    %1852 = vmatpush1.bf16.msra.mxu0 %v1830
    %1853 = vmatprep.subr.bf16.mxu0 0
    %1854 = vmatpush1.bf16.msra.mxu0 %v1831
    %1855 = vmatprep.subr.bf16.mxu0 0
    %1856 = vmatpush1.bf16.msra.mxu0 %v1832
    %1857 = vmatprep.subr.bf16.mxu0 0
    %1858 = vmatpush1.bf16.msra.mxu0 0
    %1859 = vmatprep.subr.bf16.mxu0 0
    %1860 = vmatpush1.bf16.msra.mxu0 0
    %1861 = vmatprep.subr.bf16.mxu0 0
    %1862 = vmatpush1.bf16.msra.mxu0 0
    %1863 = vmatprep.subr.bf16.mxu0 0
    %1864 = vmatpush1.bf16.msra.mxu0 0
    %1865 = vmatprep.subr.bf16.mxu0 0
    %1866 = vmatpush1.bf16.msra.mxu0 0
    %1867 = vmatprep.subr.bf16.mxu0 0
    %1868 = vmatpush1.bf16.msra.mxu0 0
    %1869 = vmatprep.subr.bf16.mxu0 0
    %1870 = vmatpush1.bf16.msra.mxu0 0
    %1871 = vmatprep.subr.bf16.mxu0 0
    %1872 = vmatpush1.bf16.msra.mxu0 0
    %1873 = vmatprep.mubr.bf16.mxu0 0
    %1874 = vmatmul.mubr.bf16.gmra.mrb[0].mxu0 %v1770
    %v1875 = vpop.f32.mrb[0].mxu0
    %v1876 = vadd.f32 %v1792, %v1875
    %v1877 = vpop.f32.mrb[0].mxu0
    %v1878 = vpop.f32.mrb[0].mxu0
    %v1879 = vadd.f32 %v1792, %v1878
    %v1880 = vpop.f32.mrb[0].mxu0
    %1881 = vmatprep.mubr.bf16.mxu0 0
    %1882 = vmatmul.mubr.bf16.gmra.mrb[0].mxu0 %v1771
    %v1883 = vpop.f32.mrb[0].mxu0
    %v1884 = vadd.f32 %v1792, %v1883
    %v1885 = vpop.f32.mrb[0].mxu0
    %v1886 = vpop.f32.mrb[0].mxu0
    %v1887 = vadd.f32 %v1792, %v1886
    %v1888 = vpop.f32.mrb[0].mxu0
    %1889 = vdwg.mxu0
    %v1890 = vmax.f32 %v1876, 0.0
    %v1891 = vmax.f32 %v1879, 0.0
    %v1892 = vmax.f32 %v1884, 0.0
    %v1893 = vmax.f32 %v1887, 0.0
    %v1894 = vpack.c.bf16 %v1891, %v1890
    %v1895 = vpack.c.bf16 %v1893, %v1892
    %v1896 = vld [vmem:[%s9 + $0x40] sm:$0xf]
    %v1897 = vld [vmem:[%s9 + $0x44] sm:$0xf]
    %v1898 = vld [vmem:[%s9 + $0x48] sm:$0xf]
    %v1899 = vld [vmem:[%s9 + $0x4c] sm:$0xf]
    %v1900 = vld [vmem:[%s7 + $0x11] sm:$0x1]
    %v1901 = vlaneseq
    %v1902 = vshrl.u32 %v1901, 7
    %v1903 = vsub.s32 0, %v1902
    %v1904 = vrot.slane %v1900, %v1903
    %v1909 = vunpack.c.l.b16 %v1896
    %v1910 = vunpack.c.l.b16 %v1897
    %v1911 = vunpack.c.l.b16 %v1898
    %v1912 = vunpack.c.l.b16 %v1899
    %v1913 = vpack.c.b16 %v1910, %v1909
    %v1914 = vpack.c.b16 %v1912, %v1911
    %v1918 = vsel %vm158, %v1894, 0
    %v1921 = vsel %vm158, %v1895, 0
    %1923 = vmatprep.subr.bf16.mxu0 0
    %1924 = vmatpush1.bf16.msra.mxu0 %v1913
    %1925 = vmatprep.subr.bf16.mxu0 0
    %1926 = vmatpush1.bf16.msra.mxu0 %v1914
    %1927 = vmatprep.subr.bf16.mxu0 0
    %1928 = vmatpush1.bf16.msra.mxu0 0
    %1929 = vmatprep.subr.bf16.mxu0 0
    %1930 = vmatpush1.bf16.msra.mxu0 0
    %1931 = vmatprep.subr.bf16.mxu0 0
    %1932 = vmatpush1.bf16.msra.mxu0 0
    %1933 = vmatprep.subr.bf16.mxu0 0
    %1934 = vmatpush1.bf16.msra.mxu0 0
    %1935 = vmatprep.subr.bf16.mxu0 0
    %1936 = vmatpush1.bf16.msra.mxu0 0
    %1937 = vmatprep.subr.bf16.mxu0 0
    %1938 = vmatpush1.bf16.msra.mxu0 0
    %1939 = vmatprep.subr.bf16.mxu0 0
    %1940 = vmatpush1.bf16.msra.mxu0 0
    %1941 = vmatprep.subr.bf16.mxu0 0
    %1942 = vmatpush1.bf16.msra.mxu0 0
    %1943 = vmatprep.subr.bf16.mxu0 0
    %1944 = vmatpush1.bf16.msra.mxu0 0
    %1945 = vmatprep.subr.bf16.mxu0 0
    %1946 = vmatpush1.bf16.msra.mxu0 0
    %1947 = vmatprep.subr.bf16.mxu0 0
    %1948 = vmatpush1.bf16.msra.mxu0 0
    %1949 = vmatprep.subr.bf16.mxu0 0
    %1950 = vmatpush1.bf16.msra.mxu0 0
    %1951 = vmatprep.subr.bf16.mxu0 0
    %1952 = vmatpush1.bf16.msra.mxu0 0
    %1953 = vmatprep.subr.bf16.mxu0 0
    %1954 = vmatpush1.bf16.msra.mxu0 0
    %1955 = vmatprep.mubr.bf16.mxu0 0
    %1956 = vmatmul.mubr.bf16.gmra.mrb[0].mxu0 %v1918
    %v1957 = vpop.f32.mrb[0].mxu0
    %v1958 = vadd.f32 %v1904, %v1957
    %v1959 = vpop.f32.mrb[0].mxu0
    %v1960 = vpop.f32.mrb[0].mxu0
    %v1961 = vadd.f32 %v1904, %v1960
    %v1962 = vpop.f32.mrb[0].mxu0
    %1963 = vmatprep.mubr.bf16.mxu0 0
    %1964 = vmatmul.mubr.bf16.gmra.mrb[0].mxu0 %v1921
    %v1965 = vpop.f32.mrb[0].mxu0
    %v1966 = vadd.f32 %v1904, %v1965
    %v1967 = vpop.f32.mrb[0].mxu0
    %v1968 = vpop.f32.mrb[0].mxu0
    %v1969 = vadd.f32 %v1904, %v1968
    %v1970 = vpop.f32.mrb[0].mxu0
    %1971 = vdwg.mxu0
    %v1972 = vsel %vm158, %v1958, 0.0
    %1973 = vadd.xlane.f32.xlu0 %v1972
    %v1974 = vpop.xlane.xlu0 %1973
    %v1975 = vsel %vm158, %v1961, 0.0
    %1976 = vadd.xlane.f32.xlu0 %v1975
    %v1977 = vpop.xlane.xlu0 %1976
    %v1978 = vsel %vm158, %v1966, 0.0
    %1979 = vadd.xlane.f32.xlu0 %v1978
    %v1980 = vpop.xlane.xlu0 %1979
    %v1981 = vsel %vm158, %v1969, 0.0
    %1982 = vadd.xlane.f32.xlu0 %v1981
    %v1983 = vpop.xlane.xlu0 %1982
    %v1984 = vmul.f32 %v1974, %v634
    %v1985 = vmul.f32 %v1977, %v634
    %v1986 = vmul.f32 %v1980, %v634
    %v1987 = vmul.f32 %v1983, %v634
    %v1988 = vmul.f32 %v1958, %v1958
    %v1989 = vmul.f32 %v1961, %v1961
    %v1990 = vmul.f32 %v1966, %v1966
    %v1991 = vmul.f32 %v1969, %v1969
    %v1992 = vsel %vm158, %v1988, 0.0
    %1993 = vadd.xlane.f32.xlu0 %v1992
    %v1994 = vpop.xlane.xlu0 %1993
    %v1995 = vsel %vm158, %v1989, 0.0
    %1996 = vadd.xlane.f32.xlu0 %v1995
    %v1997 = vpop.xlane.xlu0 %1996
    %v1998 = vsel %vm158, %v1990, 0.0
    %1999 = vadd.xlane.f32.xlu0 %v1998
    %v2000 = vpop.xlane.xlu0 %1999
    %v2001 = vsel %vm158, %v1991, 0.0
    %2002 = vadd.xlane.f32.xlu0 %v2001
    %v2003 = vpop.xlane.xlu0 %2002
    %v2004 = vmul.f32 %v1994, %v634
    %v2005 = vmul.f32 %v1997, %v634
    %v2006 = vmul.f32 %v2000, %v634
    %v2007 = vmul.f32 %v2003, %v634
    %v2008 = vmul.f32 %v1984, %v1984
    %v2009 = vmul.f32 %v1985, %v1985
    %v2010 = vmul.f32 %v1986, %v1986
    %v2011 = vmul.f32 %v1987, %v1987
    %v2012 = vsub.f32 %v2004, %v2008
    %v2013 = vsub.f32 %v2005, %v2009
    %v2014 = vsub.f32 %v2006, %v2010
    %v2015 = vsub.f32 %v2007, %v2011
    %v2016 = vmax.f32 %v2012, 0.0
    %v2017 = vmax.f32 %v2013, 0.0
    %v2018 = vmax.f32 %v2014, 0.0
    %v2019 = vmax.f32 %v2015, 0.0
    %v2020 = vsub.f32 %v1958, %v1984
    %v2021 = vsub.f32 %v1961, %v1985
    %v2022 = vsub.f32 %v1966, %v1986
    %v2023 = vsub.f32 %v1969, %v1987
    %v2024 = vadd.f32 %v2016, 1e-05
    %v2025 = vadd.f32 %v2017, 1e-05
    %v2026 = vadd.f32 %v2018, 1e-05
    %v2027 = vadd.f32 %v2019, 1e-05
    %v2028 = vrsqrt.pop %v2024
    %v2029 = vrsqrt.pop %v2025
    %v2030 = vrsqrt.pop %v2026
    %v2031 = vrsqrt.pop %v2027
    %v2032 = vmul.f32 %v2020, %v2028
    %v2033 = vmul.f32 %v2021, %v2029
    %v2034 = vmul.f32 %v2022, %v2030
    %v2035 = vmul.f32 %v2023, %v2031
    %v2036 = vld [vmem:[%s7 + $0x12] sm:$0x1]
    %v2037 = vlaneseq
    %v2038 = vshrl.u32 %v2037, 7
    %v2039 = vsub.s32 0, %v2038
    %v2040 = vrot.slane %v2036, %v2039
    %v2041 = vmul.f32 %v2032, %v2040
    %v2042 = vmul.f32 %v2033, %v2040
    %v2043 = vmul.f32 %v2034, %v2040
    %v2044 = vmul.f32 %v2035, %v2040
    %v2045 = vld [vmem:[%s7 + $0x13] sm:$0x1]
    %v2046 = vlaneseq
    %v2047 = vshrl.u32 %v2046, 7
    %v2048 = vsub.s32 0, %v2047
    %v2049 = vrot.slane %v2045, %v2048
    %v2050 = vadd.f32 %v2041, %v2049
    %v2051 = vadd.f32 %v2042, %v2049
    %v2052 = vadd.f32 %v2043, %v2049
    %v2053 = vadd.f32 %v2044, %v2049
    %2058 = vrot.lane.b32.xlu0 %v2050, 32
    %v2059 = vpop.permute.xlu0 %2058
    %2060 = vrot.lane.b32.xlu0 %v2051, 32
    %v2061 = vpop.permute.xlu0 %2060
    %2062 = vrot.lane.b32.xlu0 %v2052, 32
    %v2063 = vpop.permute.xlu0 %2062
    %2064 = vrot.lane.b32.xlu0 %v2053, 32
    %v2065 = vpop.permute.xlu0 %2064
    %v2070 = vsel %vm158, %v1605, %v2059
    %v2071 = vsel %vm158, %v1608, %v2061
    %v2072 = vsel %vm158, %v1613, %v2063
    %v2073 = vsel %vm158, %v1616, %v2065
    %v2074 = vpack.c.bf16 %v2071, %v2070
    %v2075 = vpack.c.bf16 %v2073, %v2072
    %v2076 = vld [vmem:[%s9 + $0x50] sm:$0xf]
    %v2077 = vld [vmem:[%s9 + $0x54] sm:$0xf]
    %v2078 = vld [vmem:[%s9 + $0x58] sm:$0xf]
    %v2079 = vld [vmem:[%s9 + $0x5c] sm:$0xf]
    %v2080 = vld [vmem:[%s9 + $0x60] sm:$0xf]
    %v2081 = vld [vmem:[%s9 + $0x64] sm:$0xf]
    %v2082 = vld [vmem:[%s9 + $0x68] sm:$0xf]
    %v2083 = vld [vmem:[%s9 + $0x6c] sm:$0xf]
    %v2084 = vld [vmem:[%s7 + $0x14] sm:$0x1]
    %v2085 = vlaneseq
    %v2086 = vshrl.u32 %v2085, 7
    %v2087 = vsub.s32 0, %v2086
    %v2088 = vrot.slane %v2084, %v2087
    %v2097 = vunpack.c.l.b16 %v2076
    %v2098 = vunpack.c.l.b16 %v2077
    %v2099 = vunpack.c.l.b16 %v2078
    %v2100 = vunpack.c.l.b16 %v2079
    %v2101 = vunpack.c.l.b16 %v2080
    %v2102 = vunpack.c.l.b16 %v2081
    %v2103 = vunpack.c.l.b16 %v2082
    %v2104 = vunpack.c.l.b16 %v2083
    %v2105 = vpack.c.b16 %v2098, %v2097
    %v2106 = vpack.c.b16 %v2100, %v2099
    %v2107 = vpack.c.b16 %v2102, %v2101
    %v2108 = vpack.c.b16 %v2104, %v2103
    %v2114 = vsel %vm1760, %v2074, 0
    %v2117 = vsel %vm1760, %v2075, 0
    %2119 = vmatprep.subr.bf16.mxu0 0
    %2120 = vmatpush1.bf16.msra.mxu0 %v2105
    %2121 = vmatprep.subr.bf16.mxu0 0
    %2122 = vmatpush1.bf16.msra.mxu0 %v2106
    %2123 = vmatprep.subr.bf16.mxu0 0
    %2124 = vmatpush1.bf16.msra.mxu0 %v2107
    %2125 = vmatprep.subr.bf16.mxu0 0
    %2126 = vmatpush1.bf16.msra.mxu0 %v2108
    %2127 = vmatprep.subr.bf16.mxu0 0
    %2128 = vmatpush1.bf16.msra.mxu0 0
    %2129 = vmatprep.subr.bf16.mxu0 0
    %2130 = vmatpush1.bf16.msra.mxu0 0
    %2131 = vmatprep.subr.bf16.mxu0 0
    %2132 = vmatpush1.bf16.msra.mxu0 0
    %2133 = vmatprep.subr.bf16.mxu0 0
    %2134 = vmatpush1.bf16.msra.mxu0 0
    %2135 = vmatprep.subr.bf16.mxu0 0
    %2136 = vmatpush1.bf16.msra.mxu0 0
    %2137 = vmatprep.subr.bf16.mxu0 0
    %2138 = vmatpush1.bf16.msra.mxu0 0
    %2139 = vmatprep.subr.bf16.mxu0 0
    %2140 = vmatpush1.bf16.msra.mxu0 0
    %2141 = vmatprep.subr.bf16.mxu0 0
    %2142 = vmatpush1.bf16.msra.mxu0 0
    %2143 = vmatprep.subr.bf16.mxu0 0
    %2144 = vmatpush1.bf16.msra.mxu0 0
    %2145 = vmatprep.subr.bf16.mxu0 0
    %2146 = vmatpush1.bf16.msra.mxu0 0
    %2147 = vmatprep.subr.bf16.mxu0 0
    %2148 = vmatpush1.bf16.msra.mxu0 0
    %2149 = vmatprep.subr.bf16.mxu0 0
    %2150 = vmatpush1.bf16.msra.mxu0 0
    %2151 = vmatprep.mubr.bf16.mxu0 0
    %2152 = vmatmul.mubr.bf16.gmra.mrb[0].mxu0 %v2114
    %v2153 = vpop.f32.mrb[0].mxu0
    %v2154 = vadd.f32 %v2088, %v2153
    %v2155 = vpop.f32.mrb[0].mxu0
    %v2156 = vpop.f32.mrb[0].mxu0
    %v2157 = vadd.f32 %v2088, %v2156
    %v2158 = vpop.f32.mrb[0].mxu0
    %2159 = vmatprep.mubr.bf16.mxu0 0
    %2160 = vmatmul.mubr.bf16.gmra.mrb[0].mxu0 %v2117
    %v2161 = vpop.f32.mrb[0].mxu0
    %v2162 = vadd.f32 %v2088, %v2161
    %v2163 = vpop.f32.mrb[0].mxu0
    %v2164 = vpop.f32.mrb[0].mxu0
    %v2165 = vadd.f32 %v2088, %v2164
    %v2166 = vpop.f32.mrb[0].mxu0
    %2167 = vdwg.mxu0
    %v2168 = vmax.f32 %v2154, 0.0
    %v2169 = vmax.f32 %v2157, 0.0
    %v2170 = vmax.f32 %v2162, 0.0
    %v2171 = vmax.f32 %v2165, 0.0
    %v2172 = vpack.c.bf16 %v2169, %v2168
    %v2173 = vpack.c.bf16 %v2171, %v2170
    %v2174 = vld [vmem:[%s9 + $0x70] sm:$0xf]
    %v2175 = vld [vmem:[%s9 + $0x74] sm:$0xf]
    %v2176 = vld [vmem:[%s9 + $0x78] sm:$0xf]
    %v2177 = vld [vmem:[%s9 + $0x7c] sm:$0xf]
    %v2178 = vld [vmem:[%s7 + $0x15] sm:$0x1]
    %v2179 = vlaneseq
    %v2180 = vshrl.u32 %v2179, 7
    %v2181 = vsub.s32 0, %v2180
    %v2182 = vrot.slane %v2178, %v2181
    %v2187 = vunpack.c.l.b16 %v2174
    %v2188 = vunpack.c.l.b16 %v2175
    %v2189 = vunpack.c.l.b16 %v2176
    %v2190 = vunpack.c.l.b16 %v2177
    %v2191 = vpack.c.b16 %v2188, %v2187
    %v2192 = vpack.c.b16 %v2190, %v2189
    %v2196 = vsel %vm158, %v2172, 0
    %v2199 = vsel %vm158, %v2173, 0
    %2201 = vmatprep.subr.bf16.mxu0 0
    %2202 = vmatpush1.bf16.msra.mxu0 %v2191
    %2203 = vmatprep.subr.bf16.mxu0 0
    %2204 = vmatpush1.bf16.msra.mxu0 %v2192
    %2205 = vmatprep.subr.bf16.mxu0 0
    %2206 = vmatpush1.bf16.msra.mxu0 0
    %2207 = vmatprep.subr.bf16.mxu0 0
    %2208 = vmatpush1.bf16.msra.mxu0 0
    %2209 = vmatprep.subr.bf16.mxu0 0
    %2210 = vmatpush1.bf16.msra.mxu0 0
    %2211 = vmatprep.subr.bf16.mxu0 0
    %2212 = vmatpush1.bf16.msra.mxu0 0
    %2213 = vmatprep.subr.bf16.mxu0 0
    %2214 = vmatpush1.bf16.msra.mxu0 0
    %2215 = vmatprep.subr.bf16.mxu0 0
    %2216 = vmatpush1.bf16.msra.mxu0 0
    %2217 = vmatprep.subr.bf16.mxu0 0
    %2218 = vmatpush1.bf16.msra.mxu0 0
    %2219 = vmatprep.subr.bf16.mxu0 0
    %2220 = vmatpush1.bf16.msra.mxu0 0
    %2221 = vmatprep.subr.bf16.mxu0 0
    %2222 = vmatpush1.bf16.msra.mxu0 0
    %2223 = vmatprep.subr.bf16.mxu0 0
    %2224 = vmatpush1.bf16.msra.mxu0 0
    %2225 = vmatprep.subr.bf16.mxu0 0
    %2226 = vmatpush1.bf16.msra.mxu0 0
    %2227 = vmatprep.subr.bf16.mxu0 0
    %2228 = vmatpush1.bf16.msra.mxu0 0
    %2229 = vmatprep.subr.bf16.mxu0 0
    %2230 = vmatpush1.bf16.msra.mxu0 0
    %2231 = vmatprep.subr.bf16.mxu0 0
    %2232 = vmatpush1.bf16.msra.mxu0 0
    %2233 = vmatprep.mubr.bf16.mxu0 0
    %2234 = vmatmul.mubr.bf16.gmra.mrb[0].mxu0 %v2196
    %v2235 = vpop.f32.mrb[0].mxu0
    %v2236 = vadd.f32 %v2182, %v2235
    %v2237 = vpop.f32.mrb[0].mxu0
    %v2238 = vpop.f32.mrb[0].mxu0
    %v2239 = vadd.f32 %v2182, %v2238
    %v2240 = vpop.f32.mrb[0].mxu0
    %2241 = vmatprep.mubr.bf16.mxu0 0
    %2242 = vmatmul.mubr.bf16.gmra.mrb[0].mxu0 %v2199
    %v2243 = vpop.f32.mrb[0].mxu0
    %v2244 = vadd.f32 %v2182, %v2243
    %v2245 = vpop.f32.mrb[0].mxu0
    %v2246 = vpop.f32.mrb[0].mxu0
    %v2247 = vadd.f32 %v2182, %v2246
    %v2248 = vpop.f32.mrb[0].mxu0
    %2249 = vdwg.mxu0
    %v2250 = vsel %vm158, %v2236, 0.0
    %2251 = vadd.xlane.f32.xlu0 %v2250
    %v2252 = vpop.xlane.xlu0 %2251
    %v2253 = vsel %vm158, %v2239, 0.0
    %2254 = vadd.xlane.f32.xlu0 %v2253
    %v2255 = vpop.xlane.xlu0 %2254
    %v2256 = vsel %vm158, %v2244, 0.0
    %2257 = vadd.xlane.f32.xlu0 %v2256
    %v2258 = vpop.xlane.xlu0 %2257
    %v2259 = vsel %vm158, %v2247, 0.0
    %2260 = vadd.xlane.f32.xlu0 %v2259
    %v2261 = vpop.xlane.xlu0 %2260
    %v2262 = vmul.f32 %v2252, %v634
    %v2263 = vmul.f32 %v2255, %v634
    %v2264 = vmul.f32 %v2258, %v634
    %v2265 = vmul.f32 %v2261, %v634
    %v2266 = vmul.f32 %v2236, %v2236
    %v2267 = vmul.f32 %v2239, %v2239
    %v2268 = vmul.f32 %v2244, %v2244
    %v2269 = vmul.f32 %v2247, %v2247
    %v2270 = vsel %vm158, %v2266, 0.0
    %2271 = vadd.xlane.f32.xlu0 %v2270
    %v2272 = vpop.xlane.xlu0 %2271
    %v2273 = vsel %vm158, %v2267, 0.0
    %2274 = vadd.xlane.f32.xlu0 %v2273
    %v2275 = vpop.xlane.xlu0 %2274
    %v2276 = vsel %vm158, %v2268, 0.0
    %2277 = vadd.xlane.f32.xlu0 %v2276
    %v2278 = vpop.xlane.xlu0 %2277
    %v2279 = vsel %vm158, %v2269, 0.0
    %2280 = vadd.xlane.f32.xlu0 %v2279
    %v2281 = vpop.xlane.xlu0 %2280
    %v2282 = vmul.f32 %v2272, %v634
    %v2283 = vmul.f32 %v2275, %v634
    %v2284 = vmul.f32 %v2278, %v634
    %v2285 = vmul.f32 %v2281, %v634
    %v2286 = vmul.f32 %v2262, %v2262
    %v2287 = vmul.f32 %v2263, %v2263
    %v2288 = vmul.f32 %v2264, %v2264
    %v2289 = vmul.f32 %v2265, %v2265
    %v2290 = vsub.f32 %v2282, %v2286
    %v2291 = vsub.f32 %v2283, %v2287
    %v2292 = vsub.f32 %v2284, %v2288
    %v2293 = vsub.f32 %v2285, %v2289
    %v2294 = vmax.f32 %v2290, 0.0
    %v2295 = vmax.f32 %v2291, 0.0
    %v2296 = vmax.f32 %v2292, 0.0
    %v2297 = vmax.f32 %v2293, 0.0
    %v2298 = vsub.f32 %v2236, %v2262
    %v2299 = vsub.f32 %v2239, %v2263
    %v2300 = vsub.f32 %v2244, %v2264
    %v2301 = vsub.f32 %v2247, %v2265
    %v2302 = vadd.f32 %v2294, 1e-05
    %v2303 = vadd.f32 %v2295, 1e-05
    %v2304 = vadd.f32 %v2296, 1e-05
    %v2305 = vadd.f32 %v2297, 1e-05
    %v2306 = vrsqrt.pop %v2302
    %v2307 = vrsqrt.pop %v2303
    %v2308 = vrsqrt.pop %v2304
    %v2309 = vrsqrt.pop %v2305
    %v2310 = vmul.f32 %v2298, %v2306
    %v2311 = vmul.f32 %v2299, %v2307
    %v2312 = vmul.f32 %v2300, %v2308
    %v2313 = vmul.f32 %v2301, %v2309
    %v2314 = vld [vmem:[%s7 + $0x16] sm:$0x1]
    %v2315 = vlaneseq
    %v2316 = vshrl.u32 %v2315, 7
    %v2317 = vsub.s32 0, %v2316
    %v2318 = vrot.slane %v2314, %v2317
    %v2319 = vmul.f32 %v2310, %v2318
    %v2320 = vmul.f32 %v2311, %v2318
    %v2321 = vmul.f32 %v2312, %v2318
    %v2322 = vmul.f32 %v2313, %v2318
    %v2323 = vld [vmem:[%s7 + $0x17] sm:$0x1]
    %v2324 = vlaneseq
    %v2325 = vshrl.u32 %v2324, 7
    %v2326 = vsub.s32 0, %v2325
    %v2327 = vrot.slane %v2323, %v2326
    %v2328 = vadd.f32 %v2319, %v2327
    %v2329 = vadd.f32 %v2320, %v2327
    %v2330 = vadd.f32 %v2321, %v2327
    %v2331 = vadd.f32 %v2322, %v2327
    %v2332 = vpack.c.bf16 %v2329, %v2328
    %v2333 = vpack.c.bf16 %v2331, %v2330
    %2334 = vmatprep.subr.bf16.mxu0 0
    %2335 = vmatpush1.bf16.msra.mxu0 %v2332
    %2336 = vmatprep.subr.bf16.mxu0 0
    %2337 = vmatpush1.bf16.msra.mxu0 %v2333
    %2338 = vmatprep.subr.bf16.mxu0 0
    %2339 = vmatpush1.bf16.msra.mxu0 0
    %2340 = vmatprep.subr.bf16.mxu0 0
    %2341 = vmatpush1.bf16.msra.mxu0 0
    %2342 = vmatprep.subr.bf16.mxu0 0
    %2343 = vmatpush1.bf16.msra.mxu0 0
    %2344 = vmatprep.subr.bf16.mxu0 0
    %2345 = vmatpush1.bf16.msra.mxu0 0
    %2346 = vmatprep.subr.bf16.mxu0 0
    %2347 = vmatpush1.bf16.msra.mxu0 0
    %2348 = vmatprep.subr.bf16.mxu0 0
    %2349 = vmatpush1.bf16.msra.mxu0 0
    %2350 = vmatprep.subr.bf16.mxu0 0
    %2351 = vmatpush1.bf16.msra.mxu0 0
    %2352 = vmatprep.subr.bf16.mxu0 0
    %2353 = vmatpush1.bf16.msra.mxu0 0
    %2354 = vmatprep.subr.bf16.mxu0 0
    %2355 = vmatpush1.bf16.msra.mxu0 0
    %2356 = vmatprep.subr.bf16.mxu0 0
    %2357 = vmatpush1.bf16.msra.mxu0 0
    %2358 = vmatprep.subr.bf16.mxu0 0
    %2359 = vmatpush1.bf16.msra.mxu0 0
    %2360 = vmatprep.subr.bf16.mxu0 0
    %2361 = vmatpush1.bf16.msra.mxu0 0
    %2362 = vmatprep.subr.bf16.mxu0 0
    %2363 = vmatpush1.bf16.msra.mxu0 0
    %2364 = vmatprep.subr.bf16.mxu0 0
    %2365 = vmatpush1.bf16.msra.mxu0 0
    %2366 = vmatprep.mubr.bf16.mxu0 0
    %2367 = vmatmul.mubr.bf16.gmra.mrb[0].mxu0 %v978
    %v2368 = vpop.f32.mrb[0].mxu0
    %v2369 = vadd.f32 0.0, %v2368
    %v2370 = vpop.f32.mrb[0].mxu0
    %v2371 = vpop.f32.mrb[0].mxu0
    %v2372 = vadd.f32 0.0, %v2371
    %v2373 = vpop.f32.mrb[0].mxu0
    %2374 = vdwg.mxu0
    %v2375 = vmul.f32 %v2369, %v168
    %v2376 = vmul.f32 %v2372, %v170
    %2379 = vrot.lane.b32.xlu0 %v2375, 32
    %v2380 = vpop.permute.xlu0 %2379
    %2381 = vrot.lane.b32.xlu0 %v2376, 32
    %v2382 = vpop.permute.xlu0 %2381
    %2387 = vrot.lane.b32.xlu0 %v1706, 64
    %v2388 = vpop.permute.xlu0 %2387
    %2389 = vrot.lane.b32.xlu0 %v1709, 64
    %v2390 = vpop.permute.xlu0 %2389
    %v2393 = vsel %vm158, %v1233, %v2380
    %v2394 = vsel %vm158, %v1234, %v2382
    %v2395 = vsel %vm1760, %v2393, %v2388
    %v2396 = vsel %vm1760, %v2394, %v2390
    %v2397 = vpack.c.bf16 %v2396, %v2395
    %v2398 = vld [vmem:[%s9 + $0x80] sm:$0xf]
    %v2399 = vld [vmem:[%s9 + $0x84] sm:$0xf]
    %v2400 = vld [vmem:[%s9 + $0x88] sm:$0xf]
    %v2401 = vld [vmem:[%s9 + $0x8c] sm:$0xf]
    %v2402 = vld [vmem:[%s9 + $0x90] sm:$0xf]
    %v2403 = vld [vmem:[%s9 + $0x94] sm:$0xf]
    %v2404 = vld [vmem:[%s9 + $0x98] sm:$0xf]
    %v2405 = vld [vmem:[%s9 + $0x9c] sm:$0xf]
    %v2406 = vld [vmem:[%s9 + $0xa0] sm:$0xf]
    %v2407 = vld [vmem:[%s9 + $0xa4] sm:$0xf]
    %v2408 = vld [vmem:[%s9 + $0xa8] sm:$0xf]
    %v2409 = vld [vmem:[%s9 + $0xac] sm:$0xf]
    %v2410 = vld [vmem:[%s7 + $0x18] sm:$0x1]
    %v2411 = vlaneseq
    %v2412 = vshrl.u32 %v2411, 7
    %v2413 = vsub.s32 0, %v2412
    %v2414 = vrot.slane %v2410, %v2413
    %v2427 = vunpack.c.l.b16 %v2398
    %v2428 = vunpack.c.l.b16 %v2399
    %v2429 = vunpack.c.l.b16 %v2400
    %v2430 = vunpack.c.l.b16 %v2401
    %v2431 = vunpack.c.l.b16 %v2402
    %v2432 = vunpack.c.l.b16 %v2403
    %v2433 = vunpack.c.l.b16 %v2404
    %v2434 = vunpack.c.l.b16 %v2405
    %v2435 = vunpack.c.l.b16 %v2406
    %v2436 = vunpack.c.l.b16 %v2407
    %v2437 = vunpack.c.l.b16 %v2408
    %v2438 = vunpack.c.l.b16 %v2409
    %v2439 = vpack.c.b16 %v2428, %v2427
    %v2440 = vpack.c.b16 %v2430, %v2429
    %v2441 = vpack.c.b16 %v2432, %v2431
    %v2442 = vpack.c.b16 %v2434, %v2433
    %v2443 = vpack.c.b16 %v2436, %v2435
    %v2444 = vpack.c.b16 %v2438, %v2437
    %v2452 = vsel %vm1765, %v2397, 0
    %2454 = vmatprep.subr.bf16.mxu0 0
    %2455 = vmatpush1.bf16.msra.mxu0 %v2439
    %2456 = vmatprep.subr.bf16.mxu0 0
    %2457 = vmatpush1.bf16.msra.mxu0 %v2440
    %2458 = vmatprep.subr.bf16.mxu0 0
    %2459 = vmatpush1.bf16.msra.mxu0 %v2441
    %2460 = vmatprep.subr.bf16.mxu0 0
    %2461 = vmatpush1.bf16.msra.mxu0 %v2442
    %2462 = vmatprep.subr.bf16.mxu0 0
    %2463 = vmatpush1.bf16.msra.mxu0 %v2443
    %2464 = vmatprep.subr.bf16.mxu0 0
    %2465 = vmatpush1.bf16.msra.mxu0 %v2444
    %2466 = vmatprep.subr.bf16.mxu0 0
    %2467 = vmatpush1.bf16.msra.mxu0 0
    %2468 = vmatprep.subr.bf16.mxu0 0
    %2469 = vmatpush1.bf16.msra.mxu0 0
    %2470 = vmatprep.subr.bf16.mxu0 0
    %2471 = vmatpush1.bf16.msra.mxu0 0
    %2472 = vmatprep.subr.bf16.mxu0 0
    %2473 = vmatpush1.bf16.msra.mxu0 0
    %2474 = vmatprep.subr.bf16.mxu0 0
    %2475 = vmatpush1.bf16.msra.mxu0 0
    %2476 = vmatprep.subr.bf16.mxu0 0
    %2477 = vmatpush1.bf16.msra.mxu0 0
    %2478 = vmatprep.subr.bf16.mxu0 0
    %2479 = vmatpush1.bf16.msra.mxu0 0
    %2480 = vmatprep.subr.bf16.mxu0 0
    %2481 = vmatpush1.bf16.msra.mxu0 0
    %2482 = vmatprep.subr.bf16.mxu0 0
    %2483 = vmatpush1.bf16.msra.mxu0 0
    %2484 = vmatprep.subr.bf16.mxu0 0
    %2485 = vmatpush1.bf16.msra.mxu0 0
    %2486 = vmatprep.mubr.bf16.mxu0 0
    %2487 = vmatmul.mubr.bf16.gmra.mrb[0].mxu0 %v2452
    %v2488 = vpop.f32.mrb[0].mxu0
    %v2489 = vadd.f32 %v2414, %v2488
    %v2490 = vpop.f32.mrb[0].mxu0
    %v2491 = vpop.f32.mrb[0].mxu0
    %v2492 = vadd.f32 %v2414, %v2491
    %v2493 = vpop.f32.mrb[0].mxu0
    %2494 = vdwg.mxu0
    %v2495 = vmax.f32 %v2489, 0.0
    %v2496 = vmax.f32 %v2492, 0.0
    %v2497 = vpack.c.bf16 %v2496, %v2495
    %v2498 = vld [vmem:[%s9 + $0xb0] sm:$0xf]
    %v2499 = vld [vmem:[%s9 + $0xb4] sm:$0xf]
    %v2500 = vld [vmem:[%s9 + $0xb8] sm:$0xf]
    %v2501 = vld [vmem:[%s9 + $0xbc] sm:$0xf]
    %v2502 = vld [vmem:[%s7 + $0x19] sm:$0x1]
    %v2503 = vlaneseq
    %v2504 = vshrl.u32 %v2503, 7
    %v2505 = vsub.s32 0, %v2504
    %v2506 = vrot.slane %v2502, %v2505
    %v2511 = vunpack.c.l.b16 %v2498
    %v2512 = vunpack.c.l.b16 %v2499
    %v2513 = vunpack.c.l.b16 %v2500
    %v2514 = vunpack.c.l.b16 %v2501
    %v2515 = vpack.c.b16 %v2512, %v2511
    %v2516 = vpack.c.b16 %v2514, %v2513
    %v2520 = vsel %vm158, %v2497, 0
    %2522 = vmatprep.subr.bf16.mxu0 0
    %2523 = vmatpush1.bf16.msra.mxu0 %v2515
    %2524 = vmatprep.subr.bf16.mxu0 0
    %2525 = vmatpush1.bf16.msra.mxu0 %v2516
    %2526 = vmatprep.subr.bf16.mxu0 0
    %2527 = vmatpush1.bf16.msra.mxu0 0
    %2528 = vmatprep.subr.bf16.mxu0 0
    %2529 = vmatpush1.bf16.msra.mxu0 0
    %2530 = vmatprep.subr.bf16.mxu0 0
    %2531 = vmatpush1.bf16.msra.mxu0 0
    %2532 = vmatprep.subr.bf16.mxu0 0
    %2533 = vmatpush1.bf16.msra.mxu0 0
    %2534 = vmatprep.subr.bf16.mxu0 0
    %2535 = vmatpush1.bf16.msra.mxu0 0
    %2536 = vmatprep.subr.bf16.mxu0 0
    %2537 = vmatpush1.bf16.msra.mxu0 0
    %2538 = vmatprep.subr.bf16.mxu0 0
    %2539 = vmatpush1.bf16.msra.mxu0 0
    %2540 = vmatprep.subr.bf16.mxu0 0
    %2541 = vmatpush1.bf16.msra.mxu0 0
    %2542 = vmatprep.subr.bf16.mxu0 0
    %2543 = vmatpush1.bf16.msra.mxu0 0
    %2544 = vmatprep.subr.bf16.mxu0 0
    %2545 = vmatpush1.bf16.msra.mxu0 0
    %2546 = vmatprep.subr.bf16.mxu0 0
    %2547 = vmatpush1.bf16.msra.mxu0 0
    %2548 = vmatprep.subr.bf16.mxu0 0
    %2549 = vmatpush1.bf16.msra.mxu0 0
    %2550 = vmatprep.subr.bf16.mxu0 0
    %2551 = vmatpush1.bf16.msra.mxu0 0
    %2552 = vmatprep.subr.bf16.mxu0 0
    %2553 = vmatpush1.bf16.msra.mxu0 0
    %2554 = vmatprep.mubr.bf16.mxu0 0
    %2555 = vmatmul.mubr.bf16.gmra.mrb[0].mxu0 %v2520
    %v2556 = vpop.f32.mrb[0].mxu0
    %v2557 = vadd.f32 %v2506, %v2556
    %v2558 = vpop.f32.mrb[0].mxu0
    %v2559 = vpop.f32.mrb[0].mxu0
    %v2560 = vadd.f32 %v2506, %v2559
    %v2561 = vpop.f32.mrb[0].mxu0
    %2562 = vdwg.mxu0
    %v2563 = vsel %vm158, %v2557, 0.0
    %2564 = vadd.xlane.f32.xlu0 %v2563
    %v2565 = vpop.xlane.xlu0 %2564
    %v2566 = vsel %vm158, %v2560, 0.0
    %2567 = vadd.xlane.f32.xlu0 %v2566
    %v2568 = vpop.xlane.xlu0 %2567
    %v2569 = vmul.f32 %v2565, %v634
    %v2570 = vmul.f32 %v2568, %v634
    %v2571 = vmul.f32 %v2557, %v2557
    %v2572 = vmul.f32 %v2560, %v2560
    %v2573 = vsel %vm158, %v2571, 0.0
    %2574 = vadd.xlane.f32.xlu0 %v2573
    %v2575 = vpop.xlane.xlu0 %2574
    %v2576 = vsel %vm158, %v2572, 0.0
    %2577 = vadd.xlane.f32.xlu0 %v2576
    %v2578 = vpop.xlane.xlu0 %2577
    %v2579 = vmul.f32 %v2575, %v634
    %v2580 = vmul.f32 %v2578, %v634
    %v2581 = vmul.f32 %v2569, %v2569
    %v2582 = vmul.f32 %v2570, %v2570
    %v2583 = vsub.f32 %v2579, %v2581
    %v2584 = vsub.f32 %v2580, %v2582
    %v2585 = vmax.f32 %v2583, 0.0
    %v2586 = vmax.f32 %v2584, 0.0
    %v2587 = vsub.f32 %v2557, %v2569
    %v2588 = vsub.f32 %v2560, %v2570
    %v2589 = vadd.f32 %v2585, 1e-05
    %v2590 = vadd.f32 %v2586, 1e-05
    %v2591 = vrsqrt.pop %v2589
    %v2592 = vrsqrt.pop %v2590
    %v2593 = vmul.f32 %v2587, %v2591
    %v2594 = vmul.f32 %v2588, %v2592
    %v2595 = vld [vmem:[%s7 + $0x1a] sm:$0x1]
    %v2596 = vlaneseq
    %v2597 = vshrl.u32 %v2596, 7
    %v2598 = vsub.s32 0, %v2597
    %v2599 = vrot.slane %v2595, %v2598
    %v2600 = vmul.f32 %v2593, %v2599
    %v2601 = vmul.f32 %v2594, %v2599
    %v2602 = vld [vmem:[%s7 + $0x1b] sm:$0x1]
    %v2603 = vlaneseq
    %v2604 = vshrl.u32 %v2603, 7
    %v2605 = vsub.s32 0, %v2604
    %v2606 = vrot.slane %v2602, %v2605
    %v2607 = vadd.f32 %v2600, %v2606
    %v2608 = vadd.f32 %v2601, %v2606
    %v2609 = vpack.c.bf16 %v2608, %v2607
    %2610 = vmatprep.subr.bf16.mxu0 0
    %2611 = vmatpush1.bf16.msra.mxu0 %v2609
    %2612 = vmatprep.subr.bf16.mxu0 0
    %2613 = vmatpush1.bf16.msra.mxu0 0
    %2614 = vmatprep.subr.bf16.mxu0 0
    %2615 = vmatpush1.bf16.msra.mxu0 0
    %2616 = vmatprep.subr.bf16.mxu0 0
    %2617 = vmatpush1.bf16.msra.mxu0 0
    %2618 = vmatprep.subr.bf16.mxu0 0
    %2619 = vmatpush1.bf16.msra.mxu0 0
    %2620 = vmatprep.subr.bf16.mxu0 0
    %2621 = vmatpush1.bf16.msra.mxu0 0
    %2622 = vmatprep.subr.bf16.mxu0 0
    %2623 = vmatpush1.bf16.msra.mxu0 0
    %2624 = vmatprep.subr.bf16.mxu0 0
    %2625 = vmatpush1.bf16.msra.mxu0 0
    %2626 = vmatprep.subr.bf16.mxu0 0
    %2627 = vmatpush1.bf16.msra.mxu0 0
    %2628 = vmatprep.subr.bf16.mxu0 0
    %2629 = vmatpush1.bf16.msra.mxu0 0
    %2630 = vmatprep.subr.bf16.mxu0 0
    %2631 = vmatpush1.bf16.msra.mxu0 0
    %2632 = vmatprep.subr.bf16.mxu0 0
    %2633 = vmatpush1.bf16.msra.mxu0 0
    %2634 = vmatprep.subr.bf16.mxu0 0
    %2635 = vmatpush1.bf16.msra.mxu0 0
    %2636 = vmatprep.subr.bf16.mxu0 0
    %2637 = vmatpush1.bf16.msra.mxu0 0
    %2638 = vmatprep.subr.bf16.mxu0 0
    %2639 = vmatpush1.bf16.msra.mxu0 0
    %2640 = vmatprep.subr.bf16.mxu0 0
    %2641 = vmatpush1.bf16.msra.mxu0 0
    %2642 = vmatprep.mubr.bf16.mxu0 0
    %2643 = vmatmul.mubr.bf16.gmra.mrb[0].mxu0 %v1237
    %v2644 = vpop.f32.mrb[0].mxu0
    %v2645 = vadd.f32 0.0, %v2644
    %v2646 = vpop.f32.mrb[0].mxu0
    %v2647 = vpop.f32.mrb[0].mxu0
    %v2648 = vpop.f32.mrb[0].mxu0
    %2649 = vdwg.mxu0
    %v2650 = vpack.c.bf16 %v2051, %v2050
    %v2651 = vpack.c.bf16 %v2053, %v2052
    %2652 = vmatprep.subr.bf16.mxu0 0
    %2653 = vmatpush1.bf16.msra.mxu0 %v2650
    %2654 = vmatprep.subr.bf16.mxu0 0
    %2655 = vmatpush1.bf16.msra.mxu0 %v2651
    %2656 = vmatprep.subr.bf16.mxu0 0
    %2657 = vmatpush1.bf16.msra.mxu0 0
    %2658 = vmatprep.subr.bf16.mxu0 0
    %2659 = vmatpush1.bf16.msra.mxu0 0
    %2660 = vmatprep.subr.bf16.mxu0 0
    %2661 = vmatpush1.bf16.msra.mxu0 0
    %2662 = vmatprep.subr.bf16.mxu0 0
    %2663 = vmatpush1.bf16.msra.mxu0 0
    %2664 = vmatprep.subr.bf16.mxu0 0
    %2665 = vmatpush1.bf16.msra.mxu0 0
    %2666 = vmatprep.subr.bf16.mxu0 0
    %2667 = vmatpush1.bf16.msra.mxu0 0
    %2668 = vmatprep.subr.bf16.mxu0 0
    %2669 = vmatpush1.bf16.msra.mxu0 0
    %2670 = vmatprep.subr.bf16.mxu0 0
    %2671 = vmatpush1.bf16.msra.mxu0 0
    %2672 = vmatprep.subr.bf16.mxu0 0
    %2673 = vmatpush1.bf16.msra.mxu0 0
    %2674 = vmatprep.subr.bf16.mxu0 0
    %2675 = vmatpush1.bf16.msra.mxu0 0
    %2676 = vmatprep.subr.bf16.mxu0 0
    %2677 = vmatpush1.bf16.msra.mxu0 0
    %2678 = vmatprep.subr.bf16.mxu0 0
    %2679 = vmatpush1.bf16.msra.mxu0 0
    %2680 = vmatprep.subr.bf16.mxu0 0
    %2681 = vmatpush1.bf16.msra.mxu0 0
    %2682 = vmatprep.subr.bf16.mxu0 0
    %2683 = vmatpush1.bf16.msra.mxu0 0
    %2684 = vmatprep.mubr.bf16.mxu0 0
    %2685 = vmatmul.mubr.bf16.gmra.mrb[0].mxu0 %v1282
    %v2686 = vpop.f32.mrb[0].mxu0
    %v2687 = vadd.f32 0.0, %v2686
    %v2688 = vpop.f32.mrb[0].mxu0
    %v2689 = vpop.f32.mrb[0].mxu0
    %v2690 = vpop.f32.mrb[0].mxu0
    %2691 = vdwg.mxu0
    %2693 = vrot.lane.b32.xlu0 %v2645, 32
    %v2694 = vpop.permute.xlu0 %2693
    %2697 = vrot.lane.b32.xlu0 %v2687, 64
    %v2698 = vpop.permute.xlu0 %2697
    %v2700 = vsel %vm158, %v1519, %v2694
    %v2701 = vsel %vm1760, %v2700, %v2698
    %v2702 = vpack.c.bf16 %v2701, %v2701
    %v2703 = vld [vmem:[%s9 + $0xc0] sm:$0xf]
    %v2704 = vld [vmem:[%s9 + $0xc4] sm:$0xf]
    %v2705 = vld [vmem:[%s9 + $0xc8] sm:$0xf]
    %v2706 = vld [vmem:[%s9 + $0xcc] sm:$0xf]
    %v2707 = vld [vmem:[%s9 + $0xd0] sm:$0xf]
    %v2708 = vld [vmem:[%s9 + $0xd4] sm:$0xf]
    %v2709 = vld [vmem:[%s9 + $0xd8] sm:$0xf]
    %v2710 = vld [vmem:[%s9 + $0xdc] sm:$0xf]
    %v2711 = vld [vmem:[%s9 + $0xe0] sm:$0xf]
    %v2712 = vld [vmem:[%s9 + $0xe4] sm:$0xf]
    %v2713 = vld [vmem:[%s9 + $0xe8] sm:$0xf]
    %v2714 = vld [vmem:[%s9 + $0xec] sm:$0xf]
    %v2715 = vld [vmem:[%s7 + $0x1c] sm:$0x1]
    %v2716 = vlaneseq
    %v2717 = vshrl.u32 %v2716, 7
    %v2718 = vsub.s32 0, %v2717
    %v2719 = vrot.slane %v2715, %v2718
    %v2732 = vunpack.c.l.b16 %v2703
    %v2733 = vunpack.c.l.b16 %v2704
    %v2734 = vunpack.c.l.b16 %v2705
    %v2735 = vunpack.c.l.b16 %v2706
    %v2736 = vunpack.c.l.b16 %v2707
    %v2737 = vunpack.c.l.b16 %v2708
    %v2738 = vunpack.c.l.b16 %v2709
    %v2739 = vunpack.c.l.b16 %v2710
    %v2740 = vunpack.c.l.b16 %v2711
    %v2741 = vunpack.c.l.b16 %v2712
    %v2742 = vunpack.c.l.b16 %v2713
    %v2743 = vunpack.c.l.b16 %v2714
    %v2744 = vpack.c.b16 %v2733, %v2732
    %v2745 = vpack.c.b16 %v2735, %v2734
    %v2746 = vpack.c.b16 %v2737, %v2736
    %v2747 = vpack.c.b16 %v2739, %v2738
    %v2748 = vpack.c.b16 %v2741, %v2740
    %v2749 = vpack.c.b16 %v2743, %v2742
    %v2757 = vsel %vm1765, %v2702, 0
    %2759 = vmatprep.subr.bf16.mxu0 0
    %2760 = vmatpush1.bf16.msra.mxu0 %v2744
    %2761 = vmatprep.subr.bf16.mxu0 0
    %2762 = vmatpush1.bf16.msra.mxu0 %v2745
    %2763 = vmatprep.subr.bf16.mxu0 0
    %2764 = vmatpush1.bf16.msra.mxu0 %v2746
    %2765 = vmatprep.subr.bf16.mxu0 0
    %2766 = vmatpush1.bf16.msra.mxu0 %v2747
    %2767 = vmatprep.subr.bf16.mxu0 0
    %2768 = vmatpush1.bf16.msra.mxu0 %v2748
    %2769 = vmatprep.subr.bf16.mxu0 0
    %2770 = vmatpush1.bf16.msra.mxu0 %v2749
    %2771 = vmatprep.subr.bf16.mxu0 0
    %2772 = vmatpush1.bf16.msra.mxu0 0
    %2773 = vmatprep.subr.bf16.mxu0 0
    %2774 = vmatpush1.bf16.msra.mxu0 0
    %2775 = vmatprep.subr.bf16.mxu0 0
    %2776 = vmatpush1.bf16.msra.mxu0 0
    %2777 = vmatprep.subr.bf16.mxu0 0
    %2778 = vmatpush1.bf16.msra.mxu0 0
    %2779 = vmatprep.subr.bf16.mxu0 0
    %2780 = vmatpush1.bf16.msra.mxu0 0
    %2781 = vmatprep.subr.bf16.mxu0 0
    %2782 = vmatpush1.bf16.msra.mxu0 0
    %2783 = vmatprep.subr.bf16.mxu0 0
    %2784 = vmatpush1.bf16.msra.mxu0 0
    %2785 = vmatprep.subr.bf16.mxu0 0
    %2786 = vmatpush1.bf16.msra.mxu0 0
    %2787 = vmatprep.subr.bf16.mxu0 0
    %2788 = vmatpush1.bf16.msra.mxu0 0
    %2789 = vmatprep.subr.bf16.mxu0 0
    %2790 = vmatpush1.bf16.msra.mxu0 0
    %2791 = vmatprep.mubr.bf16.mxu0 0
    %2792 = vmatmul.mubr.bf16.gmra.mrb[0].mxu0 %v2757
    %v2793 = vpop.f32.mrb[0].mxu0
    %v2794 = vadd.f32 %v2719, %v2793
    %v2795 = vpop.f32.mrb[0].mxu0
    %v2796 = vpop.f32.mrb[0].mxu0
    %v2797 = vpop.f32.mrb[0].mxu0
    %2798 = vdwg.mxu0
    %v2799 = vmax.f32 %v2794, 0.0
    %v2800 = vpack.c.bf16 %v2799, %v2799
    %v2801 = vld [vmem:[%s9 + $0xf0] sm:$0xf]
    %v2802 = vld [vmem:[%s9 + $0xf4] sm:$0xf]
    %v2803 = vld [vmem:[%s9 + $0xf8] sm:$0xf]
    %v2804 = vld [vmem:[%s9 + $0xfc] sm:$0xf]
    %v2805 = vld [vmem:[%s7 + $0x1d] sm:$0x1]
    %v2806 = vlaneseq
    %v2807 = vshrl.u32 %v2806, 7
    %v2808 = vsub.s32 0, %v2807
    %v2809 = vrot.slane %v2805, %v2808
    %v2814 = vunpack.c.l.b16 %v2801
    %v2815 = vunpack.c.l.b16 %v2802
    %v2816 = vunpack.c.l.b16 %v2803
    %v2817 = vunpack.c.l.b16 %v2804
    %v2818 = vpack.c.b16 %v2815, %v2814
    %v2819 = vpack.c.b16 %v2817, %v2816
    %v2823 = vsel %vm158, %v2800, 0
    %2825 = vmatprep.subr.bf16.mxu0 0
    %2826 = vmatpush1.bf16.msra.mxu0 %v2818
    %2827 = vmatprep.subr.bf16.mxu0 0
    %2828 = vmatpush1.bf16.msra.mxu0 %v2819
    %2829 = vmatprep.subr.bf16.mxu0 0
    %2830 = vmatpush1.bf16.msra.mxu0 0
    %2831 = vmatprep.subr.bf16.mxu0 0
    %2832 = vmatpush1.bf16.msra.mxu0 0
    %2833 = vmatprep.subr.bf16.mxu0 0
    %2834 = vmatpush1.bf16.msra.mxu0 0
    %2835 = vmatprep.subr.bf16.mxu0 0
    %2836 = vmatpush1.bf16.msra.mxu0 0
    %2837 = vmatprep.subr.bf16.mxu0 0
    %2838 = vmatpush1.bf16.msra.mxu0 0
    %2839 = vmatprep.subr.bf16.mxu0 0
    %2840 = vmatpush1.bf16.msra.mxu0 0
    %2841 = vmatprep.subr.bf16.mxu0 0
    %2842 = vmatpush1.bf16.msra.mxu0 0
    %2843 = vmatprep.subr.bf16.mxu0 0
    %2844 = vmatpush1.bf16.msra.mxu0 0
    %2845 = vmatprep.subr.bf16.mxu0 0
    %2846 = vmatpush1.bf16.msra.mxu0 0
    %2847 = vmatprep.subr.bf16.mxu0 0
    %2848 = vmatpush1.bf16.msra.mxu0 0
    %2849 = vmatprep.subr.bf16.mxu0 0
    %2850 = vmatpush1.bf16.msra.mxu0 0
    %2851 = vmatprep.subr.bf16.mxu0 0
    %2852 = vmatpush1.bf16.msra.mxu0 0
    %2853 = vmatprep.subr.bf16.mxu0 0
    %2854 = vmatpush1.bf16.msra.mxu0 0
    %2855 = vmatprep.subr.bf16.mxu0 0
    %2856 = vmatpush1.bf16.msra.mxu0 0
    %2857 = vmatprep.mubr.bf16.mxu0 0
    %2858 = vmatmul.mubr.bf16.gmra.mrb[0].mxu0 %v2823
    %v2859 = vpop.f32.mrb[0].mxu0
    %v2860 = vadd.f32 %v2809, %v2859
    %v2861 = vpop.f32.mrb[0].mxu0
    %v2862 = vpop.f32.mrb[0].mxu0
    %v2863 = vpop.f32.mrb[0].mxu0
    %2864 = vdwg.mxu0
    %v2865 = vsel %vm1491, %v2860, 0.0
    %2866 = vadd.xlane.f32.xlu0 %v2865
    %v2867 = vpop.xlane.xlu0 %2866
    %v2868 = vmul.f32 %v2867, %v634
    %v2869 = vmul.f32 %v2860, %v2860
    %v2870 = vsel %vm1491, %v2869, 0.0
    %2871 = vadd.xlane.f32.xlu0 %v2870
    %v2872 = vpop.xlane.xlu0 %2871
    %v2873 = vmul.f32 %v2872, %v634
    %v2874 = vmul.f32 %v2868, %v2868
    %v2875 = vsub.f32 %v2873, %v2874
    %v2876 = vmax.f32 %v2875, 0.0
    %v2877 = vsub.f32 %v2860, %v2868
    %v2878 = vadd.f32 %v2876, 1e-05
    %v2879 = vrsqrt.pop %v2878
    %v2880 = vmul.f32 %v2877, %v2879
    %v2881 = vld [vmem:[%s7 + $0x1e] sm:$0x1]
    %v2882 = vlaneseq
    %v2883 = vshrl.u32 %v2882, 7
    %v2884 = vsub.s32 0, %v2883
    %v2885 = vrot.slane %v2881, %v2884
    %v2886 = vmul.f32 %v2880, %v2885
    %v2887 = vld [vmem:[%s7 + $0x1f] sm:$0x1]
    %v2888 = vlaneseq
    %v2889 = vshrl.u32 %v2888, 7
    %v2890 = vsub.s32 0, %v2889
    %v2891 = vrot.slane %v2887, %v2890
    %v2892 = vadd.f32 %v2886, %v2891
    %v2893 = vpack.c.bf16 %v2892, %v2892
    %2894 = vmatprep.subr.bf16.mxu0 0
    %2895 = vmatpush1.bf16.msra.mxu0 %v2609
    %2896 = vmatprep.subr.bf16.mxu0 0
    %2897 = vmatpush1.bf16.msra.mxu0 0
    %2898 = vmatprep.subr.bf16.mxu0 0
    %2899 = vmatpush1.bf16.msra.mxu0 0
    %2900 = vmatprep.subr.bf16.mxu0 0
    %2901 = vmatpush1.bf16.msra.mxu0 0
    %2902 = vmatprep.subr.bf16.mxu0 0
    %2903 = vmatpush1.bf16.msra.mxu0 0
    %2904 = vmatprep.subr.bf16.mxu0 0
    %2905 = vmatpush1.bf16.msra.mxu0 0
    %2906 = vmatprep.subr.bf16.mxu0 0
    %2907 = vmatpush1.bf16.msra.mxu0 0
    %2908 = vmatprep.subr.bf16.mxu0 0
    %2909 = vmatpush1.bf16.msra.mxu0 0
    %2910 = vmatprep.subr.bf16.mxu0 0
    %2911 = vmatpush1.bf16.msra.mxu0 0
    %2912 = vmatprep.subr.bf16.mxu0 0
    %2913 = vmatpush1.bf16.msra.mxu0 0
    %2914 = vmatprep.subr.bf16.mxu0 0
    %2915 = vmatpush1.bf16.msra.mxu0 0
    %2916 = vmatprep.subr.bf16.mxu0 0
    %2917 = vmatpush1.bf16.msra.mxu0 0
    %2918 = vmatprep.subr.bf16.mxu0 0
    %2919 = vmatpush1.bf16.msra.mxu0 0
    %2920 = vmatprep.subr.bf16.mxu0 0
    %2921 = vmatpush1.bf16.msra.mxu0 0
    %2922 = vmatprep.subr.bf16.mxu0 0
    %2923 = vmatpush1.bf16.msra.mxu0 0
    %2924 = vmatprep.subr.bf16.mxu0 0
    %2925 = vmatpush1.bf16.msra.mxu0 0
    %2926 = vmatprep.mubr.bf16.mxu0 0
    %2927 = vmatmul.mubr.bf16.gmra.mrb[0].mxu0 %v182
    %v2928 = vpop.f32.mrb[0].mxu0
    %v2929 = vadd.f32 0.0, %v2928
    %v2930 = vpop.f32.mrb[0].mxu0
    %v2931 = vpop.f32.mrb[0].mxu0
    %v2932 = vadd.f32 0.0, %v2931
    %v2933 = vpop.f32.mrb[0].mxu0
    %2934 = vmatprep.mubr.bf16.mxu0 0
    %2935 = vmatmul.mubr.bf16.gmra.mrb[0].mxu0 %v185
    %v2936 = vpop.f32.mrb[0].mxu0
    %v2937 = vadd.f32 0.0, %v2936
    %v2938 = vpop.f32.mrb[0].mxu0
    %v2939 = vpop.f32.mrb[0].mxu0
    %v2940 = vadd.f32 0.0, %v2939
    %v2941 = vpop.f32.mrb[0].mxu0
    %2942 = vdwg.mxu0
    %2943 = vmatprep.subr.bf16.mxu0 0
    %2944 = vmatpush1.bf16.msra.mxu0 %v2609
    %2945 = vmatprep.subr.bf16.mxu0 0
    %2946 = vmatpush1.bf16.msra.mxu0 0
    %2947 = vmatprep.subr.bf16.mxu0 0
    %2948 = vmatpush1.bf16.msra.mxu0 0
    %2949 = vmatprep.subr.bf16.mxu0 0
    %2950 = vmatpush1.bf16.msra.mxu0 0
    %2951 = vmatprep.subr.bf16.mxu0 0
    %2952 = vmatpush1.bf16.msra.mxu0 0
    %2953 = vmatprep.subr.bf16.mxu0 0
    %2954 = vmatpush1.bf16.msra.mxu0 0
    %2955 = vmatprep.subr.bf16.mxu0 0
    %2956 = vmatpush1.bf16.msra.mxu0 0
    %2957 = vmatprep.subr.bf16.mxu0 0
    %2958 = vmatpush1.bf16.msra.mxu0 0
    %2959 = vmatprep.subr.bf16.mxu0 0
    %2960 = vmatpush1.bf16.msra.mxu0 0
    %2961 = vmatprep.subr.bf16.mxu0 0
    %2962 = vmatpush1.bf16.msra.mxu0 0
    %2963 = vmatprep.subr.bf16.mxu0 0
    %2964 = vmatpush1.bf16.msra.mxu0 0
    %2965 = vmatprep.subr.bf16.mxu0 0
    %2966 = vmatpush1.bf16.msra.mxu0 0
    %2967 = vmatprep.subr.bf16.mxu0 0
    %2968 = vmatpush1.bf16.msra.mxu0 0
    %2969 = vmatprep.subr.bf16.mxu0 0
    %2970 = vmatpush1.bf16.msra.mxu0 0
    %2971 = vmatprep.subr.bf16.mxu0 0
    %2972 = vmatpush1.bf16.msra.mxu0 0
    %2973 = vmatprep.subr.bf16.mxu0 0
    %2974 = vmatpush1.bf16.msra.mxu0 0
    %2975 = vmatprep.mubr.bf16.mxu0 0
    %2976 = vmatmul.mubr.bf16.gmra.mrb[0].mxu0 %v237
    %v2977 = vpop.f32.mrb[0].mxu0
    %v2978 = vadd.f32 0.0, %v2977
    %v2979 = vpop.f32.mrb[0].mxu0
    %v2980 = vpop.f32.mrb[0].mxu0
    %v2981 = vadd.f32 0.0, %v2980
    %v2982 = vpop.f32.mrb[0].mxu0
    %2983 = vmatprep.mubr.bf16.mxu0 0
    %2984 = vmatmul.mubr.bf16.gmra.mrb[0].mxu0 %v240
    %v2985 = vpop.f32.mrb[0].mxu0
    %v2986 = vadd.f32 0.0, %v2985
    %v2987 = vpop.f32.mrb[0].mxu0
    %v2988 = vpop.f32.mrb[0].mxu0
    %v2989 = vadd.f32 0.0, %v2988
    %v2990 = vpop.f32.mrb[0].mxu0
    %2991 = vdwg.mxu0
    %v2993 = vsel %vm298, %v2893, 0
    %2995 = vmatprep.subr.bf16.mxu0 0
    %2996 = vmatpush1.bf16.msra.mxu0 %v2993
    %2997 = vmatprep.subr.bf16.mxu0 0
    %2998 = vmatpush1.bf16.msra.mxu0 0
    %2999 = vmatprep.subr.bf16.mxu0 0
    %3000 = vmatpush1.bf16.msra.mxu0 0
    %3001 = vmatprep.subr.bf16.mxu0 0
    %3002 = vmatpush1.bf16.msra.mxu0 0
    %3003 = vmatprep.subr.bf16.mxu0 0
    %3004 = vmatpush1.bf16.msra.mxu0 0
    %3005 = vmatprep.subr.bf16.mxu0 0
    %3006 = vmatpush1.bf16.msra.mxu0 0
    %3007 = vmatprep.subr.bf16.mxu0 0
    %3008 = vmatpush1.bf16.msra.mxu0 0
    %3009 = vmatprep.subr.bf16.mxu0 0
    %3010 = vmatpush1.bf16.msra.mxu0 0
    %3011 = vmatprep.subr.bf16.mxu0 0
    %3012 = vmatpush1.bf16.msra.mxu0 0
    %3013 = vmatprep.subr.bf16.mxu0 0
    %3014 = vmatpush1.bf16.msra.mxu0 0
    %3015 = vmatprep.subr.bf16.mxu0 0
    %3016 = vmatpush1.bf16.msra.mxu0 0
    %3017 = vmatprep.subr.bf16.mxu0 0
    %3018 = vmatpush1.bf16.msra.mxu0 0
    %3019 = vmatprep.subr.bf16.mxu0 0
    %3020 = vmatpush1.bf16.msra.mxu0 0
    %3021 = vmatprep.subr.bf16.mxu0 0
    %3022 = vmatpush1.bf16.msra.mxu0 0
    %3023 = vmatprep.subr.bf16.mxu0 0
    %3024 = vmatpush1.bf16.msra.mxu0 0
    %3025 = vmatprep.subr.bf16.mxu0 0
    %3026 = vmatpush1.bf16.msra.mxu0 0
    %3027 = vmatprep.mubr.bf16.mxu0 0
    %3028 = vmatmul.mubr.bf16.gmra.mrb[0].mxu0 %v293
    %v3029 = vpop.f32.mrb[0].mxu0
    %v3030 = vadd.f32 0.0, %v3029
    %v3031 = vpop.f32.mrb[0].mxu0
    %v3032 = vpop.f32.mrb[0].mxu0
    %v3033 = vadd.f32 0.0, %v3032
    %v3034 = vpop.f32.mrb[0].mxu0
    %3035 = vmatprep.mubr.bf16.mxu0 0
    %3036 = vmatmul.mubr.bf16.gmra.mrb[0].mxu0 %v296
    %v3037 = vpop.f32.mrb[0].mxu0
    %v3038 = vadd.f32 0.0, %v3037
    %v3039 = vpop.f32.mrb[0].mxu0
    %v3040 = vpop.f32.mrb[0].mxu0
    %v3041 = vadd.f32 0.0, %v3040
    %v3042 = vpop.f32.mrb[0].mxu0
    %3043 = vdwg.mxu0
    %3044 = vmatprep.subr.bf16.mxu0 0
    %3045 = vmatpush1.bf16.msra.mxu0 %v2993
    %3046 = vmatprep.subr.bf16.mxu0 0
    %3047 = vmatpush1.bf16.msra.mxu0 0
    %3048 = vmatprep.subr.bf16.mxu0 0
    %3049 = vmatpush1.bf16.msra.mxu0 0
    %3050 = vmatprep.subr.bf16.mxu0 0
    %3051 = vmatpush1.bf16.msra.mxu0 0
    %3052 = vmatprep.subr.bf16.mxu0 0
    %3053 = vmatpush1.bf16.msra.mxu0 0
    %3054 = vmatprep.subr.bf16.mxu0 0
    %3055 = vmatpush1.bf16.msra.mxu0 0
    %3056 = vmatprep.subr.bf16.mxu0 0
    %3057 = vmatpush1.bf16.msra.mxu0 0
    %3058 = vmatprep.subr.bf16.mxu0 0
    %3059 = vmatpush1.bf16.msra.mxu0 0
    %3060 = vmatprep.subr.bf16.mxu0 0
    %3061 = vmatpush1.bf16.msra.mxu0 0
    %3062 = vmatprep.subr.bf16.mxu0 0
    %3063 = vmatpush1.bf16.msra.mxu0 0
    %3064 = vmatprep.subr.bf16.mxu0 0
    %3065 = vmatpush1.bf16.msra.mxu0 0
    %3066 = vmatprep.subr.bf16.mxu0 0
    %3067 = vmatpush1.bf16.msra.mxu0 0
    %3068 = vmatprep.subr.bf16.mxu0 0
    %3069 = vmatpush1.bf16.msra.mxu0 0
    %3070 = vmatprep.subr.bf16.mxu0 0
    %3071 = vmatpush1.bf16.msra.mxu0 0
    %3072 = vmatprep.subr.bf16.mxu0 0
    %3073 = vmatpush1.bf16.msra.mxu0 0
    %3074 = vmatprep.subr.bf16.mxu0 0
    %3075 = vmatpush1.bf16.msra.mxu0 0
    %3076 = vmatprep.mubr.bf16.mxu0 0
    %3077 = vmatmul.mubr.bf16.gmra.mrb[0].mxu0 %v352
    %v3078 = vpop.f32.mrb[0].mxu0
    %v3079 = vadd.f32 0.0, %v3078
    %v3080 = vpop.f32.mrb[0].mxu0
    %v3081 = vpop.f32.mrb[0].mxu0
    %v3082 = vadd.f32 0.0, %v3081
    %v3083 = vpop.f32.mrb[0].mxu0
    %3084 = vdwg.mxu0
    %3089 = vrot.lane.b32.xlu0 %v2978, 32
    %v3090 = vpop.permute.xlu0 %3089
    %3091 = vrot.lane.b32.xlu0 %v2981, 32
    %v3092 = vpop.permute.xlu0 %3091
    %3093 = vrot.lane.b32.xlu0 %v2986, 32
    %v3094 = vpop.permute.xlu0 %3093
    %3095 = vrot.lane.b32.xlu0 %v2989, 32
    %v3096 = vpop.permute.xlu0 %3095
    %3101 = vrot.lane.b32.xlu0 %v2050, 64
    %v3102 = vpop.permute.xlu0 %3101
    %3103 = vrot.lane.b32.xlu0 %v2051, 64
    %v3104 = vpop.permute.xlu0 %3103
    %3105 = vrot.lane.b32.xlu0 %v2052, 64
    %v3106 = vpop.permute.xlu0 %3105
    %3107 = vrot.lane.b32.xlu0 %v2053, 64
    %v3108 = vpop.permute.xlu0 %3107
    %3117 = vrot.lane.b32.xlu0 %v3030, 96
    %v3118 = vpop.permute.xlu0 %3117
    %3119 = vrot.lane.b32.xlu0 %v3033, 96
    %v3120 = vpop.permute.xlu0 %3119
    %3121 = vrot.lane.b32.xlu0 %v3038, 96
    %v3122 = vpop.permute.xlu0 %3121
    %3123 = vrot.lane.b32.xlu0 %v3041, 96
    %v3124 = vpop.permute.xlu0 %3123
    %v3129 = vsel %vm158, %v2929, %v3090
    %v3130 = vsel %vm158, %v2932, %v3092
    %v3131 = vsel %vm158, %v2937, %v3094
    %v3132 = vsel %vm158, %v2940, %v3096
    %v3133 = vsel %vm1760, %v3129, %v3102
    %v3134 = vsel %vm1760, %v3130, %v3104
    %v3135 = vsel %vm1760, %v3131, %v3106
    %v3136 = vsel %vm1760, %v3132, %v3108
    %v3137 = vsel %vm1765, %v3133, %v3118
    %v3138 = vsel %vm1765, %v3134, %v3120
    %v3139 = vsel %vm1765, %v3135, %v3122
    %v3140 = vsel %vm1765, %v3136, %v3124
    %v3141 = vpack.c.bf16 %v3138, %v3137
    %v3142 = vpack.c.bf16 %v3140, %v3139
    %v3143 = vld [vmem:[%s10] sm:$0xf]
    %v3144 = vld [vmem:[%s10 + $0x4] sm:$0xf]
    %v3145 = vld [vmem:[%s10 + $0x8] sm:$0xf]
    %v3146 = vld [vmem:[%s10 + $0xc] sm:$0xf]
    %v3147 = vld [vmem:[%s10 + $0x10] sm:$0xf]
    %v3148 = vld [vmem:[%s10 + $0x14] sm:$0xf]
    %v3149 = vld [vmem:[%s10 + $0x18] sm:$0xf]
    %v3150 = vld [vmem:[%s10 + $0x1c] sm:$0xf]
    %v3151 = vld [vmem:[%s10 + $0x20] sm:$0xf]
    %v3152 = vld [vmem:[%s10 + $0x24] sm:$0xf]
    %v3153 = vld [vmem:[%s10 + $0x28] sm:$0xf]
    %v3154 = vld [vmem:[%s10 + $0x2c] sm:$0xf]
    %v3155 = vld [vmem:[%s10 + $0x30] sm:$0xf]
    %v3156 = vld [vmem:[%s10 + $0x34] sm:$0xf]
    %v3157 = vld [vmem:[%s10 + $0x38] sm:$0xf]
    %v3158 = vld [vmem:[%s10 + $0x3c] sm:$0xf]
    %v3159 = vld [vmem:[%s7 + $0x20] sm:$0x1]
    %v3160 = vlaneseq
    %v3161 = vshrl.u32 %v3160, 7
    %v3162 = vsub.s32 0, %v3161
    %v3163 = vrot.slane %v3159, %v3162
    %v3180 = vunpack.c.l.b16 %v3143
    %v3181 = vunpack.c.l.b16 %v3144
    %v3182 = vunpack.c.l.b16 %v3145
    %v3183 = vunpack.c.l.b16 %v3146
    %v3184 = vunpack.c.l.b16 %v3147
    %v3185 = vunpack.c.l.b16 %v3148
    %v3186 = vunpack.c.l.b16 %v3149
    %v3187 = vunpack.c.l.b16 %v3150
    %v3188 = vunpack.c.l.b16 %v3151
    %v3189 = vunpack.c.l.b16 %v3152
    %v3190 = vunpack.c.l.b16 %v3153
    %v3191 = vunpack.c.l.b16 %v3154
    %v3192 = vunpack.c.l.b16 %v3155
    %v3193 = vunpack.c.l.b16 %v3156
    %v3194 = vunpack.c.l.b16 %v3157
    %v3195 = vunpack.c.l.b16 %v3158
    %v3196 = vpack.c.b16 %v3181, %v3180
    %v3197 = vpack.c.b16 %v3183, %v3182
    %v3198 = vpack.c.b16 %v3185, %v3184
    %v3199 = vpack.c.b16 %v3187, %v3186
    %v3200 = vpack.c.b16 %v3189, %v3188
    %v3201 = vpack.c.b16 %v3191, %v3190
    %v3202 = vpack.c.b16 %v3193, %v3192
    %v3203 = vpack.c.b16 %v3195, %v3194
    %3212 = vmatprep.subr.bf16.mxu0 0
    %3213 = vmatpush1.bf16.msra.mxu0 %v3196
    %3214 = vmatprep.subr.bf16.mxu0 0
    %3215 = vmatpush1.bf16.msra.mxu0 %v3197
    %3216 = vmatprep.subr.bf16.mxu0 0
    %3217 = vmatpush1.bf16.msra.mxu0 %v3198
    %3218 = vmatprep.subr.bf16.mxu0 0
    %3219 = vmatpush1.bf16.msra.mxu0 %v3199
    %3220 = vmatprep.subr.bf16.mxu0 0
    %3221 = vmatpush1.bf16.msra.mxu0 %v3200
    %3222 = vmatprep.subr.bf16.mxu0 0
    %3223 = vmatpush1.bf16.msra.mxu0 %v3201
    %3224 = vmatprep.subr.bf16.mxu0 0
    %3225 = vmatpush1.bf16.msra.mxu0 %v3202
    %3226 = vmatprep.subr.bf16.mxu0 0
    %3227 = vmatpush1.bf16.msra.mxu0 %v3203
    %3228 = vmatprep.subr.bf16.mxu0 0
    %3229 = vmatpush1.bf16.msra.mxu0 0
    %3230 = vmatprep.subr.bf16.mxu0 0
    %3231 = vmatpush1.bf16.msra.mxu0 0
    %3232 = vmatprep.subr.bf16.mxu0 0
    %3233 = vmatpush1.bf16.msra.mxu0 0
    %3234 = vmatprep.subr.bf16.mxu0 0
    %3235 = vmatpush1.bf16.msra.mxu0 0
    %3236 = vmatprep.subr.bf16.mxu0 0
    %3237 = vmatpush1.bf16.msra.mxu0 0
    %3238 = vmatprep.subr.bf16.mxu0 0
    %3239 = vmatpush1.bf16.msra.mxu0 0
    %3240 = vmatprep.subr.bf16.mxu0 0
    %3241 = vmatpush1.bf16.msra.mxu0 0
    %3242 = vmatprep.subr.bf16.mxu0 0
    %3243 = vmatpush1.bf16.msra.mxu0 0
    %3244 = vmatprep.mubr.bf16.mxu0 0
    %3245 = vmatmul.mubr.bf16.gmra.mrb[0].mxu0 %v3141
    %v3246 = vpop.f32.mrb[0].mxu0
    %v3247 = vadd.f32 %v3163, %v3246
    %v3248 = vpop.f32.mrb[0].mxu0
    %v3249 = vpop.f32.mrb[0].mxu0
    %v3250 = vadd.f32 %v3163, %v3249
    %v3251 = vpop.f32.mrb[0].mxu0
    %3252 = vmatprep.mubr.bf16.mxu0 0
    %3253 = vmatmul.mubr.bf16.gmra.mrb[0].mxu0 %v3142
    %v3254 = vpop.f32.mrb[0].mxu0
    %v3255 = vadd.f32 %v3163, %v3254
    %v3256 = vpop.f32.mrb[0].mxu0
    %v3257 = vpop.f32.mrb[0].mxu0
    %v3258 = vadd.f32 %v3163, %v3257
    %v3259 = vpop.f32.mrb[0].mxu0
    %3260 = vdwg.mxu0
    %v3261 = vmax.f32 %v3247, 0.0
    %v3262 = vmax.f32 %v3250, 0.0
    %v3263 = vmax.f32 %v3255, 0.0
    %v3264 = vmax.f32 %v3258, 0.0
    %v3265 = vpack.c.bf16 %v3262, %v3261
    %v3266 = vpack.c.bf16 %v3264, %v3263
    %v3267 = vld [vmem:[%s10 + $0x40] sm:$0xf]
    %v3268 = vld [vmem:[%s10 + $0x44] sm:$0xf]
    %v3269 = vld [vmem:[%s10 + $0x48] sm:$0xf]
    %v3270 = vld [vmem:[%s10 + $0x4c] sm:$0xf]
    %v3271 = vld [vmem:[%s7 + $0x21] sm:$0x1]
    %v3272 = vlaneseq
    %v3273 = vshrl.u32 %v3272, 7
    %v3274 = vsub.s32 0, %v3273
    %v3275 = vrot.slane %v3271, %v3274
    %v3280 = vunpack.c.l.b16 %v3267
    %v3281 = vunpack.c.l.b16 %v3268
    %v3282 = vunpack.c.l.b16 %v3269
    %v3283 = vunpack.c.l.b16 %v3270
    %v3284 = vpack.c.b16 %v3281, %v3280
    %v3285 = vpack.c.b16 %v3283, %v3282
    %v3289 = vsel %vm158, %v3265, 0
    %v3292 = vsel %vm158, %v3266, 0
    %3294 = vmatprep.subr.bf16.mxu0 0
    %3295 = vmatpush1.bf16.msra.mxu0 %v3284
    %3296 = vmatprep.subr.bf16.mxu0 0
    %3297 = vmatpush1.bf16.msra.mxu0 %v3285
    %3298 = vmatprep.subr.bf16.mxu0 0
    %3299 = vmatpush1.bf16.msra.mxu0 0
    %3300 = vmatprep.subr.bf16.mxu0 0
    %3301 = vmatpush1.bf16.msra.mxu0 0
    %3302 = vmatprep.subr.bf16.mxu0 0
    %3303 = vmatpush1.bf16.msra.mxu0 0
    %3304 = vmatprep.subr.bf16.mxu0 0
    %3305 = vmatpush1.bf16.msra.mxu0 0
    %3306 = vmatprep.subr.bf16.mxu0 0
    %3307 = vmatpush1.bf16.msra.mxu0 0
    %3308 = vmatprep.subr.bf16.mxu0 0
    %3309 = vmatpush1.bf16.msra.mxu0 0
    %3310 = vmatprep.subr.bf16.mxu0 0
    %3311 = vmatpush1.bf16.msra.mxu0 0
    %3312 = vmatprep.subr.bf16.mxu0 0
    %3313 = vmatpush1.bf16.msra.mxu0 0
    %3314 = vmatprep.subr.bf16.mxu0 0
    %3315 = vmatpush1.bf16.msra.mxu0 0
    %3316 = vmatprep.subr.bf16.mxu0 0
    %3317 = vmatpush1.bf16.msra.mxu0 0
    %3318 = vmatprep.subr.bf16.mxu0 0
    %3319 = vmatpush1.bf16.msra.mxu0 0
    %3320 = vmatprep.subr.bf16.mxu0 0
    %3321 = vmatpush1.bf16.msra.mxu0 0
    %3322 = vmatprep.subr.bf16.mxu0 0
    %3323 = vmatpush1.bf16.msra.mxu0 0
    %3324 = vmatprep.subr.bf16.mxu0 0
    %3325 = vmatpush1.bf16.msra.mxu0 0
    %3326 = vmatprep.mubr.bf16.mxu0 0
    %3327 = vmatmul.mubr.bf16.gmra.mrb[0].mxu0 %v3289
    %v3328 = vpop.f32.mrb[0].mxu0
    %v3329 = vadd.f32 %v3275, %v3328
    %v3330 = vpop.f32.mrb[0].mxu0
    %v3331 = vpop.f32.mrb[0].mxu0
    %v3332 = vadd.f32 %v3275, %v3331
    %v3333 = vpop.f32.mrb[0].mxu0
    %3334 = vmatprep.mubr.bf16.mxu0 0
    %3335 = vmatmul.mubr.bf16.gmra.mrb[0].mxu0 %v3292
    %v3336 = vpop.f32.mrb[0].mxu0
    %v3337 = vadd.f32 %v3275, %v3336
    %v3338 = vpop.f32.mrb[0].mxu0
    %v3339 = vpop.f32.mrb[0].mxu0
    %v3340 = vadd.f32 %v3275, %v3339
    %v3341 = vpop.f32.mrb[0].mxu0
    %3342 = vdwg.mxu0
    %v3343 = vsel %vm158, %v3329, 0.0
    %3344 = vadd.xlane.f32.xlu0 %v3343
    %v3345 = vpop.xlane.xlu0 %3344
    %v3346 = vsel %vm158, %v3332, 0.0
    %3347 = vadd.xlane.f32.xlu0 %v3346
    %v3348 = vpop.xlane.xlu0 %3347
    %v3349 = vsel %vm158, %v3337, 0.0
    %3350 = vadd.xlane.f32.xlu0 %v3349
    %v3351 = vpop.xlane.xlu0 %3350
    %v3352 = vsel %vm158, %v3340, 0.0
    %3353 = vadd.xlane.f32.xlu0 %v3352
    %v3354 = vpop.xlane.xlu0 %3353
    %v3355 = vmul.f32 %v3345, %v634
    %v3356 = vmul.f32 %v3348, %v634
    %v3357 = vmul.f32 %v3351, %v634
    %v3358 = vmul.f32 %v3354, %v634
    %v3359 = vmul.f32 %v3329, %v3329
    %v3360 = vmul.f32 %v3332, %v3332
    %v3361 = vmul.f32 %v3337, %v3337
    %v3362 = vmul.f32 %v3340, %v3340
    %v3363 = vsel %vm158, %v3359, 0.0
    %3364 = vadd.xlane.f32.xlu0 %v3363
    %v3365 = vpop.xlane.xlu0 %3364
    %v3366 = vsel %vm158, %v3360, 0.0
    %3367 = vadd.xlane.f32.xlu0 %v3366
    %v3368 = vpop.xlane.xlu0 %3367
    %v3369 = vsel %vm158, %v3361, 0.0
    %3370 = vadd.xlane.f32.xlu0 %v3369
    %v3371 = vpop.xlane.xlu0 %3370
    %v3372 = vsel %vm158, %v3362, 0.0
    %3373 = vadd.xlane.f32.xlu0 %v3372
    %v3374 = vpop.xlane.xlu0 %3373
    %v3375 = vmul.f32 %v3365, %v634
    %v3376 = vmul.f32 %v3368, %v634
    %v3377 = vmul.f32 %v3371, %v634
    %v3378 = vmul.f32 %v3374, %v634
    %v3379 = vmul.f32 %v3355, %v3355
    %v3380 = vmul.f32 %v3356, %v3356
    %v3381 = vmul.f32 %v3357, %v3357
    %v3382 = vmul.f32 %v3358, %v3358
    %v3383 = vsub.f32 %v3375, %v3379
    %v3384 = vsub.f32 %v3376, %v3380
    %v3385 = vsub.f32 %v3377, %v3381
    %v3386 = vsub.f32 %v3378, %v3382
    %v3387 = vmax.f32 %v3383, 0.0
    %v3388 = vmax.f32 %v3384, 0.0
    %v3389 = vmax.f32 %v3385, 0.0
    %v3390 = vmax.f32 %v3386, 0.0
    %v3391 = vsub.f32 %v3329, %v3355
    %v3392 = vsub.f32 %v3332, %v3356
    %v3393 = vsub.f32 %v3337, %v3357
    %v3394 = vsub.f32 %v3340, %v3358
    %v3395 = vadd.f32 %v3387, 1e-05
    %v3396 = vadd.f32 %v3388, 1e-05
    %v3397 = vadd.f32 %v3389, 1e-05
    %v3398 = vadd.f32 %v3390, 1e-05
    %v3399 = vrsqrt.pop %v3395
    %v3400 = vrsqrt.pop %v3396
    %v3401 = vrsqrt.pop %v3397
    %v3402 = vrsqrt.pop %v3398
    %v3403 = vmul.f32 %v3391, %v3399
    %v3404 = vmul.f32 %v3392, %v3400
    %v3405 = vmul.f32 %v3393, %v3401
    %v3406 = vmul.f32 %v3394, %v3402
    %v3407 = vld [vmem:[%s7 + $0x22] sm:$0x1]
    %v3408 = vlaneseq
    %v3409 = vshrl.u32 %v3408, 7
    %v3410 = vsub.s32 0, %v3409
    %v3411 = vrot.slane %v3407, %v3410
    %v3412 = vmul.f32 %v3403, %v3411
    %v3413 = vmul.f32 %v3404, %v3411
    %v3414 = vmul.f32 %v3405, %v3411
    %v3415 = vmul.f32 %v3406, %v3411
    %v3416 = vld [vmem:[%s7 + $0x23] sm:$0x1]
    %v3417 = vlaneseq
    %v3418 = vshrl.u32 %v3417, 7
    %v3419 = vsub.s32 0, %v3418
    %v3420 = vrot.slane %v3416, %v3419
    %v3421 = vadd.f32 %v3412, %v3420
    %v3422 = vadd.f32 %v3413, %v3420
    %v3423 = vadd.f32 %v3414, %v3420
    %v3424 = vadd.f32 %v3415, %v3420
    %3429 = vrot.lane.b32.xlu0 %v3421, 32
    %v3430 = vpop.permute.xlu0 %3429
    %3431 = vrot.lane.b32.xlu0 %v3422, 32
    %v3432 = vpop.permute.xlu0 %3431
    %3433 = vrot.lane.b32.xlu0 %v3423, 32
    %v3434 = vpop.permute.xlu0 %3433
    %3435 = vrot.lane.b32.xlu0 %v3424, 32
    %v3436 = vpop.permute.xlu0 %3435
    %v3441 = vsel %vm158, %v2978, %v3430
    %v3442 = vsel %vm158, %v2981, %v3432
    %v3443 = vsel %vm158, %v2986, %v3434
    %v3444 = vsel %vm158, %v2989, %v3436
    %v3445 = vpack.c.bf16 %v3442, %v3441
    %v3446 = vpack.c.bf16 %v3444, %v3443
    %v3447 = vld [vmem:[%s10 + $0x50] sm:$0xf]
    %v3448 = vld [vmem:[%s10 + $0x54] sm:$0xf]
    %v3449 = vld [vmem:[%s10 + $0x58] sm:$0xf]
    %v3450 = vld [vmem:[%s10 + $0x5c] sm:$0xf]
    %v3451 = vld [vmem:[%s10 + $0x60] sm:$0xf]
    %v3452 = vld [vmem:[%s10 + $0x64] sm:$0xf]
    %v3453 = vld [vmem:[%s10 + $0x68] sm:$0xf]
    %v3454 = vld [vmem:[%s10 + $0x6c] sm:$0xf]
    %v3455 = vld [vmem:[%s7 + $0x24] sm:$0x1]
    %v3456 = vlaneseq
    %v3457 = vshrl.u32 %v3456, 7
    %v3458 = vsub.s32 0, %v3457
    %v3459 = vrot.slane %v3455, %v3458
    %v3468 = vunpack.c.l.b16 %v3447
    %v3469 = vunpack.c.l.b16 %v3448
    %v3470 = vunpack.c.l.b16 %v3449
    %v3471 = vunpack.c.l.b16 %v3450
    %v3472 = vunpack.c.l.b16 %v3451
    %v3473 = vunpack.c.l.b16 %v3452
    %v3474 = vunpack.c.l.b16 %v3453
    %v3475 = vunpack.c.l.b16 %v3454
    %v3476 = vpack.c.b16 %v3469, %v3468
    %v3477 = vpack.c.b16 %v3471, %v3470
    %v3478 = vpack.c.b16 %v3473, %v3472
    %v3479 = vpack.c.b16 %v3475, %v3474
    %v3485 = vsel %vm1760, %v3445, 0
    %v3488 = vsel %vm1760, %v3446, 0
    %3490 = vmatprep.subr.bf16.mxu0 0
    %3491 = vmatpush1.bf16.msra.mxu0 %v3476
    %3492 = vmatprep.subr.bf16.mxu0 0
    %3493 = vmatpush1.bf16.msra.mxu0 %v3477
    %3494 = vmatprep.subr.bf16.mxu0 0
    %3495 = vmatpush1.bf16.msra.mxu0 %v3478
    %3496 = vmatprep.subr.bf16.mxu0 0
    %3497 = vmatpush1.bf16.msra.mxu0 %v3479
    %3498 = vmatprep.subr.bf16.mxu0 0
    %3499 = vmatpush1.bf16.msra.mxu0 0
    %3500 = vmatprep.subr.bf16.mxu0 0
    %3501 = vmatpush1.bf16.msra.mxu0 0
    %3502 = vmatprep.subr.bf16.mxu0 0
    %3503 = vmatpush1.bf16.msra.mxu0 0
    %3504 = vmatprep.subr.bf16.mxu0 0
    %3505 = vmatpush1.bf16.msra.mxu0 0
    %3506 = vmatprep.subr.bf16.mxu0 0
    %3507 = vmatpush1.bf16.msra.mxu0 0
    %3508 = vmatprep.subr.bf16.mxu0 0
    %3509 = vmatpush1.bf16.msra.mxu0 0
    %3510 = vmatprep.subr.bf16.mxu0 0
    %3511 = vmatpush1.bf16.msra.mxu0 0
    %3512 = vmatprep.subr.bf16.mxu0 0
    %3513 = vmatpush1.bf16.msra.mxu0 0
    %3514 = vmatprep.subr.bf16.mxu0 0
    %3515 = vmatpush1.bf16.msra.mxu0 0
    %3516 = vmatprep.subr.bf16.mxu0 0
    %3517 = vmatpush1.bf16.msra.mxu0 0
    %3518 = vmatprep.subr.bf16.mxu0 0
    %3519 = vmatpush1.bf16.msra.mxu0 0
    %3520 = vmatprep.subr.bf16.mxu0 0
    %3521 = vmatpush1.bf16.msra.mxu0 0
    %3522 = vmatprep.mubr.bf16.mxu0 0
    %3523 = vmatmul.mubr.bf16.gmra.mrb[0].mxu0 %v3485
    %v3524 = vpop.f32.mrb[0].mxu0
    %v3525 = vadd.f32 %v3459, %v3524
    %v3526 = vpop.f32.mrb[0].mxu0
    %v3527 = vpop.f32.mrb[0].mxu0
    %v3528 = vadd.f32 %v3459, %v3527
    %v3529 = vpop.f32.mrb[0].mxu0
    %3530 = vmatprep.mubr.bf16.mxu0 0
    %3531 = vmatmul.mubr.bf16.gmra.mrb[0].mxu0 %v3488
    %v3532 = vpop.f32.mrb[0].mxu0
    %v3533 = vadd.f32 %v3459, %v3532
    %v3534 = vpop.f32.mrb[0].mxu0
    %v3535 = vpop.f32.mrb[0].mxu0
    %v3536 = vadd.f32 %v3459, %v3535
    %v3537 = vpop.f32.mrb[0].mxu0
    %3538 = vdwg.mxu0
    %v3539 = vmax.f32 %v3525, 0.0
    %v3540 = vmax.f32 %v3528, 0.0
    %v3541 = vmax.f32 %v3533, 0.0
    %v3542 = vmax.f32 %v3536, 0.0
    %v3543 = vpack.c.bf16 %v3540, %v3539
    %v3544 = vpack.c.bf16 %v3542, %v3541
    %v3545 = vld [vmem:[%s10 + $0x70] sm:$0xf]
    %v3546 = vld [vmem:[%s10 + $0x74] sm:$0xf]
    %v3547 = vld [vmem:[%s10 + $0x78] sm:$0xf]
    %v3548 = vld [vmem:[%s10 + $0x7c] sm:$0xf]
    %v3549 = vld [vmem:[%s7 + $0x25] sm:$0x1]
    %v3550 = vlaneseq
    %v3551 = vshrl.u32 %v3550, 7
    %v3552 = vsub.s32 0, %v3551
    %v3553 = vrot.slane %v3549, %v3552
    %v3558 = vunpack.c.l.b16 %v3545
    %v3559 = vunpack.c.l.b16 %v3546
    %v3560 = vunpack.c.l.b16 %v3547
    %v3561 = vunpack.c.l.b16 %v3548
    %v3562 = vpack.c.b16 %v3559, %v3558
    %v3563 = vpack.c.b16 %v3561, %v3560
    %v3567 = vsel %vm158, %v3543, 0
    %v3570 = vsel %vm158, %v3544, 0
    %3572 = vmatprep.subr.bf16.mxu0 0
    %3573 = vmatpush1.bf16.msra.mxu0 %v3562
    %3574 = vmatprep.subr.bf16.mxu0 0
    %3575 = vmatpush1.bf16.msra.mxu0 %v3563
    %3576 = vmatprep.subr.bf16.mxu0 0
    %3577 = vmatpush1.bf16.msra.mxu0 0
    %3578 = vmatprep.subr.bf16.mxu0 0
    %3579 = vmatpush1.bf16.msra.mxu0 0
    %3580 = vmatprep.subr.bf16.mxu0 0
    %3581 = vmatpush1.bf16.msra.mxu0 0
    %3582 = vmatprep.subr.bf16.mxu0 0
    %3583 = vmatpush1.bf16.msra.mxu0 0
    %3584 = vmatprep.subr.bf16.mxu0 0
    %3585 = vmatpush1.bf16.msra.mxu0 0
    %3586 = vmatprep.subr.bf16.mxu0 0
    %3587 = vmatpush1.bf16.msra.mxu0 0
    %3588 = vmatprep.subr.bf16.mxu0 0
    %3589 = vmatpush1.bf16.msra.mxu0 0
    %3590 = vmatprep.subr.bf16.mxu0 0
    %3591 = vmatpush1.bf16.msra.mxu0 0
    %3592 = vmatprep.subr.bf16.mxu0 0
    %3593 = vmatpush1.bf16.msra.mxu0 0
    %3594 = vmatprep.subr.bf16.mxu0 0
    %3595 = vmatpush1.bf16.msra.mxu0 0
    %3596 = vmatprep.subr.bf16.mxu0 0
    %3597 = vmatpush1.bf16.msra.mxu0 0
    %3598 = vmatprep.subr.bf16.mxu0 0
    %3599 = vmatpush1.bf16.msra.mxu0 0
    %3600 = vmatprep.subr.bf16.mxu0 0
    %3601 = vmatpush1.bf16.msra.mxu0 0
    %3602 = vmatprep.subr.bf16.mxu0 0
    %3603 = vmatpush1.bf16.msra.mxu0 0
    %3604 = vmatprep.mubr.bf16.mxu0 0
    %3605 = vmatmul.mubr.bf16.gmra.mrb[0].mxu0 %v3567
    %v3606 = vpop.f32.mrb[0].mxu0
    %v3607 = vadd.f32 %v3553, %v3606
    %v3608 = vpop.f32.mrb[0].mxu0
    %v3609 = vpop.f32.mrb[0].mxu0
    %v3610 = vadd.f32 %v3553, %v3609
    %v3611 = vpop.f32.mrb[0].mxu0
    %3612 = vmatprep.mubr.bf16.mxu0 0
    %3613 = vmatmul.mubr.bf16.gmra.mrb[0].mxu0 %v3570
    %v3614 = vpop.f32.mrb[0].mxu0
    %v3615 = vadd.f32 %v3553, %v3614
    %v3616 = vpop.f32.mrb[0].mxu0
    %v3617 = vpop.f32.mrb[0].mxu0
    %v3618 = vadd.f32 %v3553, %v3617
    %v3619 = vpop.f32.mrb[0].mxu0
    %3620 = vdwg.mxu0
    %v3621 = vsel %vm158, %v3607, 0.0
    %3622 = vadd.xlane.f32.xlu0 %v3621
    %v3623 = vpop.xlane.xlu0 %3622
    %v3624 = vsel %vm158, %v3610, 0.0
    %3625 = vadd.xlane.f32.xlu0 %v3624
    %v3626 = vpop.xlane.xlu0 %3625
    %v3627 = vsel %vm158, %v3615, 0.0
    %3628 = vadd.xlane.f32.xlu0 %v3627
    %v3629 = vpop.xlane.xlu0 %3628
    %v3630 = vsel %vm158, %v3618, 0.0
    %3631 = vadd.xlane.f32.xlu0 %v3630
    %v3632 = vpop.xlane.xlu0 %3631
    %v3633 = vmul.f32 %v3623, %v634
    %v3634 = vmul.f32 %v3626, %v634
    %v3635 = vmul.f32 %v3629, %v634
    %v3636 = vmul.f32 %v3632, %v634
    %v3637 = vmul.f32 %v3607, %v3607
    %v3638 = vmul.f32 %v3610, %v3610
    %v3639 = vmul.f32 %v3615, %v3615
    %v3640 = vmul.f32 %v3618, %v3618
    %v3641 = vsel %vm158, %v3637, 0.0
    %3642 = vadd.xlane.f32.xlu0 %v3641
    %v3643 = vpop.xlane.xlu0 %3642
    %v3644 = vsel %vm158, %v3638, 0.0
    %3645 = vadd.xlane.f32.xlu0 %v3644
    %v3646 = vpop.xlane.xlu0 %3645
    %v3647 = vsel %vm158, %v3639, 0.0
    %3648 = vadd.xlane.f32.xlu0 %v3647
    %v3649 = vpop.xlane.xlu0 %3648
    %v3650 = vsel %vm158, %v3640, 0.0
    %3651 = vadd.xlane.f32.xlu0 %v3650
    %v3652 = vpop.xlane.xlu0 %3651
    %v3653 = vmul.f32 %v3643, %v634
    %v3654 = vmul.f32 %v3646, %v634
    %v3655 = vmul.f32 %v3649, %v634
    %v3656 = vmul.f32 %v3652, %v634
    %v3657 = vmul.f32 %v3633, %v3633
    %v3658 = vmul.f32 %v3634, %v3634
    %v3659 = vmul.f32 %v3635, %v3635
    %v3660 = vmul.f32 %v3636, %v3636
    %v3661 = vsub.f32 %v3653, %v3657
    %v3662 = vsub.f32 %v3654, %v3658
    %v3663 = vsub.f32 %v3655, %v3659
    %v3664 = vsub.f32 %v3656, %v3660
    %v3665 = vmax.f32 %v3661, 0.0
    %v3666 = vmax.f32 %v3662, 0.0
    %v3667 = vmax.f32 %v3663, 0.0
    %v3668 = vmax.f32 %v3664, 0.0
    %v3669 = vsub.f32 %v3607, %v3633
    %v3670 = vsub.f32 %v3610, %v3634
    %v3671 = vsub.f32 %v3615, %v3635
    %v3672 = vsub.f32 %v3618, %v3636
    %v3673 = vadd.f32 %v3665, 1e-05
    %v3674 = vadd.f32 %v3666, 1e-05
    %v3675 = vadd.f32 %v3667, 1e-05
    %v3676 = vadd.f32 %v3668, 1e-05
    %v3677 = vrsqrt.pop %v3673
    %v3678 = vrsqrt.pop %v3674
    %v3679 = vrsqrt.pop %v3675
    %v3680 = vrsqrt.pop %v3676
    %v3681 = vmul.f32 %v3669, %v3677
    %v3682 = vmul.f32 %v3670, %v3678
    %v3683 = vmul.f32 %v3671, %v3679
    %v3684 = vmul.f32 %v3672, %v3680
    %v3685 = vld [vmem:[%s7 + $0x26] sm:$0x1]
    %v3686 = vlaneseq
    %v3687 = vshrl.u32 %v3686, 7
    %v3688 = vsub.s32 0, %v3687
    %v3689 = vrot.slane %v3685, %v3688
    %v3690 = vmul.f32 %v3681, %v3689
    %v3691 = vmul.f32 %v3682, %v3689
    %v3692 = vmul.f32 %v3683, %v3689
    %v3693 = vmul.f32 %v3684, %v3689
    %v3694 = vld [vmem:[%s7 + $0x27] sm:$0x1]
    %v3695 = vlaneseq
    %v3696 = vshrl.u32 %v3695, 7
    %v3697 = vsub.s32 0, %v3696
    %v3698 = vrot.slane %v3694, %v3697
    %v3699 = vadd.f32 %v3690, %v3698
    %v3700 = vadd.f32 %v3691, %v3698
    %v3701 = vadd.f32 %v3692, %v3698
    %v3702 = vadd.f32 %v3693, %v3698
    %v3703 = vpack.c.bf16 %v3700, %v3699
    %v3704 = vpack.c.bf16 %v3702, %v3701
    %3705 = vmatprep.subr.bf16.mxu0 0
    %3706 = vmatpush1.bf16.msra.mxu0 %v3703
    %3707 = vmatprep.subr.bf16.mxu0 0
    %3708 = vmatpush1.bf16.msra.mxu0 %v3704
    %3709 = vmatprep.subr.bf16.mxu0 0
    %3710 = vmatpush1.bf16.msra.mxu0 0
    %3711 = vmatprep.subr.bf16.mxu0 0
    %3712 = vmatpush1.bf16.msra.mxu0 0
    %3713 = vmatprep.subr.bf16.mxu0 0
    %3714 = vmatpush1.bf16.msra.mxu0 0
    %3715 = vmatprep.subr.bf16.mxu0 0
    %3716 = vmatpush1.bf16.msra.mxu0 0
    %3717 = vmatprep.subr.bf16.mxu0 0
    %3718 = vmatpush1.bf16.msra.mxu0 0
    %3719 = vmatprep.subr.bf16.mxu0 0
    %3720 = vmatpush1.bf16.msra.mxu0 0
    %3721 = vmatprep.subr.bf16.mxu0 0
    %3722 = vmatpush1.bf16.msra.mxu0 0
    %3723 = vmatprep.subr.bf16.mxu0 0
    %3724 = vmatpush1.bf16.msra.mxu0 0
    %3725 = vmatprep.subr.bf16.mxu0 0
    %3726 = vmatpush1.bf16.msra.mxu0 0
    %3727 = vmatprep.subr.bf16.mxu0 0
    %3728 = vmatpush1.bf16.msra.mxu0 0
    %3729 = vmatprep.subr.bf16.mxu0 0
    %3730 = vmatpush1.bf16.msra.mxu0 0
    %3731 = vmatprep.subr.bf16.mxu0 0
    %3732 = vmatpush1.bf16.msra.mxu0 0
    %3733 = vmatprep.subr.bf16.mxu0 0
    %3734 = vmatpush1.bf16.msra.mxu0 0
    %3735 = vmatprep.subr.bf16.mxu0 0
    %3736 = vmatpush1.bf16.msra.mxu0 0
    %3737 = vmatprep.mubr.bf16.mxu0 0
    %3738 = vmatmul.mubr.bf16.gmra.mrb[0].mxu0 %v978
    %v3739 = vpop.f32.mrb[0].mxu0
    %v3740 = vadd.f32 0.0, %v3739
    %v3741 = vpop.f32.mrb[0].mxu0
    %v3742 = vpop.f32.mrb[0].mxu0
    %v3743 = vadd.f32 0.0, %v3742
    %v3744 = vpop.f32.mrb[0].mxu0
    %3745 = vdwg.mxu0
    %v3746 = vmul.f32 %v3740, %v168
    %v3747 = vmul.f32 %v3743, %v170
    %3750 = vrot.lane.b32.xlu0 %v3746, 32
    %v3751 = vpop.permute.xlu0 %3750
    %3752 = vrot.lane.b32.xlu0 %v3747, 32
    %v3753 = vpop.permute.xlu0 %3752
    %3758 = vrot.lane.b32.xlu0 %v3079, 64
    %v3759 = vpop.permute.xlu0 %3758
    %3760 = vrot.lane.b32.xlu0 %v3082, 64
    %v3761 = vpop.permute.xlu0 %3760
    %v3764 = vsel %vm158, %v2607, %v3751
    %v3765 = vsel %vm158, %v2608, %v3753
    %v3766 = vsel %vm1760, %v3764, %v3759
    %v3767 = vsel %vm1760, %v3765, %v3761
    %v3768 = vpack.c.bf16 %v3767, %v3766
    %v3769 = vld [vmem:[%s10 + $0x80] sm:$0xf]
    %v3770 = vld [vmem:[%s10 + $0x84] sm:$0xf]
    %v3771 = vld [vmem:[%s10 + $0x88] sm:$0xf]
    %v3772 = vld [vmem:[%s10 + $0x8c] sm:$0xf]
    %v3773 = vld [vmem:[%s10 + $0x90] sm:$0xf]
    %v3774 = vld [vmem:[%s10 + $0x94] sm:$0xf]
    %v3775 = vld [vmem:[%s10 + $0x98] sm:$0xf]
    %v3776 = vld [vmem:[%s10 + $0x9c] sm:$0xf]
    %v3777 = vld [vmem:[%s10 + $0xa0] sm:$0xf]
    %v3778 = vld [vmem:[%s10 + $0xa4] sm:$0xf]
    %v3779 = vld [vmem:[%s10 + $0xa8] sm:$0xf]
    %v3780 = vld [vmem:[%s10 + $0xac] sm:$0xf]
    %v3781 = vld [vmem:[%s7 + $0x28] sm:$0x1]
    %v3782 = vlaneseq
    %v3783 = vshrl.u32 %v3782, 7
    %v3784 = vsub.s32 0, %v3783
    %v3785 = vrot.slane %v3781, %v3784
    %v3798 = vunpack.c.l.b16 %v3769
    %v3799 = vunpack.c.l.b16 %v3770
    %v3800 = vunpack.c.l.b16 %v3771
    %v3801 = vunpack.c.l.b16 %v3772
    %v3802 = vunpack.c.l.b16 %v3773
    %v3803 = vunpack.c.l.b16 %v3774
    %v3804 = vunpack.c.l.b16 %v3775
    %v3805 = vunpack.c.l.b16 %v3776
    %v3806 = vunpack.c.l.b16 %v3777
    %v3807 = vunpack.c.l.b16 %v3778
    %v3808 = vunpack.c.l.b16 %v3779
    %v3809 = vunpack.c.l.b16 %v3780
    %v3810 = vpack.c.b16 %v3799, %v3798
    %v3811 = vpack.c.b16 %v3801, %v3800
    %v3812 = vpack.c.b16 %v3803, %v3802
    %v3813 = vpack.c.b16 %v3805, %v3804
    %v3814 = vpack.c.b16 %v3807, %v3806
    %v3815 = vpack.c.b16 %v3809, %v3808
    %v3823 = vsel %vm1765, %v3768, 0
    %3825 = vmatprep.subr.bf16.mxu0 0
    %3826 = vmatpush1.bf16.msra.mxu0 %v3810
    %3827 = vmatprep.subr.bf16.mxu0 0
    %3828 = vmatpush1.bf16.msra.mxu0 %v3811
    %3829 = vmatprep.subr.bf16.mxu0 0
    %3830 = vmatpush1.bf16.msra.mxu0 %v3812
    %3831 = vmatprep.subr.bf16.mxu0 0
    %3832 = vmatpush1.bf16.msra.mxu0 %v3813
    %3833 = vmatprep.subr.bf16.mxu0 0
    %3834 = vmatpush1.bf16.msra.mxu0 %v3814
    %3835 = vmatprep.subr.bf16.mxu0 0
    %3836 = vmatpush1.bf16.msra.mxu0 %v3815
    %3837 = vmatprep.subr.bf16.mxu0 0
    %3838 = vmatpush1.bf16.msra.mxu0 0
    %3839 = vmatprep.subr.bf16.mxu0 0
    %3840 = vmatpush1.bf16.msra.mxu0 0
    %3841 = vmatprep.subr.bf16.mxu0 0
    %3842 = vmatpush1.bf16.msra.mxu0 0
    %3843 = vmatprep.subr.bf16.mxu0 0
    %3844 = vmatpush1.bf16.msra.mxu0 0
    %3845 = vmatprep.subr.bf16.mxu0 0
    %3846 = vmatpush1.bf16.msra.mxu0 0
    %3847 = vmatprep.subr.bf16.mxu0 0
    %3848 = vmatpush1.bf16.msra.mxu0 0
    %3849 = vmatprep.subr.bf16.mxu0 0
    %3850 = vmatpush1.bf16.msra.mxu0 0
    %3851 = vmatprep.subr.bf16.mxu0 0
    %3852 = vmatpush1.bf16.msra.mxu0 0
    %3853 = vmatprep.subr.bf16.mxu0 0
    %3854 = vmatpush1.bf16.msra.mxu0 0
    %3855 = vmatprep.subr.bf16.mxu0 0
    %3856 = vmatpush1.bf16.msra.mxu0 0
    %3857 = vmatprep.mubr.bf16.mxu0 0
    %3858 = vmatmul.mubr.bf16.gmra.mrb[0].mxu0 %v3823
    %v3859 = vpop.f32.mrb[0].mxu0
    %v3860 = vadd.f32 %v3785, %v3859
    %v3861 = vpop.f32.mrb[0].mxu0
    %v3862 = vpop.f32.mrb[0].mxu0
    %v3863 = vadd.f32 %v3785, %v3862
    %v3864 = vpop.f32.mrb[0].mxu0
    %3865 = vdwg.mxu0
    %v3866 = vmax.f32 %v3860, 0.0
    %v3867 = vmax.f32 %v3863, 0.0
    %v3868 = vpack.c.bf16 %v3867, %v3866
    %v3869 = vld [vmem:[%s10 + $0xb0] sm:$0xf]
    %v3870 = vld [vmem:[%s10 + $0xb4] sm:$0xf]
    %v3871 = vld [vmem:[%s10 + $0xb8] sm:$0xf]
    %v3872 = vld [vmem:[%s10 + $0xbc] sm:$0xf]
    %v3873 = vld [vmem:[%s7 + $0x29] sm:$0x1]
    %v3874 = vlaneseq
    %v3875 = vshrl.u32 %v3874, 7
    %v3876 = vsub.s32 0, %v3875
    %v3877 = vrot.slane %v3873, %v3876
    %v3882 = vunpack.c.l.b16 %v3869
    %v3883 = vunpack.c.l.b16 %v3870
    %v3884 = vunpack.c.l.b16 %v3871
    %v3885 = vunpack.c.l.b16 %v3872
    %v3886 = vpack.c.b16 %v3883, %v3882
    %v3887 = vpack.c.b16 %v3885, %v3884
    %v3891 = vsel %vm158, %v3868, 0
    %3893 = vmatprep.subr.bf16.mxu0 0
    %3894 = vmatpush1.bf16.msra.mxu0 %v3886
    %3895 = vmatprep.subr.bf16.mxu0 0
    %3896 = vmatpush1.bf16.msra.mxu0 %v3887
    %3897 = vmatprep.subr.bf16.mxu0 0
    %3898 = vmatpush1.bf16.msra.mxu0 0
    %3899 = vmatprep.subr.bf16.mxu0 0
    %3900 = vmatpush1.bf16.msra.mxu0 0
    %3901 = vmatprep.subr.bf16.mxu0 0
    %3902 = vmatpush1.bf16.msra.mxu0 0
    %3903 = vmatprep.subr.bf16.mxu0 0
    %3904 = vmatpush1.bf16.msra.mxu0 0
    %3905 = vmatprep.subr.bf16.mxu0 0
    %3906 = vmatpush1.bf16.msra.mxu0 0
    %3907 = vmatprep.subr.bf16.mxu0 0
    %3908 = vmatpush1.bf16.msra.mxu0 0
    %3909 = vmatprep.subr.bf16.mxu0 0
    %3910 = vmatpush1.bf16.msra.mxu0 0
    %3911 = vmatprep.subr.bf16.mxu0 0
    %3912 = vmatpush1.bf16.msra.mxu0 0
    %3913 = vmatprep.subr.bf16.mxu0 0
    %3914 = vmatpush1.bf16.msra.mxu0 0
    %3915 = vmatprep.subr.bf16.mxu0 0
    %3916 = vmatpush1.bf16.msra.mxu0 0
    %3917 = vmatprep.subr.bf16.mxu0 0
    %3918 = vmatpush1.bf16.msra.mxu0 0
    %3919 = vmatprep.subr.bf16.mxu0 0
    %3920 = vmatpush1.bf16.msra.mxu0 0
    %3921 = vmatprep.subr.bf16.mxu0 0
    %3922 = vmatpush1.bf16.msra.mxu0 0
    %3923 = vmatprep.subr.bf16.mxu0 0
    %3924 = vmatpush1.bf16.msra.mxu0 0
    %3925 = vmatprep.mubr.bf16.mxu0 0
    %3926 = vmatmul.mubr.bf16.gmra.mrb[0].mxu0 %v3891
    %v3927 = vpop.f32.mrb[0].mxu0
    %v3928 = vadd.f32 %v3877, %v3927
    %v3929 = vpop.f32.mrb[0].mxu0
    %v3930 = vpop.f32.mrb[0].mxu0
    %v3931 = vadd.f32 %v3877, %v3930
    %v3932 = vpop.f32.mrb[0].mxu0
    %3933 = vdwg.mxu0
    %v3934 = vsel %vm158, %v3928, 0.0
    %3935 = vadd.xlane.f32.xlu0 %v3934
    %v3936 = vpop.xlane.xlu0 %3935
    %v3937 = vsel %vm158, %v3931, 0.0
    %3938 = vadd.xlane.f32.xlu0 %v3937
    %v3939 = vpop.xlane.xlu0 %3938
    %v3940 = vmul.f32 %v3936, %v634
    %v3941 = vmul.f32 %v3939, %v634
    %v3942 = vmul.f32 %v3928, %v3928
    %v3943 = vmul.f32 %v3931, %v3931
    %v3944 = vsel %vm158, %v3942, 0.0
    %3945 = vadd.xlane.f32.xlu0 %v3944
    %v3946 = vpop.xlane.xlu0 %3945
    %v3947 = vsel %vm158, %v3943, 0.0
    %3948 = vadd.xlane.f32.xlu0 %v3947
    %v3949 = vpop.xlane.xlu0 %3948
    %v3950 = vmul.f32 %v3946, %v634
    %v3951 = vmul.f32 %v3949, %v634
    %v3952 = vmul.f32 %v3940, %v3940
    %v3953 = vmul.f32 %v3941, %v3941
    %v3954 = vsub.f32 %v3950, %v3952
    %v3955 = vsub.f32 %v3951, %v3953
    %v3956 = vmax.f32 %v3954, 0.0
    %v3957 = vmax.f32 %v3955, 0.0
    %v3958 = vsub.f32 %v3928, %v3940
    %v3959 = vsub.f32 %v3931, %v3941
    %v3960 = vadd.f32 %v3956, 1e-05
    %v3961 = vadd.f32 %v3957, 1e-05
    %v3962 = vrsqrt.pop %v3960
    %v3963 = vrsqrt.pop %v3961
    %v3964 = vmul.f32 %v3958, %v3962
    %v3965 = vmul.f32 %v3959, %v3963
    %v3966 = vld [vmem:[%s7 + $0x2a] sm:$0x1]
    %v3967 = vlaneseq
    %v3968 = vshrl.u32 %v3967, 7
    %v3969 = vsub.s32 0, %v3968
    %v3970 = vrot.slane %v3966, %v3969
    %v3971 = vmul.f32 %v3964, %v3970
    %v3972 = vmul.f32 %v3965, %v3970
    %v3973 = vld [vmem:[%s7 + $0x2b] sm:$0x1]
    %v3974 = vlaneseq
    %v3975 = vshrl.u32 %v3974, 7
    %v3976 = vsub.s32 0, %v3975
    %v3977 = vrot.slane %v3973, %v3976
    %v3978 = vadd.f32 %v3971, %v3977
    %v3979 = vadd.f32 %v3972, %v3977
    %v3980 = vpack.c.bf16 %v3979, %v3978
    %3981 = vmatprep.subr.bf16.mxu0 0
    %3982 = vmatpush1.bf16.msra.mxu0 %v3980
    %3983 = vmatprep.subr.bf16.mxu0 0
    %3984 = vmatpush1.bf16.msra.mxu0 0
    %3985 = vmatprep.subr.bf16.mxu0 0
    %3986 = vmatpush1.bf16.msra.mxu0 0
    %3987 = vmatprep.subr.bf16.mxu0 0
    %3988 = vmatpush1.bf16.msra.mxu0 0
    %3989 = vmatprep.subr.bf16.mxu0 0
    %3990 = vmatpush1.bf16.msra.mxu0 0
    %3991 = vmatprep.subr.bf16.mxu0 0
    %3992 = vmatpush1.bf16.msra.mxu0 0
    %3993 = vmatprep.subr.bf16.mxu0 0
    %3994 = vmatpush1.bf16.msra.mxu0 0
    %3995 = vmatprep.subr.bf16.mxu0 0
    %3996 = vmatpush1.bf16.msra.mxu0 0
    %3997 = vmatprep.subr.bf16.mxu0 0
    %3998 = vmatpush1.bf16.msra.mxu0 0
    %3999 = vmatprep.subr.bf16.mxu0 0
    %4000 = vmatpush1.bf16.msra.mxu0 0
    %4001 = vmatprep.subr.bf16.mxu0 0
    %4002 = vmatpush1.bf16.msra.mxu0 0
    %4003 = vmatprep.subr.bf16.mxu0 0
    %4004 = vmatpush1.bf16.msra.mxu0 0
    %4005 = vmatprep.subr.bf16.mxu0 0
    %4006 = vmatpush1.bf16.msra.mxu0 0
    %4007 = vmatprep.subr.bf16.mxu0 0
    %4008 = vmatpush1.bf16.msra.mxu0 0
    %4009 = vmatprep.subr.bf16.mxu0 0
    %4010 = vmatpush1.bf16.msra.mxu0 0
    %4011 = vmatprep.subr.bf16.mxu0 0
    %4012 = vmatpush1.bf16.msra.mxu0 0
    %4013 = vmatprep.mubr.bf16.mxu0 0
    %4014 = vmatmul.mubr.bf16.gmra.mrb[0].mxu0 %v1237
    %v4015 = vpop.f32.mrb[0].mxu0
    %v4016 = vadd.f32 0.0, %v4015
    %v4017 = vpop.f32.mrb[0].mxu0
    %v4018 = vpop.f32.mrb[0].mxu0
    %v4019 = vpop.f32.mrb[0].mxu0
    %4020 = vdwg.mxu0
    %v4021 = vpack.c.bf16 %v3422, %v3421
    %v4022 = vpack.c.bf16 %v3424, %v3423
    %4023 = vmatprep.subr.bf16.mxu0 0
    %4024 = vmatpush1.bf16.msra.mxu0 %v4021
    %4025 = vmatprep.subr.bf16.mxu0 0
    %4026 = vmatpush1.bf16.msra.mxu0 %v4022
    %4027 = vmatprep.subr.bf16.mxu0 0
    %4028 = vmatpush1.bf16.msra.mxu0 0
    %4029 = vmatprep.subr.bf16.mxu0 0
    %4030 = vmatpush1.bf16.msra.mxu0 0
    %4031 = vmatprep.subr.bf16.mxu0 0
    %4032 = vmatpush1.bf16.msra.mxu0 0
    %4033 = vmatprep.subr.bf16.mxu0 0
    %4034 = vmatpush1.bf16.msra.mxu0 0
    %4035 = vmatprep.subr.bf16.mxu0 0
    %4036 = vmatpush1.bf16.msra.mxu0 0
    %4037 = vmatprep.subr.bf16.mxu0 0
    %4038 = vmatpush1.bf16.msra.mxu0 0
    %4039 = vmatprep.subr.bf16.mxu0 0
    %4040 = vmatpush1.bf16.msra.mxu0 0
    %4041 = vmatprep.subr.bf16.mxu0 0
    %4042 = vmatpush1.bf16.msra.mxu0 0
    %4043 = vmatprep.subr.bf16.mxu0 0
    %4044 = vmatpush1.bf16.msra.mxu0 0
    %4045 = vmatprep.subr.bf16.mxu0 0
    %4046 = vmatpush1.bf16.msra.mxu0 0
    %4047 = vmatprep.subr.bf16.mxu0 0
    %4048 = vmatpush1.bf16.msra.mxu0 0
    %4049 = vmatprep.subr.bf16.mxu0 0
    %4050 = vmatpush1.bf16.msra.mxu0 0
    %4051 = vmatprep.subr.bf16.mxu0 0
    %4052 = vmatpush1.bf16.msra.mxu0 0
    %4053 = vmatprep.subr.bf16.mxu0 0
    %4054 = vmatpush1.bf16.msra.mxu0 0
    %4055 = vmatprep.mubr.bf16.mxu0 0
    %4056 = vmatmul.mubr.bf16.gmra.mrb[0].mxu0 %v1282
    %v4057 = vpop.f32.mrb[0].mxu0
    %v4058 = vadd.f32 0.0, %v4057
    %v4059 = vpop.f32.mrb[0].mxu0
    %v4060 = vpop.f32.mrb[0].mxu0
    %v4061 = vpop.f32.mrb[0].mxu0
    %4062 = vdwg.mxu0
    %4064 = vrot.lane.b32.xlu0 %v4016, 32
    %v4065 = vpop.permute.xlu0 %4064
    %4068 = vrot.lane.b32.xlu0 %v4058, 64
    %v4069 = vpop.permute.xlu0 %4068
    %v4071 = vsel %vm158, %v2892, %v4065
    %v4072 = vsel %vm1760, %v4071, %v4069
    %v4073 = vpack.c.bf16 %v4072, %v4072
    %v4074 = vld [vmem:[%s10 + $0xc0] sm:$0xf]
    %v4075 = vld [vmem:[%s10 + $0xc4] sm:$0xf]
    %v4076 = vld [vmem:[%s10 + $0xc8] sm:$0xf]
    %v4077 = vld [vmem:[%s10 + $0xcc] sm:$0xf]
    %v4078 = vld [vmem:[%s10 + $0xd0] sm:$0xf]
    %v4079 = vld [vmem:[%s10 + $0xd4] sm:$0xf]
    %v4080 = vld [vmem:[%s10 + $0xd8] sm:$0xf]
    %v4081 = vld [vmem:[%s10 + $0xdc] sm:$0xf]
    %v4082 = vld [vmem:[%s10 + $0xe0] sm:$0xf]
    %v4083 = vld [vmem:[%s10 + $0xe4] sm:$0xf]
    %v4084 = vld [vmem:[%s10 + $0xe8] sm:$0xf]
    %v4085 = vld [vmem:[%s10 + $0xec] sm:$0xf]
    %v4086 = vld [vmem:[%s7 + $0x2c] sm:$0x1]
    %v4087 = vlaneseq
    %v4088 = vshrl.u32 %v4087, 7
    %v4089 = vsub.s32 0, %v4088
    %v4090 = vrot.slane %v4086, %v4089
    %v4103 = vunpack.c.l.b16 %v4074
    %v4104 = vunpack.c.l.b16 %v4075
    %v4105 = vunpack.c.l.b16 %v4076
    %v4106 = vunpack.c.l.b16 %v4077
    %v4107 = vunpack.c.l.b16 %v4078
    %v4108 = vunpack.c.l.b16 %v4079
    %v4109 = vunpack.c.l.b16 %v4080
    %v4110 = vunpack.c.l.b16 %v4081
    %v4111 = vunpack.c.l.b16 %v4082
    %v4112 = vunpack.c.l.b16 %v4083
    %v4113 = vunpack.c.l.b16 %v4084
    %v4114 = vunpack.c.l.b16 %v4085
    %v4115 = vpack.c.b16 %v4104, %v4103
    %v4116 = vpack.c.b16 %v4106, %v4105
    %v4117 = vpack.c.b16 %v4108, %v4107
    %v4118 = vpack.c.b16 %v4110, %v4109
    %v4119 = vpack.c.b16 %v4112, %v4111
    %v4120 = vpack.c.b16 %v4114, %v4113
    %v4128 = vsel %vm1765, %v4073, 0
    %4130 = vmatprep.subr.bf16.mxu0 0
    %4131 = vmatpush1.bf16.msra.mxu0 %v4115
    %4132 = vmatprep.subr.bf16.mxu0 0
    %4133 = vmatpush1.bf16.msra.mxu0 %v4116
    %4134 = vmatprep.subr.bf16.mxu0 0
    %4135 = vmatpush1.bf16.msra.mxu0 %v4117
    %4136 = vmatprep.subr.bf16.mxu0 0
    %4137 = vmatpush1.bf16.msra.mxu0 %v4118
    %4138 = vmatprep.subr.bf16.mxu0 0
    %4139 = vmatpush1.bf16.msra.mxu0 %v4119
    %4140 = vmatprep.subr.bf16.mxu0 0
    %4141 = vmatpush1.bf16.msra.mxu0 %v4120
    %4142 = vmatprep.subr.bf16.mxu0 0
    %4143 = vmatpush1.bf16.msra.mxu0 0
    %4144 = vmatprep.subr.bf16.mxu0 0
    %4145 = vmatpush1.bf16.msra.mxu0 0
    %4146 = vmatprep.subr.bf16.mxu0 0
    %4147 = vmatpush1.bf16.msra.mxu0 0
    %4148 = vmatprep.subr.bf16.mxu0 0
    %4149 = vmatpush1.bf16.msra.mxu0 0
    %4150 = vmatprep.subr.bf16.mxu0 0
    %4151 = vmatpush1.bf16.msra.mxu0 0
    %4152 = vmatprep.subr.bf16.mxu0 0
    %4153 = vmatpush1.bf16.msra.mxu0 0
    %4154 = vmatprep.subr.bf16.mxu0 0
    %4155 = vmatpush1.bf16.msra.mxu0 0
    %4156 = vmatprep.subr.bf16.mxu0 0
    %4157 = vmatpush1.bf16.msra.mxu0 0
    %4158 = vmatprep.subr.bf16.mxu0 0
    %4159 = vmatpush1.bf16.msra.mxu0 0
    %4160 = vmatprep.subr.bf16.mxu0 0
    %4161 = vmatpush1.bf16.msra.mxu0 0
    %4162 = vmatprep.mubr.bf16.mxu0 0
    %4163 = vmatmul.mubr.bf16.gmra.mrb[0].mxu0 %v4128
    %v4164 = vpop.f32.mrb[0].mxu0
    %v4165 = vadd.f32 %v4090, %v4164
    %v4166 = vpop.f32.mrb[0].mxu0
    %v4167 = vpop.f32.mrb[0].mxu0
    %v4168 = vpop.f32.mrb[0].mxu0
    %4169 = vdwg.mxu0
    %v4170 = vmax.f32 %v4165, 0.0
    %v4171 = vpack.c.bf16 %v4170, %v4170
    %v4172 = vld [vmem:[%s10 + $0xf0] sm:$0xf]
    %v4173 = vld [vmem:[%s10 + $0xf4] sm:$0xf]
    %v4174 = vld [vmem:[%s10 + $0xf8] sm:$0xf]
    %v4175 = vld [vmem:[%s10 + $0xfc] sm:$0xf]
    %v4176 = vld [vmem:[%s7 + $0x2d] sm:$0x1]
    %v4177 = vlaneseq
    %v4178 = vshrl.u32 %v4177, 7
    %v4179 = vsub.s32 0, %v4178
    %v4180 = vrot.slane %v4176, %v4179
    %v4185 = vunpack.c.l.b16 %v4172
    %v4186 = vunpack.c.l.b16 %v4173
    %v4187 = vunpack.c.l.b16 %v4174
    %v4188 = vunpack.c.l.b16 %v4175
    %v4189 = vpack.c.b16 %v4186, %v4185
    %v4190 = vpack.c.b16 %v4188, %v4187
    %v4194 = vsel %vm158, %v4171, 0
    %4196 = vmatprep.subr.bf16.mxu0 0
    %4197 = vmatpush1.bf16.msra.mxu0 %v4189
    %4198 = vmatprep.subr.bf16.mxu0 0
    %4199 = vmatpush1.bf16.msra.mxu0 %v4190
    %4200 = vmatprep.subr.bf16.mxu0 0
    %4201 = vmatpush1.bf16.msra.mxu0 0
    %4202 = vmatprep.subr.bf16.mxu0 0
    %4203 = vmatpush1.bf16.msra.mxu0 0
    %4204 = vmatprep.subr.bf16.mxu0 0
    %4205 = vmatpush1.bf16.msra.mxu0 0
    %4206 = vmatprep.subr.bf16.mxu0 0
    %4207 = vmatpush1.bf16.msra.mxu0 0
    %4208 = vmatprep.subr.bf16.mxu0 0
    %4209 = vmatpush1.bf16.msra.mxu0 0
    %4210 = vmatprep.subr.bf16.mxu0 0
    %4211 = vmatpush1.bf16.msra.mxu0 0
    %4212 = vmatprep.subr.bf16.mxu0 0
    %4213 = vmatpush1.bf16.msra.mxu0 0
    %4214 = vmatprep.subr.bf16.mxu0 0
    %4215 = vmatpush1.bf16.msra.mxu0 0
    %4216 = vmatprep.subr.bf16.mxu0 0
    %4217 = vmatpush1.bf16.msra.mxu0 0
    %4218 = vmatprep.subr.bf16.mxu0 0
    %4219 = vmatpush1.bf16.msra.mxu0 0
    %4220 = vmatprep.subr.bf16.mxu0 0
    %4221 = vmatpush1.bf16.msra.mxu0 0
    %4222 = vmatprep.subr.bf16.mxu0 0
    %4223 = vmatpush1.bf16.msra.mxu0 0
    %4224 = vmatprep.subr.bf16.mxu0 0
    %4225 = vmatpush1.bf16.msra.mxu0 0
    %4226 = vmatprep.subr.bf16.mxu0 0
    %4227 = vmatpush1.bf16.msra.mxu0 0
    %4228 = vmatprep.mubr.bf16.mxu0 0
    %4229 = vmatmul.mubr.bf16.gmra.mrb[0].mxu0 %v4194
    %v4230 = vpop.f32.mrb[0].mxu0
    %v4231 = vadd.f32 %v4180, %v4230
    %v4232 = vpop.f32.mrb[0].mxu0
    %v4233 = vpop.f32.mrb[0].mxu0
    %v4234 = vpop.f32.mrb[0].mxu0
    %4235 = vdwg.mxu0
    %v4236 = vsel %vm1491, %v4231, 0.0
    %4237 = vadd.xlane.f32.xlu0 %v4236
    %v4238 = vpop.xlane.xlu0 %4237
    %v4239 = vmul.f32 %v4238, %v634
    %v4240 = vmul.f32 %v4231, %v4231
    %v4241 = vsel %vm1491, %v4240, 0.0
    %4242 = vadd.xlane.f32.xlu0 %v4241
    %v4243 = vpop.xlane.xlu0 %4242
    %v4244 = vmul.f32 %v4243, %v634
    %v4245 = vmul.f32 %v4239, %v4239
    %v4246 = vsub.f32 %v4244, %v4245
    %v4247 = vmax.f32 %v4246, 0.0
    %v4248 = vsub.f32 %v4231, %v4239
    %v4249 = vadd.f32 %v4247, 1e-05
    %v4250 = vrsqrt.pop %v4249
    %v4251 = vmul.f32 %v4248, %v4250
    %v4252 = vld [vmem:[%s7 + $0x2e] sm:$0x1]
    %v4253 = vlaneseq
    %v4254 = vshrl.u32 %v4253, 7
    %v4255 = vsub.s32 0, %v4254
    %v4256 = vrot.slane %v4252, %v4255
    %v4257 = vmul.f32 %v4251, %v4256
    %v4258 = vld [vmem:[%s7 + $0x2f] sm:$0x1]
    %v4259 = vlaneseq
    %v4260 = vshrl.u32 %v4259, 7
    %v4261 = vsub.s32 0, %v4260
    %v4262 = vrot.slane %v4258, %v4261
    %v4263 = vadd.f32 %v4257, %v4262
    %4264 = vst.msk [vmem:[#allocation2] sm:$0xff] %vm158, %v3978
    %4265 = vst.msk [vmem:[#allocation2 + $0x8] sm:$0xff] %vm158, %v3979
    %4266 = vst.msk [vmem:[#allocation4] sm:$0xff] %vm158, %v3421
    %4267 = vst.msk [vmem:[#allocation4 + $0x8] sm:$0xff] %vm158, %v3422
    %4268 = vst.msk [vmem:[#allocation4 + $0x10] sm:$0xff] %vm158, %v3423
    %4269 = vst.msk [vmem:[#allocation4 + $0x18] sm:$0xff] %vm158, %v3424
    %4270 = vst.msk [vmem:[#allocation6] sm:$0x3] %vm1491, %v4263
    // Predicated region
    $region46: #{graph_network_ltp_forward.1} parent=1 // pred_check
      _
    $region47: #{graph_network_ltp_forward.1} parent=1 // pred_check_branch
      %4272 = sbr.rel (0) target = $region49
    $region48: #{graph_network_ltp_forward.1} parent=1 // pred_region
      %s4274 = ssub.s32 256, 256
      %4275 = vsyncadd [#allocation3], %s4274
      %s4276 = sshll.u32 [#allocation2], 4
      %s4277 = int_to_ptr.vmem [resolvable:$true] %s4276
      %4282 = dma.vmem_to_hbm [thread:$0]  %s4277, 256, %s11, [#allocation3], 128, 128, 8
    $region49: #{graph_network_ltp_forward.1} parent=1 // pred_fallthru
      _
    // Predicated region
    $region50: #{graph_network_ltp_forward.1} parent=1 // pred_check
      _
    $region51: #{graph_network_ltp_forward.1} parent=1 // pred_check_branch
      %4284 = sbr.rel (0) target = $region53
    $region52: #{graph_network_ltp_forward.1} parent=1 // pred_region
      %s4286 = ssub.s32 512, 512
      %4287 = vsyncadd [#allocation5], %s4286
      %s4288 = sshll.u32 [#allocation4], 4
      %s4289 = int_to_ptr.vmem [resolvable:$true] %s4288
      %4294 = dma.vmem_to_hbm [thread:$0]  %s4289, 512, %s12, [#allocation5], 128, 128, 8
    $region53: #{graph_network_ltp_forward.1} parent=1 // pred_fallthru
      _
    // Predicated region
    $region54: #{graph_network_ltp_forward.1} parent=1 // pred_check
      _
    $region55: #{graph_network_ltp_forward.1} parent=1 // pred_check_branch
      %4296 = sbr.rel (0) target = $region57
    $region56: #{graph_network_ltp_forward.1} parent=1 // pred_region
      %s4298 = ssub.s32 32, 32
      %4299 = vsyncadd [#allocation5], %s4298
      %s4301 = sshll.u32 [#allocation6], 4
      %s4302 = int_to_ptr.vmem [resolvable:$true] %s4301
      %4304 = dma.vmem_to_hbm [thread:$0]  %s4302, 32, %s13, [#allocation5]
    $region57: #{graph_network_ltp_forward.1} parent=1 // pred_fallthru
      _
    // Predicated region
    $region58: #{graph_network_ltp_forward.1} parent=1 // pred_check
      _
    $region59: #{graph_network_ltp_forward.1} parent=1 // pred_check_branch
      %4306 = sbr.rel (0) target = $region61
    $region60: #{graph_network_ltp_forward.1} parent=1 // pred_region
      %4307 = dma.done [#allocation3], 256
    $region61: #{graph_network_ltp_forward.1} parent=1 // pred_fallthru
      _
    // Predicated region
    $region62: #{graph_network_ltp_forward.1} parent=1 // pred_check
      _
    $region63: #{graph_network_ltp_forward.1} parent=1 // pred_check_branch
      %4309 = sbr.rel (0) target = $region65
    $region64: #{graph_network_ltp_forward.1} parent=1 // pred_region
      %4310 = dma.done [#allocation5], 512
    $region65: #{graph_network_ltp_forward.1} parent=1 // pred_fallthru
      _
    // Predicated region
    $region66: #{graph_network_ltp_forward.1} parent=1 // pred_check
      _
    $region67: #{graph_network_ltp_forward.1} parent=1 // pred_check_branch
      %4312 = sbr.rel (0) target = $region69
    $region68: #{graph_network_ltp_forward.1} parent=1 // pred_region
      %4313 = dma.done [#allocation5], 32
    $region69: #{graph_network_ltp_forward.1} parent=1 // pred_fallthru
      _
    %4314 = vsyncpa [#allocation3], 1
    %4315 = vsyncpa [#allocation5], 1

</llo_original>
